<compile_context>
chip_gen: v6e
topology: v6e:2x2x1
jax: 0.10.0
libtpu: 0.0.40
codegen_flags: <defaults>
</compile_context>

<pallas_src>
import functools

import jax
import jax.numpy as jnp
from jax.experimental import pallas as pl
from jax.experimental.pallas import tpu as pltpu


# --------------------------------------------------------------------------- fused per-timestep kernel
def _revision_step_kernel(
    # data / constants (feature-major: features on sublanes, (batch,residue) on lanes)
    xinit_ref,     # (12, B*N)   coords from init_coords()
    trueD_ref,     # (B, N, N)   target squared CA-CA distances
    mask2d_ref,    # (B, N, N)
    trueV_ref,     # (6, B*N)    target dihedral stand-in features
    trueAD_ref,    # (3, B*N)    target AD stand-in features
    trueSoh_ref,   # (VOC, B*N)  one-hot of true_S
    maskrow_ref,   # (1, B*N)
    nidx_ref,      # (1, B*N)    residue index per column (int32)
    rowmask1_ref,  # (B*F, 1)    1.0 where conv1 output row is valid (f < F-1)
    # weights (pre-transposed / pre-packed in the wrapper)
    WfeatT_ref, bfeatc_ref,
    W1a_ref, W1b_ref, c1b_ref, c1g_ref, c1be_ref,
    W2a_ref, W2b_ref, c2b_ref, c2g_ref, c2be_ref,
    WvT_ref, bseqc_ref, bstrc_ref, SembSeqT_ref, SembStrT_ref,
    OsT_ref, osbc_ref, OdT_ref, odbc_ref,
    WdihT_ref, bdihc_ref, WadT_ref, badc_ref,
    # output + carried state
    acc_ref,       # (1, 128)  [dloss, vloss, aloss, sloss] accumulator (lane-dense)
    x_scr,         # (12, B*N) current coords, persists across grid steps
    *, B, N, F, H, VOC, C1, C2, NS, seg_len):
    f32 = jnp.float32
    eps = 1e-5
    t = pl.program_id(0)

    @pl.when(t == 0)
    def _init():
        x_scr[...] = xinit_ref[...]
        acc_ref[...] = jnp.zeros_like(acc_ref)

    maskrow = maskrow_ref[...]                       # (1, BN)
    nidx = nidx_ref[...]                             # (1, BN) int32

    # ---- ProteinFeatures node stand-in: V' = relu(Wf^T X' + b) * mask
    Xcur = x_scr[...]                                # (12, BN)
    Vp = jnp.dot(WfeatT_ref[...], Xcur, preferred_element_type=f32) + bfeatc_ref[...]
    Vp = jnp.maximum(Vp, 0.0) * maskrow              # (F, BN)

    # ---- loop_specific: Conv1d(k=2)+BN+ReLU+Conv1d(k=2,p=1)+BN+Sigmoid for all 3 loops
    #      at once (segment-block-diagonal weights). rows = (batch, spatial-feature),
    #      conv taps are one-row shifts (no misaligned scratch writes, no zero-fill pass).
    Vt = jnp.concatenate([Vp[:, b * N:(b + 1) * N] for b in range(B)], axis=0)   # (B*F, N)
    Vt_s = jnp.concatenate([Vt[1:, :], jnp.zeros((1, N), f32)], axis=0)
    y1 = (jnp.dot(Vt, W1a_ref[...], preferred_element_type=f32)
          + jnp.dot(Vt_s, W1b_ref[...], preferred_element_type=f32)
          + c1b_ref[...])                                                        # (B*F, NS*C1)
    rm1 = rowmask1_ref[...]                                                      # (B*F, 1)
    inv1 = 1.0 / float(B * (F - 1))
    mu1 = jnp.sum(y1 * rm1, axis=0, keepdims=True) * inv1
    var1 = jnp.sum(((y1 - mu1) ** 2) * rm1, axis=0, keepdims=True) * inv1
    z = (y1 - mu1) * jax.lax.rsqrt(var1 + eps) * c1g_ref[...] + c1be_ref[...]
    z = jnp.maximum(z, 0.0) * rm1                    # ReLU; invalid row doubles as conv2 pad
    z_d = jnp.concatenate([jnp.zeros((1, NS * C1), f32), z[:-1, :]], axis=0)
    y2 = (jnp.dot(z_d, W2a_ref[...], preferred_element_type=f32)
          + jnp.dot(z, W2b_ref[...], preferred_element_type=f32)
          + c2b_ref[...])                                                        # (B*F, NS*C2)
    inv2 = 1.0 / float(B * F)
    mu2 = jnp.sum(y2, axis=0, keepdims=True) * inv2
    var2 = jnp.sum((y2 - mu2) ** 2, axis=0, keepdims=True) * inv2
    att = jax.nn.sigmoid((y2 - mu2) * jax.lax.rsqrt(var2 + eps) * c2g_ref[...] + c2be_ref[...])

    # first L_i output channels of each loop block -> refined node features (feature-major)
    cols = []
    for b in range(B):
        blk = att[b * F:(b + 1) * F, :]
        for i in range(NS):
            cols.append(blk[:, i * C2: i * C2 + seg_len[i]])
    Vnew = jnp.concatenate(cols, axis=1)             # (F, BN)

    # ---- autoregressive sequence state as one-hot arithmetic (no gathers)
    cb = (nidx < t).astype(f32)                      # residues decoded before step t
    ca = (nidx <= t).astype(f32)                     # ... and including step t
    e0 = (jax.lax.broadcasted_iota(jnp.int32, (VOC, 1), 0) == 0).astype(f32)     # token 0
    trueSoh = trueSoh_ref[...]                       # (VOC, BN)
    s_before = cb * trueSoh + (1.0 - cb) * e0
    s_after = ca * trueSoh + (1.0 - ca) * e0

    # ---- seq_mpn -> O_s -> masked cross-entropy at position t (in-kernel, no extra launch)
    VW = jnp.dot(WvT_ref[...], Vnew, preferred_element_type=f32)                 # (2H, BN)
    h_seq = jnp.maximum(
        VW[:H, :] + bseqc_ref[...]
        + jnp.dot(SembSeqT_ref[...], s_before, preferred_element_type=f32), 0.0) * maskrow
    logits = jnp.dot(OsT_ref[...], h_seq, preferred_element_type=f32) + osbc_ref[...]
    zmax = jnp.max(logits, axis=0, keepdims=True)
    lse = jnp.log(jnp.sum(jnp.exp(logits - zmax), axis=0, keepdims=True)) + zmax
    nll = lse - jnp.sum(trueSoh * logits, axis=0, keepdims=True)                 # (1, BN)
    col_t = (nidx == t).astype(f32)
    sloss = jnp.sum(nll * col_t * maskrow)

    # ---- struct_mpn -> O_d -> new coords (stay resident in VMEM scratch)
    h_str = jnp.maximum(
        VW[H:, :] + bstrc_ref[...]
        + jnp.dot(SembStrT_ref[...], s_after, preferred_element_type=f32), 0.0) * maskrow
    Xnew = jnp.dot(OdT_ref[...], h_str, preferred_element_type=f32) + odbc_ref[...]   # (12, BN)
    x_scr[...] = Xnew

    # ---- predict_dist stand-ins + masked SmoothL1 / MSE loss accumulation
    proj = jnp.dot(WdihT_ref[...], Xnew, preferred_element_type=f32) + bdihc_ref[...]  # (3, BN)
    # TODO(synk): _dihedrals source not provided; tanh/sigmoid of a linear projection stand-in.
    vd = jnp.concatenate([jnp.tanh(proj), jax.nn.sigmoid(proj)], axis=0)               # (6, BN)
    vloss = jnp.sum((vd - trueV_ref[...]) ** 2 * maskrow)

    xca = Xnew[3:6, :]                                                                  # CA coords
    ad = jnp.tanh(jnp.dot(WadT_ref[...], xca, preferred_element_type=f32) + badc_ref[...])
    aloss = jnp.sum((ad - trueAD_ref[...]) ** 2 * maskrow)

    dloss = jnp.float32(0.0)
    for b in range(B):
        xb = xca[:, b * N:(b + 1) * N]               # (3, N)
        dxb = xb[:, :, None] - xb[:, None, :]        # (3, N, N)
        Db = jnp.sum(dxb * dxb, axis=0)              # squared CA-CA distances
        diff = Db - trueD_ref[b]
        adiff = jnp.abs(diff)
        hub = jnp.where(adiff < 1.0, 0.5 * diff * diff, adiff - 0.5)   # SmoothL1, beta=1
        dloss = dloss + jnp.sum(hub * mask2d_ref[b])

    lane = jax.lax.broadcasted_iota(jnp.int32, (1, 128), 1)
    step = ((lane == 0).astype(f32) * dloss + (lane == 1).astype(f32) * vloss
            + (lane == 2).astype(f32) * aloss + (lane == 3).astype(f32) * sloss)
    acc_ref[...] = acc_ref[...] + step


def _const_spec(a):
    nd = a.ndim
    return pl.BlockSpec(a.shape, lambda t, _nd=nd: (0,) * _nd)


# --------------------------------------------------------------------------- plain-XLA stand-ins (one-time work)
def pos_embedding(N, dim=16):
    # TODO(synk): PosEmbedding source not provided; deterministic sinusoidal stand-in.
    pos = jnp.arange(N, dtype=jnp.float32)[:, None]
    i = jnp.arange(dim // 2, dtype=jnp.float32)[None, :]
    freq = jnp.exp(-jnp.log(10000.0) * (2.0 * i / dim))
    ang = pos * freq
    return jnp.concatenate([jnp.sin(ang), jnp.cos(ang)], axis=-1)


def _dih_feats(p, X12):
    # TODO(synk): ProteinFeatures._dihedrals not provided; deterministic stand-in (same as kernel).
    proj = X12 @ p['W_dih'] + p['b_dih']
    return jnp.concatenate([jnp.tanh(proj), jax.nn.sigmoid(proj)], axis=-1)


def _ad_feats(p, x_ca):
    # TODO(synk): ProteinFeatures._AD_features not provided; deterministic stand-in (same as kernel).
    return jnp.tanh(x_ca @ p['W_ad'] + p['b_ad'])


def _pw_sqdist(x_ca):
    d = x_ca[:, None, :, :] - x_ca[:, :, None, :]
    return jnp.sum(d * d, axis=-1)


def _smooth_l1(d):
    a = jnp.abs(d)
    return jnp.where(a < 1.0, 0.5 * d * d, a - 0.5)


# --------------------------------------------------------------------------- params
def init_params(key, hidden=32, node_in=16, vocab=21):
    keys = iter(jax.random.split(key, 64))

    def w(shape, scale=0.1):
        return scale * jax.random.normal(next(keys), shape, dtype=jnp.float32)

    def mpn_p():
        return {'Wv': w((node_in, hidden)),
                'b': jnp.zeros((hidden,), jnp.float32),
                'Semb': w((vocab, hidden))}

    def att_p():
        return {'w1': w((2, 64, 128), 0.05), 'b1': jnp.zeros((1, 128), jnp.float32),
                'g1': jnp.ones((1, 128), jnp.float32), 'be1': jnp.zeros((1, 128), jnp.float32),
                'w2': w((2, 128, 256), 0.05), 'b2': jnp.zeros((1, 256), jnp.float32),
                'g2': jnp.ones((1, 256), jnp.float32), 'be2': jnp.zeros((1, 256), jnp.float32)}

    return {
        'W_dih': w((12, 3)), 'b_dih': jnp.zeros((3,), jnp.float32),
        'W_ad': w((3, 3)), 'b_ad': jnp.zeros((3,), jnp.float32),
        'W_feat': w((12, node_in)), 'b_feat': jnp.zeros((node_in,), jnp.float32),
        'init_mpn': mpn_p(), 'seq_mpn': mpn_p(), 'struct_mpn': mpn_p(),
        'O_d0_w': w((hidden, 12)), 'O_d0_b': jnp.zeros((12,), jnp.float32),
        'O_d_w': w((hidden, 12)), 'O_d_b': jnp.zeros((12,), jnp.float32),
        'O_s_w': w((hidden, vocab)), 'O_s_b': jnp.zeros((vocab,), jnp.float32),
        'att': [att_p() for _ in range(3)],
    }


# --------------------------------------------------------------------------- forward (context = False branch)
def forward(p, true_X, true_S, mask, loop_length, node_in=16):
    # TODO(synk): context=True branch (GRU / encode_context / W_stc / W_seq) not implemented;
    # attention() is the identity when args.context is False.
    B, N = mask.shape
    F = node_in
    H = p['O_d_w'].shape[0]
    vocab = p['O_s_w'].shape[1]
    NS = len(loop_length)
    C1 = p['att'][0]['w1'].shape[2]
    C2 = p['att'][0]['w2'].shape[2]
    BN, BF = B * N, B * F
    assert sum(loop_length) == N
    f32 = jnp.float32

    X12 = true_X.reshape(B, N, 12)
    true_V = _dih_feats(p, X12)
    true_AD = _ad_feats(p, true_X[:, :, 1, :])
    # TODO(synk): pairwise_distance helper not provided; squared CA-CA distance + outer mask
    # assumed (diagonal included), matching predict_dist's squared D.
    true_D = _pw_sqdist(true_X[:, :, 1, :])
    mask_2D = mask[:, :, None] * mask[:, None, :]

    # ---- init_coords (one-time, plain XLA: below launch cost at these sizes) ----
    V0 = jnp.broadcast_to(pos_embedding(N, F)[None], (B, N, F))
    h0 = jnp.maximum(V0 @ p['init_mpn']['Wv'] + p['init_mpn']['b'] + p['init_mpn']['Semb'][0], 0.0)
    h0 = h0 * mask[:, :, None]
    X0 = h0 @ p['O_d0_w'] + p['O_d0_b']                       # (B, N, 12)
    D0 = _pw_sqdist(X0.reshape(B, N, 4, 3)[:, :, 1, :])
    Vd0 = _dih_feats(p, X0)
    AD0 = _ad_feats(p, X0.reshape(B, N, 4, 3)[:, :, 1, :])

    dloss = jnp.sum(_smooth_l1(D0 - true_D) * mask_2D)
    vloss = jnp.sum((Vd0 - true_V) ** 2 * mask[:, :, None])
    aloss = jnp.sum((AD0 - true_AD) ** 2 * mask[:, :, None])

    # ---- pack weights / constants for the fused per-timestep kernel (one-time XLA) ----
    seg_off, off = [], 0
    for L in loop_length:
        seg_off.append(off)
        off += L
    W1a = jnp.zeros((N, NS * C1), f32)
    W1b = jnp.zeros((N, NS * C1), f32)
    W2a = jnp.zeros((NS * C1, NS * C2), f32)
    W2b = jnp.zeros((NS * C1, NS * C2), f32)
    for i, L in enumerate(loop_length):
        o = seg_off[i]
        ap = p['att'][i]
        W1a = W1a.at[o:o + L, i * C1:(i + 1) * C1].set(ap['w1'][0][:L, :])
        W1b = W1b.at[o:o + L, i * C1:(i + 1) * C1].set(ap['w1'][1][:L, :])
        W2a = W2a.at[i * C1:(i + 1) * C1, i * C2:(i + 1) * C2].set(ap['w2'][0])
        W2b = W2b.at[i * C1:(i + 1) * C1, i * C2:(i + 1) * C2].set(ap['w2'][1])
    c1b = jnp.concatenate([p['att'][i]['b1'] for i in range(NS)], axis=1)
    c1g = jnp.concatenate([p['att'][i]['g1'] for i in range(NS)], axis=1)
    c1be = jnp.concatenate([p['att'][i]['be1'] for i in range(NS)], axis=1)
    c2b = jnp.concatenate([p['att'][i]['b2'] for i in range(NS)], axis=1)
    c2g = jnp.concatenate([p['att'][i]['g2'] for i in range(NS)], axis=1)
    c2be = jnp.concatenate([p['att'][i]['be2'] for i in range(NS)], axis=1)

    WfeatT = p['W_feat'].T
    bfeat_c = p['b_feat'].reshape(F, 1)
    WvT = jnp.concatenate([p['seq_mpn']['Wv'], p['struct_mpn']['Wv']], axis=1).T   # (2H, F)
    bseq_c = p['seq_mpn']['b'].reshape(H, 1)
    bstr_c = p['struct_mpn']['b'].reshape(H, 1)
    SembSeqT = p['seq_mpn']['Semb'].T
    SembStrT = p['struct_mpn']['Semb'].T
    OsT = p['O_s_w'].T
    osb_c = p['O_s_b'].reshape(vocab, 1)
    OdT = p['O_d_w'].T
    odb_c = p['O_d_b'].reshape(12, 1)
    WdihT = p['W_dih'].T
    bdih_c = p['b_dih'].reshape(3, 1)
    WadT = p['W_ad'].T
    bad_c = p['b_ad'].reshape(3, 1)

    x_init = X0.reshape(BN, 12).T                              # (12, BN)
    trueV_t = true_V.reshape(BN, 6).T                          # (6, BN)
    trueAD_t = true_AD.reshape(BN, 3).T                        # (3, BN)
    trueSoh_t = jax.nn.one_hot(true_S.reshape(BN), vocab, dtype=f32).T   # (vocab, BN)
    maskrow = mask.reshape(1, BN)
    nidx = jnp.tile(jnp.arange(N, dtype=jnp.int32), B).reshape(1, BN)
    rowmask1 = jnp.tile((jnp.arange(F) < F - 1).astype(f32), B).reshape(BF, 1)

    args = (x_init, true_D, mask_2D, trueV_t, trueAD_t, trueSoh_t, maskrow, nidx, rowmask1,
            WfeatT, bfeat_c,
            W1a, W1b, c1b, c1g, c1be,
            W2a, W2b, c2b, c2g, c2be,
            WvT, bseq_c, bstr_c, SembSeqT, SembStrT,
            OsT, osb_c, OdT, odb_c,
            WdihT, bdih_c, WadT, bad_c)

    kern = functools.partial(_revision_step_kernel,
                             B=B, N=N, F=F, H=H, VOC=vocab,
                             C1=C1, C2=C2, NS=NS, seg_len=tuple(loop_length))

    acc = pl.pallas_call(
        kern,
        out_shape=jax.ShapeDtypeStruct((1, 128), f32),
        grid=(N,),
        in_specs=[_const_spec(a) for a in args],
        out_specs=pl.BlockSpec((1, 128), lambda t: (0, 0)),
        scratch_shapes=[pltpu.VMEM((12, BN), f32)],
        compiler_params=pltpu.CompilerParams(
            dimension_semantics=("arbitrary",),          # sequential: carries X / S / losses
            vmem_limit_bytes=32 * 1024 * 1024),
    )(*args)

    dloss = (dloss + acc[0, 0]) / jnp.sum(mask_2D)
    vloss = (vloss + acc[0, 1]) / jnp.sum(mask)
    aloss = (aloss + acc[0, 2]) / jnp.sum(mask)
    sloss = acc[0, 3] / jnp.sum(mask)
    return sloss + dloss + vloss + aloss


# --------------------------------------------------------------------------- main
if __name__ == "__main__":
    key = jax.random.PRNGKey(0)
    pk, xk, sk = jax.random.split(key, 3)

    B, N = 2, 9
    loop_length = (3, 3, 3)                 # three CDR loops, sum = N
    hidden, node_in, vocab = 32, 16, 21

    params = init_params(pk, hidden=hidden, node_in=node_in, vocab=vocab)
    true_X = jax.random.normal(xk, (B, N, 4, 3), dtype=jnp.float32)   # backbone N,CA,C,O
    true_S = jax.random.randint(sk, (B, N), 0, vocab)
    mask = jnp.ones((B, N), jnp.float32).at[1, N - 1].set(0.0)

    fwd = jax.jit(forward, static_argnums=(4, 5))
    loss = fwd(params, true_X, true_S, mask, loop_length, node_in)
    loss = jax.block_until_ready(loss)
    assert bool(jnp.isfinite(loss)), "loss is not finite"
    print("KERNEL_OK")
</pallas_src>

<mosaic_0001>
module attributes {stable_mosaic.version = 11 : i64} {
  func.func @_revision_step_kernel(%arg0: i32, %arg1: memref<12x18xf32, #tpu.memory_space<vmem>>, %arg2: memref<2x9x9xf32, #tpu.memory_space<vmem>>, %arg3: memref<2x9x9xf32, #tpu.memory_space<vmem>>, %arg4: memref<6x18xf32, #tpu.memory_space<vmem>>, %arg5: memref<3x18xf32, #tpu.memory_space<vmem>>, %arg6: memref<21x18xf32, #tpu.memory_space<vmem>>, %arg7: memref<1x18xf32, #tpu.memory_space<vmem>>, %arg8: memref<1x18xi32, #tpu.memory_space<vmem>>, %arg9: memref<32x1xf32, #tpu.memory_space<vmem>>, %arg10: memref<16x12xf32, #tpu.memory_space<vmem>>, %arg11: memref<16x1xf32, #tpu.memory_space<vmem>>, %arg12: memref<9x384xf32, #tpu.memory_space<vmem>>, %arg13: memref<9x384xf32, #tpu.memory_space<vmem>>, %arg14: memref<1x384xf32, #tpu.memory_space<vmem>>, %arg15: memref<1x384xf32, #tpu.memory_space<vmem>>, %arg16: memref<1x384xf32, #tpu.memory_space<vmem>>, %arg17: memref<384x768xf32, #tpu.memory_space<vmem>>, %arg18: memref<384x768xf32, #tpu.memory_space<vmem>>, %arg19: memref<1x768xf32, #tpu.memory_space<vmem>>, %arg20: memref<1x768xf32, #tpu.memory_space<vmem>>, %arg21: memref<1x768xf32, #tpu.memory_space<vmem>>, %arg22: memref<64x16xf32, #tpu.memory_space<vmem>>, %arg23: memref<32x1xf32, #tpu.memory_space<vmem>>, %arg24: memref<32x1xf32, #tpu.memory_space<vmem>>, %arg25: memref<32x21xf32, #tpu.memory_space<vmem>>, %arg26: memref<32x21xf32, #tpu.memory_space<vmem>>, %arg27: memref<21x32xf32, #tpu.memory_space<vmem>>, %arg28: memref<21x1xf32, #tpu.memory_space<vmem>>, %arg29: memref<12x32xf32, #tpu.memory_space<vmem>>, %arg30: memref<12x1xf32, #tpu.memory_space<vmem>>, %arg31: memref<3x12xf32, #tpu.memory_space<vmem>>, %arg32: memref<3x1xf32, #tpu.memory_space<vmem>>, %arg33: memref<3x3xf32, #tpu.memory_space<vmem>>, %arg34: memref<3x1xf32, #tpu.memory_space<vmem>>, %arg35: memref<1x128xf32, #tpu.memory_space<vmem>>, %arg36: memref<12x18xf32, #tpu.memory_space<vmem>>) attributes {dimension_semantics = [#tpu.dimension_semantics<arbitrary>], iteration_bounds = array<i64: 9>, scalar_prefetch = 0 : i64, scratch_operands = 1 : i64, tpu.core_type = #tpu.core_type<tc>, window_params = [{pipeline_mode = #tpu.pipeline_mode<synchronous>, transform_indices = @transform_0, window_bounds = array<i64: 12, 18>}, {pipeline_mode = #tpu.pipeline_mode<synchronous>, transform_indices = @transform_1, window_bounds = array<i64: 2, 9, 9>}, {pipeline_mode = #tpu.pipeline_mode<synchronous>, transform_indices = @transform_2, window_bounds = array<i64: 2, 9, 9>}, {pipeline_mode = #tpu.pipeline_mode<synchronous>, transform_indices = @transform_3, window_bounds = array<i64: 6, 18>}, {pipeline_mode = #tpu.pipeline_mode<synchronous>, transform_indices = @transform_4, window_bounds = array<i64: 3, 18>}, {pipeline_mode = #tpu.pipeline_mode<synchronous>, transform_indices = @transform_5, window_bounds = array<i64: 21, 18>}, {pipeline_mode = #tpu.pipeline_mode<synchronous>, transform_indices = @transform_6, window_bounds = array<i64: 1, 18>}, {pipeline_mode = #tpu.pipeline_mode<synchronous>, transform_indices = @transform_7, window_bounds = array<i64: 1, 18>}, {pipeline_mode = #tpu.pipeline_mode<synchronous>, transform_indices = @transform_8, window_bounds = array<i64: 32, 1>}, {pipeline_mode = #tpu.pipeline_mode<synchronous>, transform_indices = @transform_9, window_bounds = array<i64: 16, 12>}, {pipeline_mode = #tpu.pipeline_mode<synchronous>, transform_indices = @transform_10, window_bounds = array<i64: 16, 1>}, {pipeline_mode = #tpu.pipeline_mode<synchronous>, transform_indices = @transform_11, window_bounds = array<i64: 9, 384>}, {pipeline_mode = #tpu.pipeline_mode<synchronous>, transform_indices = @transform_12, window_bounds = array<i64: 9, 384>}, {pipeline_mode = #tpu.pipeline_mode<synchronous>, transform_indices = @transform_13, window_bounds = array<i64: 1, 384>}, {pipeline_mode = #tpu.pipeline_mode<synchronous>, transform_indices = @transform_14, window_bounds = array<i64: 1, 384>}, {pipeline_mode = #tpu.pipeline_mode<synchronous>, transform_indices = @transform_15, window_bounds = array<i64: 1, 384>}, {pipeline_mode = #tpu.pipeline_mode<synchronous>, transform_indices = @transform_16, window_bounds = array<i64: 384, 768>}, {pipeline_mode = #tpu.pipeline_mode<synchronous>, transform_indices = @transform_17, window_bounds = array<i64: 384, 768>}, {pipeline_mode = #tpu.pipeline_mode<synchronous>, transform_indices = @transform_18, window_bounds = array<i64: 1, 768>}, {pipeline_mode = #tpu.pipeline_mode<synchronous>, transform_indices = @transform_19, window_bounds = array<i64: 1, 768>}, {pipeline_mode = #tpu.pipeline_mode<synchronous>, transform_indices = @transform_20, window_bounds = array<i64: 1, 768>}, {pipeline_mode = #tpu.pipeline_mode<synchronous>, transform_indices = @transform_21, window_bounds = array<i64: 64, 16>}, {pipeline_mode = #tpu.pipeline_mode<synchronous>, transform_indices = @transform_22, window_bounds = array<i64: 32, 1>}, {pipeline_mode = #tpu.pipeline_mode<synchronous>, transform_indices = @transform_23, window_bounds = array<i64: 32, 1>}, {pipeline_mode = #tpu.pipeline_mode<synchronous>, transform_indices = @transform_24, window_bounds = array<i64: 32, 21>}, {pipeline_mode = #tpu.pipeline_mode<synchronous>, transform_indices = @transform_25, window_bounds = array<i64: 32, 21>}, {pipeline_mode = #tpu.pipeline_mode<synchronous>, transform_indices = @transform_26, window_bounds = array<i64: 21, 32>}, {pipeline_mode = #tpu.pipeline_mode<synchronous>, transform_indices = @transform_27, window_bounds = array<i64: 21, 1>}, {pipeline_mode = #tpu.pipeline_mode<synchronous>, transform_indices = @transform_28, window_bounds = array<i64: 12, 32>}, {pipeline_mode = #tpu.pipeline_mode<synchronous>, transform_indices = @transform_29, window_bounds = array<i64: 12, 1>}, {pipeline_mode = #tpu.pipeline_mode<synchronous>, transform_indices = @transform_30, window_bounds = array<i64: 3, 12>}, {pipeline_mode = #tpu.pipeline_mode<synchronous>, transform_indices = @transform_31, window_bounds = array<i64: 3, 1>}, {pipeline_mode = #tpu.pipeline_mode<synchronous>, transform_indices = @transform_32, window_bounds = array<i64: 3, 3>}, {pipeline_mode = #tpu.pipeline_mode<synchronous>, transform_indices = @transform_33, window_bounds = array<i64: 3, 1>}, {pipeline_mode = #tpu.pipeline_mode<synchronous>, transform_indices = @transform_34, window_bounds = array<i64: 1, 128>}]} {
    %c0_i32 = arith.constant 0 : i32
    %0 = arith.cmpi eq, %arg0, %c0_i32 : i32
    %1 = arith.extui %0 : i1 to i32
    %c0_i32_0 = arith.constant 0 : i32
    %2 = arith.cmpi ne, %1, %c0_i32_0 : i32
    scf.if %2 {
      %c0_131 = arith.constant 0 : index
      %c0_132 = arith.constant 0 : index
      %323 = vector.load %arg1[%c0_131, %c0_132] : memref<12x18xf32, #tpu.memory_space<vmem>>, vector<12x18xf32>
      %c0_133 = arith.constant 0 : index
      %c0_134 = arith.constant 0 : index
      %324 = vector.load %arg36[%c0_133, %c0_134] : memref<12x18xf32, #tpu.memory_space<vmem>>, vector<12x18xf32>
      tpu.vector_store %arg36[%c0_133, %c0_134], %323 {strides = array<i32>} : memref<12x18xf32, #tpu.memory_space<vmem>>, vector<12x18xf32>,
      %cst_135 = arith.constant 0.000000e+00 : f32
      %325 = vector.broadcast %cst_135 : f32 to vector<1x128xf32>
      %c0_136 = arith.constant 0 : index
      %c0_137 = arith.constant 0 : index
      %326 = vector.load %arg35[%c0_136, %c0_137] : memref<1x128xf32, #tpu.memory_space<vmem>>, vector<1x128xf32>
      tpu.vector_store %arg35[%c0_136, %c0_137], %325 {strides = array<i32>} : memref<1x128xf32, #tpu.memory_space<vmem>>, vector<1x128xf32>,
    } else {
    }
    %c0 = arith.constant 0 : index
    %c0_1 = arith.constant 0 : index
    %3 = vector.load %arg7[%c0, %c0_1] : memref<1x18xf32, #tpu.memory_space<vmem>>, vector<1x18xf32>
    %c0_2 = arith.constant 0 : index
    %c0_3 = arith.constant 0 : index
    %4 = vector.load %arg8[%c0_2, %c0_3] : memref<1x18xi32, #tpu.memory_space<vmem>>, vector<1x18xi32>
    %c0_4 = arith.constant 0 : index
    %c0_5 = arith.constant 0 : index
    %5 = vector.load %arg36[%c0_4, %c0_5] : memref<12x18xf32, #tpu.memory_space<vmem>>, vector<12x18xf32>
    %c0_6 = arith.constant 0 : index
    %c0_7 = arith.constant 0 : index
    %6 = vector.load %arg10[%c0_6, %c0_7] : memref<16x12xf32, #tpu.memory_space<vmem>>, vector<16x12xf32>
    %cst = arith.constant dense<0.000000e+00> : vector<16x18xf32>
    %7 = tpu.matmul %6, %5, %cst {dimension_numbers = #tpu.dot_dimension_numbers<[1], [0], [0], [1], [0, 0, 1, 1], [], []>} : vector<16x12xf32>, vector<12x18xf32>, vector<16x18xf32> -> vector<16x18xf32>
    %c0_8 = arith.constant 0 : index
    %c0_9 = arith.constant 0 : index
    %8 = vector.load %arg11[%c0_8, %c0_9] : memref<16x1xf32, #tpu.memory_space<vmem>>, vector<16x1xf32>
    %9 = vector.broadcast %8 : vector<16x1xf32> to vector<16x18xf32>
    %10 = arith.addf %7, %9 : vector<16x18xf32>
    %cst_10 = arith.constant 0.000000e+00 : f32
    %11 = vector.broadcast %cst_10 : f32 to vector<16x18xf32>
    %12 = arith.maximumf %10, %11 : vector<16x18xf32>
    %13 = vector.broadcast %3 : vector<1x18xf32> to vector<16x18xf32>
    %14 = arith.mulf %12, %13 : vector<16x18xf32>
    %15 = vector.extract_strided_slice %14 {offsets = [0, 0], sizes = [16, 9], strides = [1, 1]} : vector<16x18xf32> to vector<16x9xf32>
    %16 = vector.extract_strided_slice %14 {offsets = [0, 9], sizes = [16, 9], strides = [1, 1]} : vector<16x18xf32> to vector<16x9xf32>
    %17 = tpu.concatenate %15, %16 in 0 : vector<16x9xf32>, vector<16x9xf32> -> vector<32x9xf32>
    %18 = vector.extract_strided_slice %17 {offsets = [1, 0], sizes = [31, 9], strides = [1, 1]} : vector<32x9xf32> to vector<31x9xf32>
    %cst_11 = arith.constant 0.000000e+00 : f32
    %19 = vector.broadcast %cst_11 : f32 to vector<1x9xf32>
    %20 = tpu.concatenate %18, %19 in 0 : vector<31x9xf32>, vector<1x9xf32> -> vector<32x9xf32>
    %c0_12 = arith.constant 0 : index
    %c0_13 = arith.constant 0 : index
    %21 = vector.load %arg12[%c0_12, %c0_13] : memref<9x384xf32, #tpu.memory_space<vmem>>, vector<9x384xf32>
    %cst_14 = arith.constant dense<0.000000e+00> : vector<32x384xf32>
    %22 = tpu.matmul %17, %21, %cst_14 {dimension_numbers = #tpu.dot_dimension_numbers<[1], [0], [0], [1], [0, 0, 1, 1], [], []>} : vector<32x9xf32>, vector<9x384xf32>, vector<32x384xf32> -> vector<32x384xf32>
    %c0_15 = arith.constant 0 : index
    %c0_16 = arith.constant 0 : index
    %23 = vector.load %arg13[%c0_15, %c0_16] : memref<9x384xf32, #tpu.memory_space<vmem>>, vector<9x384xf32>
    %cst_17 = arith.constant dense<0.000000e+00> : vector<32x384xf32>
    %24 = tpu.matmul %20, %23, %cst_17 {dimension_numbers = #tpu.dot_dimension_numbers<[1], [0], [0], [1], [0, 0, 1, 1], [], []>} : vector<32x9xf32>, vector<9x384xf32>, vector<32x384xf32> -> vector<32x384xf32>
    %25 = arith.addf %22, %24 : vector<32x384xf32>
    %c0_18 = arith.constant 0 : index
    %c0_19 = arith.constant 0 : index
    %26 = vector.load %arg14[%c0_18, %c0_19] : memref<1x384xf32, #tpu.memory_space<vmem>>, vector<1x384xf32>
    %27 = vector.broadcast %26 : vector<1x384xf32> to vector<32x384xf32>
    %28 = arith.addf %25, %27 : vector<32x384xf32>
    %c0_20 = arith.constant 0 : index
    %c0_21 = arith.constant 0 : index
    %29 = vector.load %arg9[%c0_20, %c0_21] : memref<32x1xf32, #tpu.memory_space<vmem>>, vector<32x1xf32>
    %30 = vector.broadcast %29 : vector<32x1xf32> to vector<32x384xf32>
    %31 = arith.mulf %28, %30 : vector<32x384xf32>
    %cst_22 = arith.constant dense<0.000000e+00> : vector<384xf32>
    %32 = vector.multi_reduction <add>, %31, %cst_22 [0] : vector<32x384xf32> to vector<384xf32>
    %33 = vector.shape_cast %32 : vector<384xf32> to vector<1x384xf32>
    %cst_23 = arith.constant 0.0333333351 : f32
    %34 = vector.broadcast %cst_23 : f32 to vector<1x384xf32>
    %35 = arith.mulf %33, %34 : vector<1x384xf32>
    %36 = vector.broadcast %35 : vector<1x384xf32> to vector<32x384xf32>
    %37 = arith.subf %28, %36 : vector<32x384xf32>
    %38 = arith.mulf %37, %37 : vector<32x384xf32>
    %39 = vector.broadcast %29 : vector<32x1xf32> to vector<32x384xf32>
    %40 = arith.mulf %38, %39 : vector<32x384xf32>
    %cst_24 = arith.constant dense<0.000000e+00> : vector<384xf32>
    %41 = vector.multi_reduction <add>, %40, %cst_24 [0] : vector<32x384xf32> to vector<384xf32>
    %42 = vector.shape_cast %41 : vector<384xf32> to vector<1x384xf32>
    %cst_25 = arith.constant 0.0333333351 : f32
    %43 = vector.broadcast %cst_25 : f32 to vector<1x384xf32>
    %44 = arith.mulf %42, %43 : vector<1x384xf32>
    %45 = vector.broadcast %35 : vector<1x384xf32> to vector<32x384xf32>
    %46 = arith.subf %28, %45 : vector<32x384xf32>
    %cst_26 = arith.constant 9.99999974E-6 : f32
    %47 = vector.broadcast %cst_26 : f32 to vector<1x384xf32>
    %48 = arith.addf %44, %47 : vector<1x384xf32>
    %49 = math.rsqrt %48 : vector<1x384xf32>
    %50 = vector.broadcast %49 : vector<1x384xf32> to vector<32x384xf32>
    %51 = arith.mulf %46, %50 : vector<32x384xf32>
    %c0_27 = arith.constant 0 : index
    %c0_28 = arith.constant 0 : index
    %52 = vector.load %arg15[%c0_27, %c0_28] : memref<1x384xf32, #tpu.memory_space<vmem>>, vector<1x384xf32>
    %53 = vector.broadcast %52 : vector<1x384xf32> to vector<32x384xf32>
    %54 = arith.mulf %51, %53 : vector<32x384xf32>
    %c0_29 = arith.constant 0 : index
    %c0_30 = arith.constant 0 : index
    %55 = vector.load %arg16[%c0_29, %c0_30] : memref<1x384xf32, #tpu.memory_space<vmem>>, vector<1x384xf32>
    %56 = vector.broadcast %55 : vector<1x384xf32> to vector<32x384xf32>
    %57 = arith.addf %54, %56 : vector<32x384xf32>
    %cst_31 = arith.constant 0.000000e+00 : f32
    %58 = vector.broadcast %cst_31 : f32 to vector<32x384xf32>
    %59 = arith.maximumf %57, %58 : vector<32x384xf32>
    %60 = vector.broadcast %29 : vector<32x1xf32> to vector<32x384xf32>
    %61 = arith.mulf %59, %60 : vector<32x384xf32>
    %cst_32 = arith.constant 0.000000e+00 : f32
    %62 = vector.broadcast %cst_32 : f32 to vector<1x384xf32>
    %63 = vector.extract_strided_slice %61 {offsets = [0, 0], sizes = [31, 384], strides = [1, 1]} : vector<32x384xf32> to vector<31x384xf32>
    %64 = tpu.concatenate %62, %63 in 0 : vector<1x384xf32>, vector<31x384xf32> -> vector<32x384xf32>
    %c0_33 = arith.constant 0 : index
    %c0_34 = arith.constant 0 : index
    %65 = vector.load %arg17[%c0_33, %c0_34] : memref<384x768xf32, #tpu.memory_space<vmem>>, vector<384x768xf32>
    %cst_35 = arith.constant dense<0.000000e+00> : vector<32x768xf32>
    %66 = tpu.matmul %64, %65, %cst_35 {dimension_numbers = #tpu.dot_dimension_numbers<[1], [0], [0], [1], [0, 0, 1, 1], [], []>} : vector<32x384xf32>, vector<384x768xf32>, vector<32x768xf32> -> vector<32x768xf32>
    %c0_36 = arith.constant 0 : index
    %c0_37 = arith.constant 0 : index
    %67 = vector.load %arg18[%c0_36, %c0_37] : memref<384x768xf32, #tpu.memory_space<vmem>>, vector<384x768xf32>
    %cst_38 = arith.constant dense<0.000000e+00> : vector<32x768xf32>
    %68 = tpu.matmul %61, %67, %cst_38 {dimension_numbers = #tpu.dot_dimension_numbers<[1], [0], [0], [1], [0, 0, 1, 1], [], []>} : vector<32x384xf32>, vector<384x768xf32>, vector<32x768xf32> -> vector<32x768xf32>
    %69 = arith.addf %66, %68 : vector<32x768xf32>
    %c0_39 = arith.constant 0 : index
    %c0_40 = arith.constant 0 : index
    %70 = vector.load %arg19[%c0_39, %c0_40] : memref<1x768xf32, #tpu.memory_space<vmem>>, vector<1x768xf32>
    %71 = vector.broadcast %70 : vector<1x768xf32> to vector<32x768xf32>
    %72 = arith.addf %69, %71 : vector<32x768xf32>
    %cst_41 = arith.constant dense<0.000000e+00> : vector<768xf32>
    %73 = vector.multi_reduction <add>, %72, %cst_41 [0] : vector<32x768xf32> to vector<768xf32>
    %74 = vector.shape_cast %73 : vector<768xf32> to vector<1x768xf32>
    %cst_42 = arith.constant 3.125000e-02 : f32
    %75 = vector.broadcast %cst_42 : f32 to vector<1x768xf32>
    %76 = arith.mulf %74, %75 : vector<1x768xf32>
    %77 = vector.broadcast %76 : vector<1x768xf32> to vector<32x768xf32>
    %78 = arith.subf %72, %77 : vector<32x768xf32>
    %79 = arith.mulf %78, %78 : vector<32x768xf32>
    %cst_43 = arith.constant dense<0.000000e+00> : vector<768xf32>
    %80 = vector.multi_reduction <add>, %79, %cst_43 [0] : vector<32x768xf32> to vector<768xf32>
    %81 = vector.shape_cast %80 : vector<768xf32> to vector<1x768xf32>
    %cst_44 = arith.constant 3.125000e-02 : f32
    %82 = vector.broadcast %cst_44 : f32 to vector<1x768xf32>
    %83 = arith.mulf %81, %82 : vector<1x768xf32>
    %84 = vector.broadcast %76 : vector<1x768xf32> to vector<32x768xf32>
    %85 = arith.subf %72, %84 : vector<32x768xf32>
    %cst_45 = arith.constant 9.99999974E-6 : f32
    %86 = vector.broadcast %cst_45 : f32 to vector<1x768xf32>
    %87 = arith.addf %83, %86 : vector<1x768xf32>
    %88 = math.rsqrt %87 : vector<1x768xf32>
    %89 = vector.broadcast %88 : vector<1x768xf32> to vector<32x768xf32>
    %90 = arith.mulf %85, %89 : vector<32x768xf32>
    %c0_46 = arith.constant 0 : index
    %c0_47 = arith.constant 0 : index
    %91 = vector.load %arg20[%c0_46, %c0_47] : memref<1x768xf32, #tpu.memory_space<vmem>>, vector<1x768xf32>
    %92 = vector.broadcast %91 : vector<1x768xf32> to vector<32x768xf32>
    %93 = arith.mulf %90, %92 : vector<32x768xf32>
    %c0_48 = arith.constant 0 : index
    %c0_49 = arith.constant 0 : index
    %94 = vector.load %arg21[%c0_48, %c0_49] : memref<1x768xf32, #tpu.memory_space<vmem>>, vector<1x768xf32>
    %95 = vector.broadcast %94 : vector<1x768xf32> to vector<32x768xf32>
    %96 = arith.addf %93, %95 : vector<32x768xf32>
    %97 = arith.negf %96 : vector<32x768xf32>
    %98 = math.exp %97 : vector<32x768xf32>
    %cst_50 = arith.constant 1.000000e+00 : f32
    %99 = vector.broadcast %cst_50 : f32 to vector<32x768xf32>
    %100 = arith.addf %99, %98 : vector<32x768xf32>
    %101 = arith.divf %99, %100 : vector<32x768xf32>
    %102 = vector.extract_strided_slice %101 {offsets = [0, 0], sizes = [16, 768], strides = [1, 1]} : vector<32x768xf32> to vector<16x768xf32>
    %103 = vector.extract_strided_slice %102 {offsets = [0, 0], sizes = [16, 3], strides = [1, 1]} : vector<16x768xf32> to vector<16x3xf32>
    %104 = vector.extract_strided_slice %102 {offsets = [0, 256], sizes = [16, 3], strides = [1, 1]} : vector<16x768xf32> to vector<16x3xf32>
    %105 = vector.extract_strided_slice %102 {offsets = [0, 512], sizes = [16, 3], strides = [1, 1]} : vector<16x768xf32> to vector<16x3xf32>
    %106 = vector.extract_strided_slice %101 {offsets = [16, 0], sizes = [16, 768], strides = [1, 1]} : vector<32x768xf32> to vector<16x768xf32>
    %107 = vector.extract_strided_slice %106 {offsets = [0, 0], sizes = [16, 3], strides = [1, 1]} : vector<16x768xf32> to vector<16x3xf32>
    %108 = vector.extract_strided_slice %106 {offsets = [0, 256], sizes = [16, 3], strides = [1, 1]} : vector<16x768xf32> to vector<16x3xf32>
    %109 = vector.extract_strided_slice %106 {offsets = [0, 512], sizes = [16, 3], strides = [1, 1]} : vector<16x768xf32> to vector<16x3xf32>
    %110 = tpu.concatenate %103, %104, %105, %107, %108, %109 in 1 : vector<16x3xf32>, vector<16x3xf32>, vector<16x3xf32>, vector<16x3xf32>, vector<16x3xf32>, vector<16x3xf32> -> vector<16x18xf32>
    %111 = vector.broadcast %arg0 : i32 to vector<1x18xi32>
    %112 = arith.cmpi slt, %4, %111 : vector<1x18xi32>
    %113 = arith.extui %112 : vector<1x18xi1> to vector<1x18xi32>
    %114 = arith.sitofp %113 : vector<1x18xi32> to vector<1x18xf32>
    %115 = vector.broadcast %arg0 : i32 to vector<1x18xi32>
    %116 = arith.cmpi sle, %4, %115 : vector<1x18xi32>
    %117 = arith.extui %116 : vector<1x18xi1> to vector<1x18xi32>
    %118 = arith.sitofp %117 : vector<1x18xi32> to vector<1x18xf32>
    %119 = tpu.iota {dimensions = array<i32: 0>} : vector<21x1xi32>
    %c0_i32_51 = arith.constant 0 : i32
    %120 = vector.broadcast %c0_i32_51 : i32 to vector<21x1xi32>
    %121 = arith.cmpi eq, %119, %120 : vector<21x1xi32>
    %122 = arith.extui %121 : vector<21x1xi1> to vector<21x1xi32>
    %123 = arith.sitofp %122 : vector<21x1xi32> to vector<21x1xf32>
    %c0_52 = arith.constant 0 : index
    %c0_53 = arith.constant 0 : index
    %124 = vector.load %arg6[%c0_52, %c0_53] : memref<21x18xf32, #tpu.memory_space<vmem>>, vector<21x18xf32>
    %125 = vector.broadcast %114 : vector<1x18xf32> to vector<21x18xf32>
    %126 = arith.mulf %125, %124 : vector<21x18xf32>
    %cst_54 = arith.constant 1.000000e+00 : f32
    %127 = vector.broadcast %cst_54 : f32 to vector<1x18xf32>
    %128 = arith.subf %127, %114 : vector<1x18xf32>
    %129 = vector.broadcast %128 : vector<1x18xf32> to vector<21x18xf32>
    %130 = vector.broadcast %123 : vector<21x1xf32> to vector<21x18xf32>
    %131 = arith.mulf %129, %130 : vector<21x18xf32>
    %132 = arith.addf %126, %131 : vector<21x18xf32>
    %133 = vector.broadcast %118 : vector<1x18xf32> to vector<21x18xf32>
    %134 = arith.mulf %133, %124 : vector<21x18xf32>
    %cst_55 = arith.constant 1.000000e+00 : f32
    %135 = vector.broadcast %cst_55 : f32 to vector<1x18xf32>
    %136 = arith.subf %135, %118 : vector<1x18xf32>
    %137 = vector.broadcast %136 : vector<1x18xf32> to vector<21x18xf32>
    %138 = vector.broadcast %123 : vector<21x1xf32> to vector<21x18xf32>
    %139 = arith.mulf %137, %138 : vector<21x18xf32>
    %140 = arith.addf %134, %139 : vector<21x18xf32>
    %c0_56 = arith.constant 0 : index
    %c0_57 = arith.constant 0 : index
    %141 = vector.load %arg22[%c0_56, %c0_57] : memref<64x16xf32, #tpu.memory_space<vmem>>, vector<64x16xf32>
    %cst_58 = arith.constant dense<0.000000e+00> : vector<64x18xf32>
    %142 = tpu.matmul %141, %110, %cst_58 {dimension_numbers = #tpu.dot_dimension_numbers<[1], [0], [0], [1], [0, 0, 1, 1], [], []>} : vector<64x16xf32>, vector<16x18xf32>, vector<64x18xf32> -> vector<64x18xf32>
    %143 = vector.extract_strided_slice %142 {offsets = [0, 0], sizes = [32, 18], strides = [1, 1]} : vector<64x18xf32> to vector<32x18xf32>
    %c0_59 = arith.constant 0 : index
    %c0_60 = arith.constant 0 : index
    %144 = vector.load %arg23[%c0_59, %c0_60] : memref<32x1xf32, #tpu.memory_space<vmem>>, vector<32x1xf32>
    %145 = vector.broadcast %144 : vector<32x1xf32> to vector<32x18xf32>
    %146 = arith.addf %143, %145 : vector<32x18xf32>
    %c0_61 = arith.constant 0 : index
    %c0_62 = arith.constant 0 : index
    %147 = vector.load %arg25[%c0_61, %c0_62] : memref<32x21xf32, #tpu.memory_space<vmem>>, vector<32x21xf32>
    %cst_63 = arith.constant dense<0.000000e+00> : vector<32x18xf32>
    %148 = tpu.matmul %147, %132, %cst_63 {dimension_numbers = #tpu.dot_dimension_numbers<[1], [0], [0], [1], [0, 0, 1, 1], [], []>} : vector<32x21xf32>, vector<21x18xf32>, vector<32x18xf32> -> vector<32x18xf32>
    %149 = arith.addf %146, %148 : vector<32x18xf32>
    %cst_64 = arith.constant 0.000000e+00 : f32
    %150 = vector.broadcast %cst_64 : f32 to vector<32x18xf32>
    %151 = arith.maximumf %149, %150 : vector<32x18xf32>
    %152 = vector.broadcast %3 : vector<1x18xf32> to vector<32x18xf32>
    %153 = arith.mulf %151, %152 : vector<32x18xf32>
    %c0_65 = arith.constant 0 : index
    %c0_66 = arith.constant 0 : index
    %154 = vector.load %arg27[%c0_65, %c0_66] : memref<21x32xf32, #tpu.memory_space<vmem>>, vector<21x32xf32>
    %cst_67 = arith.constant dense<0.000000e+00> : vector<21x18xf32>
    %155 = tpu.matmul %154, %153, %cst_67 {dimension_numbers = #tpu.dot_dimension_numbers<[1], [0], [0], [1], [0, 0, 1, 1], [], []>} : vector<21x32xf32>, vector<32x18xf32>, vector<21x18xf32> -> vector<21x18xf32>
    %c0_68 = arith.constant 0 : index
    %c0_69 = arith.constant 0 : index
    %156 = vector.load %arg28[%c0_68, %c0_69] : memref<21x1xf32, #tpu.memory_space<vmem>>, vector<21x1xf32>
    %157 = vector.broadcast %156 : vector<21x1xf32> to vector<21x18xf32>
    %158 = arith.addf %155, %157 : vector<21x18xf32>
    %cst_70 = arith.constant dense<0xFF800000> : vector<18xf32>
    %159 = vector.multi_reduction <maximumf>, %158, %cst_70 [0] : vector<21x18xf32> to vector<18xf32>
    %160 = vector.shape_cast %159 : vector<18xf32> to vector<1x18xf32>
    %161 = vector.broadcast %160 : vector<1x18xf32> to vector<21x18xf32>
    %162 = arith.subf %158, %161 : vector<21x18xf32>
    %163 = math.exp %162 : vector<21x18xf32>
    %cst_71 = arith.constant dense<0.000000e+00> : vector<18xf32>
    %164 = vector.multi_reduction <add>, %163, %cst_71 [0] : vector<21x18xf32> to vector<18xf32>
    %165 = vector.shape_cast %164 : vector<18xf32> to vector<1x18xf32>
    %166 = math.log %165 : vector<1x18xf32>
    %167 = arith.addf %166, %160 : vector<1x18xf32>
    %168 = arith.mulf %124, %158 : vector<21x18xf32>
    %cst_72 = arith.constant dense<0.000000e+00> : vector<18xf32>
    %169 = vector.multi_reduction <add>, %168, %cst_72 [0] : vector<21x18xf32> to vector<18xf32>
    %170 = vector.shape_cast %169 : vector<18xf32> to vector<1x18xf32>
    %171 = arith.subf %167, %170 : vector<1x18xf32>
    %172 = vector.broadcast %arg0 : i32 to vector<1x18xi32>
    %173 = arith.cmpi eq, %4, %172 : vector<1x18xi32>
    %174 = arith.extui %173 : vector<1x18xi1> to vector<1x18xi32>
    %175 = arith.sitofp %174 : vector<1x18xi32> to vector<1x18xf32>
    %176 = arith.mulf %171, %175 : vector<1x18xf32>
    %177 = arith.mulf %176, %3 : vector<1x18xf32>
    %178 = vector.shape_cast %177 : vector<1x18xf32> to vector<1x1x18xf32>
    %cst_73 = arith.constant dense<0.000000e+00> : vector<1xf32>
    %179 = vector.multi_reduction <add>, %178, %cst_73 [1, 2] : vector<1x1x18xf32> to vector<1xf32>
    %180 = vector.shape_cast %179 : vector<1xf32> to vector<1x1x1xf32>
    %181 = vector.extract %180[0, 0, 0] : f32 from vector<1x1x1xf32>
    %182 = vector.extract_strided_slice %142 {offsets = [32, 0], sizes = [32, 18], strides = [1, 1]} : vector<64x18xf32> to vector<32x18xf32>
    %c0_74 = arith.constant 0 : index
    %c0_75 = arith.constant 0 : index
    %183 = vector.load %arg24[%c0_74, %c0_75] : memref<32x1xf32, #tpu.memory_space<vmem>>, vector<32x1xf32>
    %184 = vector.broadcast %183 : vector<32x1xf32> to vector<32x18xf32>
    %185 = arith.addf %182, %184 : vector<32x18xf32>
    %c0_76 = arith.constant 0 : index
    %c0_77 = arith.constant 0 : index
    %186 = vector.load %arg26[%c0_76, %c0_77] : memref<32x21xf32, #tpu.memory_space<vmem>>, vector<32x21xf32>
    %cst_78 = arith.constant dense<0.000000e+00> : vector<32x18xf32>
    %187 = tpu.matmul %186, %140, %cst_78 {dimension_numbers = #tpu.dot_dimension_numbers<[1], [0], [0], [1], [0, 0, 1, 1], [], []>} : vector<32x21xf32>, vector<21x18xf32>, vector<32x18xf32> -> vector<32x18xf32>
    %188 = arith.addf %185, %187 : vector<32x18xf32>
    %cst_79 = arith.constant 0.000000e+00 : f32
    %189 = vector.broadcast %cst_79 : f32 to vector<32x18xf32>
    %190 = arith.maximumf %188, %189 : vector<32x18xf32>
    %191 = vector.broadcast %3 : vector<1x18xf32> to vector<32x18xf32>
    %192 = arith.mulf %190, %191 : vector<32x18xf32>
    %c0_80 = arith.constant 0 : index
    %c0_81 = arith.constant 0 : index
    %193 = vector.load %arg29[%c0_80, %c0_81] : memref<12x32xf32, #tpu.memory_space<vmem>>, vector<12x32xf32>
    %cst_82 = arith.constant dense<0.000000e+00> : vector<12x18xf32>
    %194 = tpu.matmul %193, %192, %cst_82 {dimension_numbers = #tpu.dot_dimension_numbers<[1], [0], [0], [1], [0, 0, 1, 1], [], []>} : vector<12x32xf32>, vector<32x18xf32>, vector<12x18xf32> -> vector<12x18xf32>
    %c0_83 = arith.constant 0 : index
    %c0_84 = arith.constant 0 : index
    %195 = vector.load %arg30[%c0_83, %c0_84] : memref<12x1xf32, #tpu.memory_space<vmem>>, vector<12x1xf32>
    %196 = vector.broadcast %195 : vector<12x1xf32> to vector<12x18xf32>
    %197 = arith.addf %194, %196 : vector<12x18xf32>
    %c0_85 = arith.constant 0 : index
    %c0_86 = arith.constant 0 : index
    %198 = vector.load %arg36[%c0_85, %c0_86] : memref<12x18xf32, #tpu.memory_space<vmem>>, vector<12x18xf32>
    tpu.vector_store %arg36[%c0_85, %c0_86], %197 {strides = array<i32>} : memref<12x18xf32, #tpu.memory_space<vmem>>, vector<12x18xf32>,
    %c0_87 = arith.constant 0 : index
    %c0_88 = arith.constant 0 : index
    %199 = vector.load %arg31[%c0_87, %c0_88] : memref<3x12xf32, #tpu.memory_space<vmem>>, vector<3x12xf32>
    %cst_89 = arith.constant dense<0.000000e+00> : vector<3x18xf32>
    %200 = tpu.matmul %199, %197, %cst_89 {dimension_numbers = #tpu.dot_dimension_numbers<[1], [0], [0], [1], [0, 0, 1, 1], [], []>} : vector<3x12xf32>, vector<12x18xf32>, vector<3x18xf32> -> vector<3x18xf32>
    %c0_90 = arith.constant 0 : index
    %c0_91 = arith.constant 0 : index
    %201 = vector.load %arg32[%c0_90, %c0_91] : memref<3x1xf32, #tpu.memory_space<vmem>>, vector<3x1xf32>
    %202 = vector.broadcast %201 : vector<3x1xf32> to vector<3x18xf32>
    %203 = arith.addf %200, %202 : vector<3x18xf32>
    %204 = math.tanh %203 : vector<3x18xf32>
    %205 = arith.negf %203 : vector<3x18xf32>
    %206 = math.exp %205 : vector<3x18xf32>
    %cst_92 = arith.constant 1.000000e+00 : f32
    %207 = vector.broadcast %cst_92 : f32 to vector<3x18xf32>
    %208 = arith.addf %207, %206 : vector<3x18xf32>
    %209 = arith.divf %207, %208 : vector<3x18xf32>
    %210 = tpu.concatenate %204, %209 in 0 : vector<3x18xf32>, vector<3x18xf32> -> vector<6x18xf32>
    %c0_93 = arith.constant 0 : index
    %c0_94 = arith.constant 0 : index
    %211 = vector.load %arg4[%c0_93, %c0_94] : memref<6x18xf32, #tpu.memory_space<vmem>>, vector<6x18xf32>
    %212 = arith.subf %210, %211 : vector<6x18xf32>
    %213 = arith.mulf %212, %212 : vector<6x18xf32>
    %214 = vector.broadcast %3 : vector<1x18xf32> to vector<6x18xf32>
    %215 = arith.mulf %213, %214 : vector<6x18xf32>
    %216 = vector.shape_cast %215 : vector<6x18xf32> to vector<1x6x18xf32>
    %cst_95 = arith.constant dense<0.000000e+00> : vector<1xf32>
    %217 = vector.multi_reduction <add>, %216, %cst_95 [1, 2] : vector<1x6x18xf32> to vector<1xf32>
    %218 = vector.shape_cast %217 : vector<1xf32> to vector<1x1x1xf32>
    %219 = vector.extract %218[0, 0, 0] : f32 from vector<1x1x1xf32>
    %220 = vector.extract_strided_slice %197 {offsets = [3, 0], sizes = [3, 18], strides = [1, 1]} : vector<12x18xf32> to vector<3x18xf32>
    %c0_96 = arith.constant 0 : index
    %c0_97 = arith.constant 0 : index
    %221 = vector.load %arg33[%c0_96, %c0_97] : memref<3x3xf32, #tpu.memory_space<vmem>>, vector<3x3xf32>
    %cst_98 = arith.constant dense<0.000000e+00> : vector<3x18xf32>
    %222 = tpu.matmul %221, %220, %cst_98 {dimension_numbers = #tpu.dot_dimension_numbers<[1], [0], [0], [1], [0, 0, 1, 1], [], []>} : vector<3x3xf32>, vector<3x18xf32>, vector<3x18xf32> -> vector<3x18xf32>
    %c0_99 = arith.constant 0 : index
    %c0_100 = arith.constant 0 : index
    %223 = vector.load %arg34[%c0_99, %c0_100] : memref<3x1xf32, #tpu.memory_space<vmem>>, vector<3x1xf32>
    %224 = vector.broadcast %223 : vector<3x1xf32> to vector<3x18xf32>
    %225 = arith.addf %222, %224 : vector<3x18xf32>
    %226 = math.tanh %225 : vector<3x18xf32>
    %c0_101 = arith.constant 0 : index
    %c0_102 = arith.constant 0 : index
    %227 = vector.load %arg5[%c0_101, %c0_102] : memref<3x18xf32, #tpu.memory_space<vmem>>, vector<3x18xf32>
    %228 = arith.subf %226, %227 : vector<3x18xf32>
    %229 = arith.mulf %228, %228 : vector<3x18xf32>
    %230 = vector.broadcast %3 : vector<1x18xf32> to vector<3x18xf32>
    %231 = arith.mulf %229, %230 : vector<3x18xf32>
    %232 = vector.shape_cast %231 : vector<3x18xf32> to vector<1x3x18xf32>
    %cst_103 = arith.constant dense<0.000000e+00> : vector<1xf32>
    %233 = vector.multi_reduction <add>, %232, %cst_103 [1, 2] : vector<1x3x18xf32> to vector<1xf32>
    %234 = vector.shape_cast %233 : vector<1xf32> to vector<1x1x1xf32>
    %235 = vector.extract %234[0, 0, 0] : f32 from vector<1x1x1xf32>
    %236 = vector.extract_strided_slice %220 {offsets = [0, 0], sizes = [3, 9], strides = [1, 1]} : vector<3x18xf32> to vector<3x9xf32>
    %237 = vector.shape_cast %236 : vector<3x9xf32> to vector<3x9x1xf32>
    %238 = vector.shape_cast %236 : vector<3x9xf32> to vector<3x1x9xf32>
    %239 = vector.broadcast %237 : vector<3x9x1xf32> to vector<3x9x9xf32>
    %240 = vector.broadcast %238 : vector<3x1x9xf32> to vector<3x9x9xf32>
    %241 = arith.subf %239, %240 : vector<3x9x9xf32>
    %242 = arith.mulf %241, %241 : vector<3x9x9xf32>
    %cst_104 = arith.constant dense<0.000000e+00> : vector<9x9xf32>
    %243 = vector.multi_reduction <add>, %242, %cst_104 [0] : vector<3x9x9xf32> to vector<9x9xf32>
    %c0_105 = arith.constant 0 : index
    %c0_106 = arith.constant 0 : index
    %c0_107 = arith.constant 0 : index
    %244 = vector.load %arg2[%c0_105, %c0_106, %c0_107] : memref<2x9x9xf32, #tpu.memory_space<vmem>>, vector<1x9x9xf32>
    %245 = vector.shape_cast %244 : vector<1x9x9xf32> to vector<9x9xf32>
    %246 = arith.subf %243, %245 : vector<9x9xf32>
    %247 = math.absf %246 : vector<9x9xf32>
    %cst_108 = arith.constant 1.000000e+00 : f32
    %248 = vector.broadcast %cst_108 : f32 to vector<9x9xf32>
    %249 = arith.cmpf olt, %247, %248 : vector<9x9xf32>
    %cst_109 = arith.constant 5.000000e-01 : f32
    %250 = vector.broadcast %cst_109 : f32 to vector<9x9xf32>
    %251 = arith.mulf %250, %246 : vector<9x9xf32>
    %252 = arith.mulf %251, %246 : vector<9x9xf32>
    %cst_110 = arith.constant 5.000000e-01 : f32
    %253 = vector.broadcast %cst_110 : f32 to vector<9x9xf32>
    %254 = arith.subf %247, %253 : vector<9x9xf32>
    %255 = arith.select %249, %252, %254 : vector<9x9xi1>, vector<9x9xf32>
    %c0_111 = arith.constant 0 : index
    %c0_112 = arith.constant 0 : index
    %c0_113 = arith.constant 0 : index
    %256 = vector.load %arg3[%c0_111, %c0_112, %c0_113] : memref<2x9x9xf32, #tpu.memory_space<vmem>>, vector<1x9x9xf32>
    %257 = vector.shape_cast %256 : vector<1x9x9xf32> to vector<9x9xf32>
    %258 = arith.mulf %255, %257 : vector<9x9xf32>
    %259 = vector.shape_cast %258 : vector<9x9xf32> to vector<1x9x9xf32>
    %cst_114 = arith.constant dense<0.000000e+00> : vector<1xf32>
    %260 = vector.multi_reduction <add>, %259, %cst_114 [1, 2] : vector<1x9x9xf32> to vector<1xf32>
    %261 = vector.shape_cast %260 : vector<1xf32> to vector<1x1x1xf32>
    %262 = vector.extract %261[0, 0, 0] : f32 from vector<1x1x1xf32>
    %cst_115 = arith.constant 0.000000e+00 : f32
    %263 = arith.addf %cst_115, %262 : f32
    %264 = vector.extract_strided_slice %220 {offsets = [0, 9], sizes = [3, 9], strides = [1, 1]} : vector<3x18xf32> to vector<3x9xf32>
    %265 = vector.shape_cast %264 : vector<3x9xf32> to vector<3x9x1xf32>
    %266 = vector.shape_cast %264 : vector<3x9xf32> to vector<3x1x9xf32>
    %267 = vector.broadcast %265 : vector<3x9x1xf32> to vector<3x9x9xf32>
    %268 = vector.broadcast %266 : vector<3x1x9xf32> to vector<3x9x9xf32>
    %269 = arith.subf %267, %268 : vector<3x9x9xf32>
    %270 = arith.mulf %269, %269 : vector<3x9x9xf32>
    %cst_116 = arith.constant dense<0.000000e+00> : vector<9x9xf32>
    %271 = vector.multi_reduction <add>, %270, %cst_116 [0] : vector<3x9x9xf32> to vector<9x9xf32>
    %c1 = arith.constant 1 : index
    %c0_117 = arith.constant 0 : index
    %c0_118 = arith.constant 0 : index
    %272 = vector.load %arg2[%c1, %c0_117, %c0_118] : memref<2x9x9xf32, #tpu.memory_space<vmem>>, vector<1x9x9xf32>
    %273 = vector.shape_cast %272 : vector<1x9x9xf32> to vector<9x9xf32>
    %274 = arith.subf %271, %273 : vector<9x9xf32>
    %275 = math.absf %274 : vector<9x9xf32>
    %cst_119 = arith.constant 1.000000e+00 : f32
    %276 = vector.broadcast %cst_119 : f32 to vector<9x9xf32>
    %277 = arith.cmpf olt, %275, %276 : vector<9x9xf32>
    %cst_120 = arith.constant 5.000000e-01 : f32
    %278 = vector.broadcast %cst_120 : f32 to vector<9x9xf32>
    %279 = arith.mulf %278, %274 : vector<9x9xf32>
    %280 = arith.mulf %279, %274 : vector<9x9xf32>
    %cst_121 = arith.constant 5.000000e-01 : f32
    %281 = vector.broadcast %cst_121 : f32 to vector<9x9xf32>
    %282 = arith.subf %275, %281 : vector<9x9xf32>
    %283 = arith.select %277, %280, %282 : vector<9x9xi1>, vector<9x9xf32>
    %c1_122 = arith.constant 1 : index
    %c0_123 = arith.constant 0 : index
    %c0_124 = arith.constant 0 : index
    %284 = vector.load %arg3[%c1_122, %c0_123, %c0_124] : memref<2x9x9xf32, #tpu.memory_space<vmem>>, vector<1x9x9xf32>
    %285 = vector.shape_cast %284 : vector<1x9x9xf32> to vector<9x9xf32>
    %286 = arith.mulf %283, %285 : vector<9x9xf32>
    %287 = vector.shape_cast %286 : vector<9x9xf32> to vector<1x9x9xf32>
    %cst_125 = arith.constant dense<0.000000e+00> : vector<1xf32>
    %288 = vector.multi_reduction <add>, %287, %cst_125 [1, 2] : vector<1x9x9xf32> to vector<1xf32>
    %289 = vector.shape_cast %288 : vector<1xf32> to vector<1x1x1xf32>
    %290 = vector.extract %289[0, 0, 0] : f32 from vector<1x1x1xf32>
    %291 = arith.addf %263, %290 : f32
    %292 = tpu.iota {dimensions = array<i32: 1>} : vector<1x128xi32>
    %c0_i32_126 = arith.constant 0 : i32
    %293 = vector.broadcast %c0_i32_126 : i32 to vector<1x128xi32>
    %294 = arith.cmpi eq, %292, %293 : vector<1x128xi32>
    %295 = arith.extui %294 : vector<1x128xi1> to vector<1x128xi32>
    %296 = arith.sitofp %295 : vector<1x128xi32> to vector<1x128xf32>
    %297 = vector.broadcast %291 : f32 to vector<1x128xf32>
    %298 = arith.mulf %296, %297 : vector<1x128xf32>
    %c1_i32 = arith.constant 1 : i32
    %299 = vector.broadcast %c1_i32 : i32 to vector<1x128xi32>
    %300 = arith.cmpi eq, %292, %299 : vector<1x128xi32>
    %301 = arith.extui %300 : vector<1x128xi1> to vector<1x128xi32>
    %302 = arith.sitofp %301 : vector<1x128xi32> to vector<1x128xf32>
    %303 = vector.broadcast %219 : f32 to vector<1x128xf32>
    %304 = arith.mulf %302, %303 : vector<1x128xf32>
    %305 = arith.addf %298, %304 : vector<1x128xf32>
    %c2_i32 = arith.constant 2 : i32
    %306 = vector.broadcast %c2_i32 : i32 to vector<1x128xi32>
    %307 = arith.cmpi eq, %292, %306 : vector<1x128xi32>
    %308 = arith.extui %307 : vector<1x128xi1> to vector<1x128xi32>
    %309 = arith.sitofp %308 : vector<1x128xi32> to vector<1x128xf32>
    %310 = vector.broadcast %235 : f32 to vector<1x128xf32>
    %311 = arith.mulf %309, %310 : vector<1x128xf32>
    %312 = arith.addf %305, %311 : vector<1x128xf32>
    %c3_i32 = arith.constant 3 : i32
    %313 = vector.broadcast %c3_i32 : i32 to vector<1x128xi32>
    %314 = arith.cmpi eq, %292, %313 : vector<1x128xi32>
    %315 = arith.extui %314 : vector<1x128xi1> to vector<1x128xi32>
    %316 = arith.sitofp %315 : vector<1x128xi32> to vector<1x128xf32>
    %317 = vector.broadcast %181 : f32 to vector<1x128xf32>
    %318 = arith.mulf %316, %317 : vector<1x128xf32>
    %319 = arith.addf %312, %318 : vector<1x128xf32>
    %c0_127 = arith.constant 0 : index
    %c0_128 = arith.constant 0 : index
    %320 = vector.load %arg35[%c0_127, %c0_128] : memref<1x128xf32, #tpu.memory_space<vmem>>, vector<1x128xf32>
    %321 = arith.addf %320, %319 : vector<1x128xf32>
    %c0_129 = arith.constant 0 : index
    %c0_130 = arith.constant 0 : index
    %322 = vector.load %arg35[%c0_129, %c0_130] : memref<1x128xf32, #tpu.memory_space<vmem>>, vector<1x128xf32>
    tpu.vector_store %arg35[%c0_129, %c0_130], %321 {strides = array<i32>} : memref<1x128xf32, #tpu.memory_space<vmem>>, vector<1x128xf32>,
    return
  }
  func.func @transform_0(%arg0: i32) -> (i32, i32) {
    %c0_i32 = arith.constant 0 : i32
    %c0_i32_0 = arith.constant 0 : i32
    %c0_i32_1 = arith.constant 0 : i32
    return %c0_i32, %c0_i32_0 : i32, i32
  }
  func.func @transform_1(%arg0: i32) -> (i32, i32, i32) {
    %c0_i32 = arith.constant 0 : i32
    %c0_i32_0 = arith.constant 0 : i32
    %c0_i32_1 = arith.constant 0 : i32
    %c0_i32_2 = arith.constant 0 : i32
    return %c0_i32, %c0_i32_0, %c0_i32_1 : i32, i32, i32
  }
  func.func @transform_2(%arg0: i32) -> (i32, i32, i32) {
    %c0_i32 = arith.constant 0 : i32
    %c0_i32_0 = arith.constant 0 : i32
    %c0_i32_1 = arith.constant 0 : i32
    %c0_i32_2 = arith.constant 0 : i32
    return %c0_i32, %c0_i32_0, %c0_i32_1 : i32, i32, i32
  }
  func.func @transform_3(%arg0: i32) -> (i32, i32) {
    %c0_i32 = arith.constant 0 : i32
    %c0_i32_0 = arith.constant 0 : i32
    %c0_i32_1 = arith.constant 0 : i32
    return %c0_i32, %c0_i32_0 : i32, i32
  }
  func.func @transform_4(%arg0: i32) -> (i32, i32) {
    %c0_i32 = arith.constant 0 : i32
    %c0_i32_0 = arith.constant 0 : i32
    %c0_i32_1 = arith.constant 0 : i32
    return %c0_i32, %c0_i32_0 : i32, i32
  }
  func.func @transform_5(%arg0: i32) -> (i32, i32) {
    %c0_i32 = arith.constant 0 : i32
    %c0_i32_0 = arith.constant 0 : i32
    %c0_i32_1 = arith.constant 0 : i32
    return %c0_i32, %c0_i32_0 : i32, i32
  }
  func.func @transform_6(%arg0: i32) -> (i32, i32) {
    %c0_i32 = arith.constant 0 : i32
    %c0_i32_0 = arith.constant 0 : i32
    %c0_i32_1 = arith.constant 0 : i32
    return %c0_i32, %c0_i32_0 : i32, i32
  }
  func.func @transform_7(%arg0: i32) -> (i32, i32) {
    %c0_i32 = arith.constant 0 : i32
    %c0_i32_0 = arith.constant 0 : i32
    %c0_i32_1 = arith.constant 0 : i32
    return %c0_i32, %c0_i32_0 : i32, i32
  }
  func.func @transform_8(%arg0: i32) -> (i32, i32) {
    %c0_i32 = arith.constant 0 : i32
    %c0_i32_0 = arith.constant 0 : i32
    %c0_i32_1 = arith.constant 0 : i32
    return %c0_i32, %c0_i32_0 : i32, i32
  }
  func.func @transform_9(%arg0: i32) -> (i32, i32) {
    %c0_i32 = arith.constant 0 : i32
    %c0_i32_0 = arith.constant 0 : i32
    %c0_i32_1 = arith.constant 0 : i32
    return %c0_i32, %c0_i32_0 : i32, i32
  }
  func.func @transform_10(%arg0: i32) -> (i32, i32) {
    %c0_i32 = arith.constant 0 : i32
    %c0_i32_0 = arith.constant 0 : i32
    %c0_i32_1 = arith.constant 0 : i32
    return %c0_i32, %c0_i32_0 : i32, i32
  }
  func.func @transform_11(%arg0: i32) -> (i32, i32) {
    %c0_i32 = arith.constant 0 : i32
    %c0_i32_0 = arith.constant 0 : i32
    %c0_i32_1 = arith.constant 0 : i32
    return %c0_i32, %c0_i32_0 : i32, i32
  }
  func.func @transform_12(%arg0: i32) -> (i32, i32) {
    %c0_i32 = arith.constant 0 : i32
    %c0_i32_0 = arith.constant 0 : i32
    %c0_i32_1 = arith.constant 0 : i32
    return %c0_i32, %c0_i32_0 : i32, i32
  }
  func.func @transform_13(%arg0: i32) -> (i32, i32) {
    %c0_i32 = arith.constant 0 : i32
    %c0_i32_0 = arith.constant 0 : i32
    %c0_i32_1 = arith.constant 0 : i32
    return %c0_i32, %c0_i32_0 : i32, i32
  }
  func.func @transform_14(%arg0: i32) -> (i32, i32) {
    %c0_i32 = arith.constant 0 : i32
    %c0_i32_0 = arith.constant 0 : i32
    %c0_i32_1 = arith.constant 0 : i32
    return %c0_i32, %c0_i32_0 : i32, i32
  }
  func.func @transform_15(%arg0: i32) -> (i32, i32) {
    %c0_i32 = arith.constant 0 : i32
    %c0_i32_0 = arith.constant 0 : i32
    %c0_i32_1 = arith.constant 0 : i32
    return %c0_i32, %c0_i32_0 : i32, i32
  }
  func.func @transform_16(%arg0: i32) -> (i32, i32) {
    %c0_i32 = arith.constant 0 : i32
    %c0_i32_0 = arith.constant 0 : i32
    %c0_i32_1 = arith.constant 0 : i32
    return %c0_i32, %c0_i32_0 : i32, i32
  }
  func.func @transform_17(%arg0: i32) -> (i32, i32) {
    %c0_i32 = arith.constant 0 : i32
    %c0_i32_0 = arith.constant 0 : i32
    %c0_i32_1 = arith.constant 0 : i32
    return %c0_i32, %c0_i32_0 : i32, i32
  }
  func.func @transform_18(%arg0: i32) -> (i32, i32) {
    %c0_i32 = arith.constant 0 : i32
    %c0_i32_0 = arith.constant 0 : i32
    %c0_i32_1 = arith.constant 0 : i32
    return %c0_i32, %c0_i32_0 : i32, i32
  }
  func.func @transform_19(%arg0: i32) -> (i32, i32) {
    %c0_i32 = arith.constant 0 : i32
    %c0_i32_0 = arith.constant 0 : i32
    %c0_i32_1 = arith.constant 0 : i32
    return %c0_i32, %c0_i32_0 : i32, i32
  }
  func.func @transform_20(%arg0: i32) -> (i32, i32) {
    %c0_i32 = arith.constant 0 : i32
    %c0_i32_0 = arith.constant 0 : i32
    %c0_i32_1 = arith.constant 0 : i32
    return %c0_i32, %c0_i32_0 : i32, i32
  }
  func.func @transform_21(%arg0: i32) -> (i32, i32) {
    %c0_i32 = arith.constant 0 : i32
    %c0_i32_0 = arith.constant 0 : i32
    %c0_i32_1 = arith.constant 0 : i32
    return %c0_i32, %c0_i32_0 : i32, i32
  }
  func.func @transform_22(%arg0: i32) -> (i32, i32) {
    %c0_i32 = arith.constant 0 : i32
    %c0_i32_0 = arith.constant 0 : i32
    %c0_i32_1 = arith.constant 0 : i32
    return %c0_i32, %c0_i32_0 : i32, i32
  }
  func.func @transform_23(%arg0: i32) -> (i32, i32) {
    %c0_i32 = arith.constant 0 : i32
    %c0_i32_0 = arith.constant 0 : i32
    %c0_i32_1 = arith.constant 0 : i32
    return %c0_i32, %c0_i32_0 : i32, i32
  }
  func.func @transform_24(%arg0: i32) -> (i32, i32) {
    %c0_i32 = arith.constant 0 : i32
    %c0_i32_0 = arith.constant 0 : i32
    %c0_i32_1 = arith.constant 0 : i32
    return %c0_i32, %c0_i32_0 : i32, i32
  }
  func.func @transform_25(%arg0: i32) -> (i32, i32) {
    %c0_i32 = arith.constant 0 : i32
    %c0_i32_0 = arith.constant 0 : i32
    %c0_i32_1 = arith.constant 0 : i32
    return %c0_i32, %c0_i32_0 : i32, i32
  }
  func.func @transform_26(%arg0: i32) -> (i32, i32) {
    %c0_i32 = arith.constant 0 : i32
    %c0_i32_0 = arith.constant 0 : i32
    %c0_i32_1 = arith.constant 0 : i32
    return %c0_i32, %c0_i32_0 : i32, i32
  }
  func.func @transform_27(%arg0: i32) -> (i32, i32) {
    %c0_i32 = arith.constant 0 : i32
    %c0_i32_0 = arith.constant 0 : i32
    %c0_i32_1 = arith.constant 0 : i32
    return %c0_i32, %c0_i32_0 : i32, i32
  }
  func.func @transform_28(%arg0: i32) -> (i32, i32) {
    %c0_i32 = arith.constant 0 : i32
    %c0_i32_0 = arith.constant 0 : i32
    %c0_i32_1 = arith.constant 0 : i32
    return %c0_i32, %c0_i32_0 : i32, i32
  }
  func.func @transform_29(%arg0: i32) -> (i32, i32) {
    %c0_i32 = arith.constant 0 : i32
    %c0_i32_0 = arith.constant 0 : i32
    %c0_i32_1 = arith.constant 0 : i32
    return %c0_i32, %c0_i32_0 : i32, i32
  }
  func.func @transform_30(%arg0: i32) -> (i32, i32) {
    %c0_i32 = arith.constant 0 : i32
    %c0_i32_0 = arith.constant 0 : i32
    %c0_i32_1 = arith.constant 0 : i32
    return %c0_i32, %c0_i32_0 : i32, i32
  }
  func.func @transform_31(%arg0: i32) -> (i32, i32) {
    %c0_i32 = arith.constant 0 : i32
    %c0_i32_0 = arith.constant 0 : i32
    %c0_i32_1 = arith.constant 0 : i32
    return %c0_i32, %c0_i32_0 : i32, i32
  }
  func.func @transform_32(%arg0: i32) -> (i32, i32) {
    %c0_i32 = arith.constant 0 : i32
    %c0_i32_0 = arith.constant 0 : i32
    %c0_i32_1 = arith.constant 0 : i32
    return %c0_i32, %c0_i32_0 : i32, i32
  }
  func.func @transform_33(%arg0: i32) -> (i32, i32) {
    %c0_i32 = arith.constant 0 : i32
    %c0_i32_0 = arith.constant 0 : i32
    %c0_i32_1 = arith.constant 0 : i32
    return %c0_i32, %c0_i32_0 : i32, i32
  }
  func.func @transform_34(%arg0: i32) -> (i32, i32) {
    %c0_i32 = arith.constant 0 : i32
    %c0_i32_0 = arith.constant 0 : i32
    %c0_i32_1 = arith.constant 0 : i32
    return %c0_i32, %c0_i32_0 : i32, i32
  }
}

</mosaic_0001>

<llo_original>
// kernel: tile.18
$region0: #{tile.18}
  #allocation0 [shape = 's32[1]{0}', space=sflag, size = 0x4, scoped, tag = 'scoped memory for tile.18']
  %s0 = inlined_call_operand.vmem [shape: f32[16], index: 0, kind: input, shape index: {}]
  %s1 = inlined_call_operand.vmem [shape: f32[2,16], index: 1, kind: output, shape index: {}]
  // Predicated region
  $region2: #{tile.18} parent=0 // pred_check
    _
  $region3: #{tile.18} parent=0 // pred_check_branch
    %3 = sbr.rel (0) target = $region5
  $region4: #{tile.18} parent=0 // pred_region
    _
  $region5: #{tile.18} parent=0 // pred_fallthru
    _
  %v4 = vld [vmem:[%s0] ss:$0 sm:$0xff]
  %5 = vst [vmem:[%s1] sm:$0x3] %v4

// kernel: tile.0
$region0: #{tile.0}
  %s0 = inlined_call_operand.vmem [shape: f32[2,16], index: 0, kind: input, shape index: {}]
  %s1 = inlined_call_operand.vmem [shape: f32[32,1], index: 1, kind: output, shape index: {}]
  $region1: #{tile.0} parent=0
    #allocation0 [shape = 'u8[4096]{0}', space=vmem, size = 0x1000, scoped, tag = 'scoped mem for input reshape']
    %s3 = sshll.u32 1, 2
    %s4 = ssub.s32 %s3, 1
    %v5 = vld [vmem:[%s0] sm:%s4]
    %6 = vst [vmem:[#allocation0] sm:%s4] %v5
    %v7 = vld [vmem:[#allocation0] sm:$0x3]
    %vm8 = vcmask 7168
    %9 = vst.msk [vmem:[%s1] ss:$16 sm:$0x3] %vm8, %v7
    %v10 = vld [vmem:[#allocation0] sm:$0x3]
    %11 = vrot.lane.b32.xlu0 %v10, 127
    %v12 = vpop.permute.xlu0 %11
    %vm13 = vcmask 7168
    %s14 = scalar_lea.vmem %s1, 1
    %15 = vst.msk [vmem:[%s14] ss:$16 sm:$0x3] %vm13, %v12
    %v16 = vld [vmem:[#allocation0] sm:$0x3]
    %17 = vrot.lane.b32.xlu0 %v16, 126
    %v18 = vpop.permute.xlu0 %17
    %vm19 = vcmask 7168
    %s20 = scalar_lea.vmem %s1, 2
    %21 = vst.msk [vmem:[%s20] ss:$16 sm:$0x3] %vm19, %v18
    %v22 = vld [vmem:[#allocation0] sm:$0x3]
    %23 = vrot.lane.b32.xlu0 %v22, 125
    %v24 = vpop.permute.xlu0 %23
    %vm25 = vcmask 7168
    %s26 = scalar_lea.vmem %s1, 3
    %27 = vst.msk [vmem:[%s26] ss:$16 sm:$0x3] %vm25, %v24
    %v28 = vld [vmem:[#allocation0] sm:$0x3]
    %29 = vrot.lane.b32.xlu0 %v28, 124
    %v30 = vpop.permute.xlu0 %29
    %vm31 = vcmask 7168
    %s32 = scalar_lea.vmem %s1, 4
    %33 = vst.msk [vmem:[%s32] ss:$16 sm:$0x3] %vm31, %v30
    %v34 = vld [vmem:[#allocation0] sm:$0x3]
    %35 = vrot.lane.b32.xlu0 %v34, 123
    %v36 = vpop.permute.xlu0 %35
    %vm37 = vcmask 7168
    %s38 = scalar_lea.vmem %s1, 5
    %39 = vst.msk [vmem:[%s38] ss:$16 sm:$0x3] %vm37, %v36
    %v40 = vld [vmem:[#allocation0] sm:$0x3]
    %41 = vrot.lane.b32.xlu0 %v40, 122
    %v42 = vpop.permute.xlu0 %41
    %vm43 = vcmask 7168
    %s44 = scalar_lea.vmem %s1, 6
    %45 = vst.msk [vmem:[%s44] ss:$16 sm:$0x3] %vm43, %v42
    %v46 = vld [vmem:[#allocation0] sm:$0x3]
    %47 = vrot.lane.b32.xlu0 %v46, 121
    %v48 = vpop.permute.xlu0 %47
    %vm49 = vcmask 7168
    %s50 = scalar_lea.vmem %s1, 7
    %51 = vst.msk [vmem:[%s50] ss:$16 sm:$0x3] %vm49, %v48
    %v52 = vld [vmem:[#allocation0] sm:$0x3]
    %53 = vrot.lane.b32.xlu0 %v52, 120
    %v54 = vpop.permute.xlu0 %53
    %vm55 = vcmask 7168
    %s56 = scalar_lea.vmem %s1, 8
    %57 = vst.msk [vmem:[%s56] ss:$16 sm:$0x3] %vm55, %v54
    %v58 = vld [vmem:[#allocation0] sm:$0x3]
    %59 = vrot.lane.b32.xlu0 %v58, 119
    %v60 = vpop.permute.xlu0 %59
    %vm61 = vcmask 7168
    %s62 = scalar_lea.vmem %s1, 9
    %63 = vst.msk [vmem:[%s62] ss:$16 sm:$0x3] %vm61, %v60
    %v64 = vld [vmem:[#allocation0] sm:$0x3]
    %65 = vrot.lane.b32.xlu0 %v64, 118
    %v66 = vpop.permute.xlu0 %65
    %vm67 = vcmask 7168
    %s68 = scalar_lea.vmem %s1, 10
    %69 = vst.msk [vmem:[%s68] ss:$16 sm:$0x3] %vm67, %v66
    %v70 = vld [vmem:[#allocation0] sm:$0x3]
    %71 = vrot.lane.b32.xlu0 %v70, 117
    %v72 = vpop.permute.xlu0 %71
    %vm73 = vcmask 7168
    %s74 = scalar_lea.vmem %s1, 11
    %75 = vst.msk [vmem:[%s74] ss:$16 sm:$0x3] %vm73, %v72
    %v76 = vld [vmem:[#allocation0] sm:$0x3]
    %77 = vrot.lane.b32.xlu0 %v76, 116
    %v78 = vpop.permute.xlu0 %77
    %vm79 = vcmask 7168
    %s80 = scalar_lea.vmem %s1, 12
    %81 = vst.msk [vmem:[%s80] ss:$16 sm:$0x3] %vm79, %v78
    %v82 = vld [vmem:[#allocation0] sm:$0x3]
    %83 = vrot.lane.b32.xlu0 %v82, 115
    %v84 = vpop.permute.xlu0 %83
    %vm85 = vcmask 7168
    %s86 = scalar_lea.vmem %s1, 13
    %87 = vst.msk [vmem:[%s86] ss:$16 sm:$0x3] %vm85, %v84
    %v88 = vld [vmem:[#allocation0] sm:$0x3]
    %89 = vrot.lane.b32.xlu0 %v88, 114
    %v90 = vpop.permute.xlu0 %89
    %vm91 = vcmask 7168
    %s92 = scalar_lea.vmem %s1, 14
    %93 = vst.msk [vmem:[%s92] ss:$16 sm:$0x3] %vm91, %v90
    %v94 = vld [vmem:[#allocation0] sm:$0x3]
    %95 = vrot.lane.b32.xlu0 %v94, 113
    %v96 = vpop.permute.xlu0 %95
    %vm97 = vcmask 7168
    %s98 = scalar_lea.vmem %s1, 15
    %99 = vst.msk [vmem:[%s98] ss:$16 sm:$0x3] %vm97, %v96

// kernel: eq.1
$region0: #{eq.1}
  %s0 = inlined_call_operand.vmem [shape: s32[2,9], index: 0, kind: input, shape index: {}]
  %s1 = inlined_call_operand.vmem [shape: s32[18], index: 1, kind: output, shape index: {}]
  $region1: #{eq.1} parent=0
    #allocation0 [shape = 'u8[4096]{0}', space=vmem, size = 0x1000, scoped, tag = 'scoped mem for output reshape']
    #allocation1 [shape = 'u8[4096]{0}', space=vmem, size = 0x1000, scoped, tag = 'scoped mem for input reshape']
    %s3 = sshll.u32 1, 2
    %s4 = ssub.s32 %s3, 1
    %v5 = vld [vmem:[%s0] sm:%s4]
    %6 = vst [vmem:[#allocation1] sm:%s4] %v5
    %v7 = vld [vmem:[#allocation1] sm:$0x1]
    %vm8 = vcmask 72704
    %9 = vst.msk [vmem:[#allocation0] sm:$0x1] %vm8, %v7
    %s10 = scalar_lea.vmem [#allocation1], 1
    %v11 = vld [vmem:[%s10] sm:$0x1]
    %12 = vrot.lane.b32.xlu0 %v11, 9
    %v13 = vpop.permute.xlu0 %12
    %vm14 = vcmask 146504
    %15 = vst.msk [vmem:[#allocation0] sm:$0x1] %vm14, %v13
    %s17 = sshll.u32 1, 1
    %s18 = ssub.s32 %s17, 1
    %v20 = vld [vmem:[#allocation0] sm:%s18]
    %s21 = sshll.u32 1, 1
    %s22 = ssub.s32 %s21, 1
    %23 = vst [vmem:[%s1] sm:%s22] %v20

// kernel: tile.14
$region0: #{tile.14}
  %s0 = inlined_call_operand.vmem [shape: s32[2,9], index: 0, kind: input, shape index: {}]
  %s1 = inlined_call_operand.vmem [shape: s32[1,18], index: 1, kind: output, shape index: {}]
  $region1: #{tile.14} parent=0
    #allocation0 [shape = 'u8[4096]{0}', space=vmem, size = 0x1000, scoped, tag = 'scoped mem for output reshape']
    #allocation1 [shape = 'u8[4096]{0}', space=vmem, size = 0x1000, scoped, tag = 'scoped mem for input reshape']
    %s3 = sshll.u32 1, 2
    %s4 = ssub.s32 %s3, 1
    %v5 = vld [vmem:[%s0] sm:%s4]
    %6 = vst [vmem:[#allocation1] sm:%s4] %v5
    %v7 = vld [vmem:[#allocation1] sm:$0x1]
    %vm8 = vcmask 72704
    %9 = vst.msk [vmem:[#allocation0] sm:$0x1] %vm8, %v7
    %s10 = scalar_lea.vmem [#allocation1], 1
    %v11 = vld [vmem:[%s10] sm:$0x1]
    %12 = vrot.lane.b32.xlu0 %v11, 9
    %v13 = vpop.permute.xlu0 %12
    %vm14 = vcmask 146504
    %15 = vst.msk [vmem:[#allocation0] sm:$0x1] %vm14, %v13
    %s17 = sshll.u32 1, 1
    %s18 = ssub.s32 %s17, 1
    %v20 = vld [vmem:[#allocation0] sm:%s18]
    %s21 = sshll.u32 1, 1
    %s22 = ssub.s32 %s21, 1
    %23 = vst [vmem:[%s1] sm:%s22] %v20

// kernel: forward.1
$region0: #{forward.1}
  #allocation0 [shape = 'u32[]', space=smem, size = 0x4, offset = 0x4, fixed_abs, tag = 'smem constant byte address 0x4 - core index']
  #allocation1 [shape = 'u32[144,128]{1,0:T(1,128)}', space=vmem, size = 0x12000, scoped, tag = 'internal scratch']
  #allocation2 [shape = 'f32[12,18]{1,0:T(8,128)}', space=vmem, size = 0x2000, scoped, tag = 'scratch operand']
  %s0 = inlined_call_operand.smem [shape: u32[35], index: -1, kind: input, shape index: {}]
  %s1 = sld [smem:[%s0]]
  %s2 = scalar_lea.smem %s0, 1
  %s3 = sld [smem:[%s2]]
  %s4 = scalar_lea.smem %s0, 2
  %s5 = sld [smem:[%s4]]
  %s6 = scalar_lea.smem %s0, 3
  %s7 = sld [smem:[%s6]]
  %s8 = scalar_lea.smem %s0, 4
  %s9 = sld [smem:[%s8]]
  %s10 = scalar_lea.smem %s0, 5
  %s11 = sld [smem:[%s10]]
  %s12 = scalar_lea.smem %s0, 6
  %s13 = sld [smem:[%s12]]
  %s14 = scalar_lea.smem %s0, 7
  %s15 = sld [smem:[%s14]]
  %s16 = scalar_lea.smem %s0, 8
  %s17 = sld [smem:[%s16]]
  %s18 = scalar_lea.smem %s0, 9
  %s19 = sld [smem:[%s18]]
  %s20 = scalar_lea.smem %s0, 10
  %s21 = sld [smem:[%s20]]
  %s22 = scalar_lea.smem %s0, 11
  %s23 = sld [smem:[%s22]]
  %s24 = scalar_lea.smem %s0, 12
  %s25 = sld [smem:[%s24]]
  %s26 = scalar_lea.smem %s0, 13
  %s27 = sld [smem:[%s26]]
  %s28 = scalar_lea.smem %s0, 14
  %s29 = sld [smem:[%s28]]
  %s30 = scalar_lea.smem %s0, 15
  %s31 = sld [smem:[%s30]]
  %s32 = scalar_lea.smem %s0, 16
  %s33 = sld [smem:[%s32]]
  %s34 = scalar_lea.smem %s0, 17
  %s35 = sld [smem:[%s34]]
  %s36 = scalar_lea.smem %s0, 18
  %s37 = sld [smem:[%s36]]
  %s38 = scalar_lea.smem %s0, 19
  %s39 = sld [smem:[%s38]]
  %s40 = scalar_lea.smem %s0, 20
  %s41 = sld [smem:[%s40]]
  %s42 = scalar_lea.smem %s0, 21
  %s43 = sld [smem:[%s42]]
  %s44 = scalar_lea.smem %s0, 22
  %s45 = sld [smem:[%s44]]
  %s46 = scalar_lea.smem %s0, 23
  %s47 = sld [smem:[%s46]]
  %s48 = scalar_lea.smem %s0, 24
  %s49 = sld [smem:[%s48]]
  %s50 = scalar_lea.smem %s0, 25
  %s51 = sld [smem:[%s50]]
  %s52 = scalar_lea.smem %s0, 26
  %s53 = sld [smem:[%s52]]
  %s54 = scalar_lea.smem %s0, 27
  %s55 = sld [smem:[%s54]]
  %s56 = scalar_lea.smem %s0, 28
  %s57 = sld [smem:[%s56]]
  %s58 = scalar_lea.smem %s0, 29
  %s59 = sld [smem:[%s58]]
  %s60 = scalar_lea.smem %s0, 30
  %s61 = sld [smem:[%s60]]
  %s62 = scalar_lea.smem %s0, 31
  %s63 = sld [smem:[%s62]]
  %s64 = scalar_lea.smem %s0, 32
  %s65 = sld [smem:[%s64]]
  %s66 = scalar_lea.smem %s0, 33
  %s67 = sld [smem:[%s66]]
  %s68 = scalar_lea.smem %s0, 34
  %s69 = sld [smem:[%s68]]
  %s70 = sld [smem:[#allocation0]]
  $region173: #{forward.1} parent=0
    _
  %s72 = ssub.s32 1, %s70
  %s73 = scalar_select 0, %s72, %s70
  loop: start=0, step=1, limit=11
  $region2: #{forward.1} parent=0 // loop_pre_header
    _
  $region3: #{forward.1} parent=0 // loop_header
    %s75 = sphi 0, %s79
    %p76 = scmp.ge.s32.totalorder %s75, 11
    %s83 = sphi 0, %s83
    %s85 = sphi 0, %s83
    %s86 = sphi 0, %s85
    %s100 = sphi 0, %s86
    %s104 = sphi 0, %s104
    %s106 = sphi 0, %s104
    %s107 = sphi 0, %s106
    %s121 = sphi 0, %s107
    %s125 = sphi 0, %s125
    %s127 = sphi 0, %s125
    %s128 = sphi 0, %s127
    %s142 = sphi 0, %s128
    %s146 = sphi 0, %s146
    %s148 = sphi 0, %s146
    %s149 = sphi 0, %s148
    %s163 = sphi 0, %s149
    %s167 = sphi 0, %s167
    %s169 = sphi 0, %s167
    %s170 = sphi 0, %s169
    %s184 = sphi 0, %s170
    %s188 = sphi 0, %s188
    %s190 = sphi 0, %s188
    %s191 = sphi 0, %s190
    %s205 = sphi 0, %s191
    %s209 = sphi 0, %s209
    %s211 = sphi 0, %s209
    %s212 = sphi 0, %s211
    %s226 = sphi 0, %s212
    %s230 = sphi 0, %s230
    %s232 = sphi 0, %s230
    %s233 = sphi 0, %s232
    %s247 = sphi 0, %s233
    %s251 = sphi 0, %s251
    %s253 = sphi 0, %s251
    %s254 = sphi 0, %s253
    %s268 = sphi 0, %s254
    %s272 = sphi 0, %s272
    %s274 = sphi 0, %s272
    %s275 = sphi 0, %s274
    %s289 = sphi 0, %s275
    %s293 = sphi 0, %s293
    %s295 = sphi 0, %s293
    %s296 = sphi 0, %s295
    %s310 = sphi 0, %s296
    %s314 = sphi 0, %s314
    %s316 = sphi 0, %s314
    %s317 = sphi 0, %s316
    %s331 = sphi 0, %s317
    %s335 = sphi 0, %s335
    %s337 = sphi 0, %s335
    %s338 = sphi 0, %s337
    %s352 = sphi 0, %s338
    %s356 = sphi 0, %s356
    %s358 = sphi 0, %s356
    %s359 = sphi 0, %s358
    %s373 = sphi 0, %s359
    %s377 = sphi 0, %s377
    %s379 = sphi 0, %s377
    %s380 = sphi 0, %s379
    %s394 = sphi 0, %s380
    %s398 = sphi 0, %s398
    %s400 = sphi 0, %s398
    %s401 = sphi 0, %s400
    %s415 = sphi 0, %s401
    %s419 = sphi 0, %s419
    %s421 = sphi 0, %s419
    %s422 = sphi 0, %s421
    %s436 = sphi 0, %s422
    %s440 = sphi 0, %s440
    %s442 = sphi 0, %s440
    %s443 = sphi 0, %s442
    %s457 = sphi 0, %s443
    %s461 = sphi 0, %s461
    %s463 = sphi 0, %s461
    %s464 = sphi 0, %s463
    %s478 = sphi 0, %s464
    %s482 = sphi 0, %s482
    %s484 = sphi 0, %s482
    %s485 = sphi 0, %s484
    %s499 = sphi 0, %s485
    %s503 = sphi 0, %s503
    %s505 = sphi 0, %s503
    %s506 = sphi 0, %s505
    %s520 = sphi 0, %s506
    %s524 = sphi 0, %s524
    %s526 = sphi 0, %s524
    %s527 = sphi 0, %s526
    %s541 = sphi 0, %s527
    %s545 = sphi 0, %s545
    %s547 = sphi 0, %s545
    %s548 = sphi 0, %s547
    %s562 = sphi 0, %s548
    %s566 = sphi 0, %s566
    %s568 = sphi 0, %s566
    %s569 = sphi 0, %s568
    %s583 = sphi 0, %s569
    %s587 = sphi 0, %s587
    %s589 = sphi 0, %s587
    %s590 = sphi 0, %s589
    %s604 = sphi 0, %s590
    %s608 = sphi 0, %s608
    %s610 = sphi 0, %s608
    %s611 = sphi 0, %s610
    %s625 = sphi 0, %s611
    %s629 = sphi 0, %s629
    %s631 = sphi 0, %s629
    %s632 = sphi 0, %s631
    %s646 = sphi 0, %s632
    %s650 = sphi 0, %s650
    %s652 = sphi 0, %s650
    %s653 = sphi 0, %s652
    %s667 = sphi 0, %s653
    %s671 = sphi 0, %s671
    %s673 = sphi 0, %s671
    %s674 = sphi 0, %s673
    %s688 = sphi 0, %s674
    %s692 = sphi 0, %s692
    %s694 = sphi 0, %s692
    %s695 = sphi 0, %s694
    %s709 = sphi 0, %s695
    %s713 = sphi 0, %s713
    %s715 = sphi 0, %s713
    %s716 = sphi 0, %s715
    %s730 = sphi 0, %s716
    %s734 = sphi 0, %s734
    %s736 = sphi 0, %s734
    %s737 = sphi 0, %s736
    %s751 = sphi 0, %s737
    %s755 = sphi 0, %s755
    %s757 = sphi 0, %s755
    %s758 = sphi 0, %s757
    %s772 = sphi 0, %s758
    %s776 = sphi 0, %s776
    %s778 = sphi 0, %s776
    %s779 = sphi 0, %s778
    %s793 = sphi 0, %s779
    %s797 = sphi 0, %s797
    %s799 = sphi 0, %s797
    %s800 = sphi 0, %s799
    %s814 = sphi 0, %s800
  $region4: #{forward.1} parent=0 // loop_header_branch
    %78 = sbr.rel (%p76) target = $region8
  $region5: #{forward.1} parent=0 // loop_body
    %s80 = ssub.s32 %s75, 1
    %s81 = ssub.s32 %s75, 2
    %s82 = sadd.s32 %s75, 1
    %s84 = sadd.s32 %s83, 1
    %p87 = scmp.eq.s32.totalorder %s75, 8
    %p88 = scmp.ne.s32.totalorder %s83, %s85
    %p89 = scmp.eq.s32.totalorder %s75, 0
    %p90 = por %p88, %p89
    %p91 = scmp.ne.s32.totalorder %s83, %s85
    %p92 = scmp.eq.s32.totalorder %s80, 8
    %p93 = por %p91, %p92
    %p94 = scmp.ne.s32.totalorder %s85, %s86
    %p95 = scmp.eq.s32.totalorder %s80, 0
    %p96 = por %p94, %p95
    %p97 = scmp.ne.s32.totalorder %s85, %s86
    %p98 = scmp.eq.s32.totalorder %s81, 8
    %p99 = por %p97, %p98
    %p101 = scmp.ne.s32.totalorder %s86, %s100
    %p102 = scmp.eq.s32.totalorder %s81, 0
    %p103 = por %p101, %p102
    %s105 = sadd.s32 %s104, 1
    %p108 = scmp.eq.s32.totalorder %s75, 8
    %p109 = scmp.ne.s32.totalorder %s104, %s106
    %p110 = scmp.eq.s32.totalorder %s75, 0
    %p111 = por %p109, %p110
    %p112 = scmp.ne.s32.totalorder %s104, %s106
    %p113 = scmp.eq.s32.totalorder %s80, 8
    %p114 = por %p112, %p113
    %p115 = scmp.ne.s32.totalorder %s106, %s107
    %p116 = scmp.eq.s32.totalorder %s80, 0
    %p117 = por %p115, %p116
    %p118 = scmp.ne.s32.totalorder %s106, %s107
    %p119 = scmp.eq.s32.totalorder %s81, 8
    %p120 = por %p118, %p119
    %p122 = scmp.ne.s32.totalorder %s107, %s121
    %p123 = scmp.eq.s32.totalorder %s81, 0
    %p124 = por %p122, %p123
    %s126 = sadd.s32 %s125, 1
    %p129 = scmp.eq.s32.totalorder %s75, 8
    %p130 = scmp.ne.s32.totalorder %s125, %s127
    %p131 = scmp.eq.s32.totalorder %s75, 0
    %p132 = por %p130, %p131
    %p133 = scmp.ne.s32.totalorder %s125, %s127
    %p134 = scmp.eq.s32.totalorder %s80, 8
    %p135 = por %p133, %p134
    %p136 = scmp.ne.s32.totalorder %s127, %s128
    %p137 = scmp.eq.s32.totalorder %s80, 0
    %p138 = por %p136, %p137
    %p139 = scmp.ne.s32.totalorder %s127, %s128
    %p140 = scmp.eq.s32.totalorder %s81, 8
    %p141 = por %p139, %p140
    %p143 = scmp.ne.s32.totalorder %s128, %s142
    %p144 = scmp.eq.s32.totalorder %s81, 0
    %p145 = por %p143, %p144
    %s147 = sadd.s32 %s146, 1
    %p150 = scmp.eq.s32.totalorder %s75, 8
    %p151 = scmp.ne.s32.totalorder %s146, %s148
    %p152 = scmp.eq.s32.totalorder %s75, 0
    %p153 = por %p151, %p152
    %p154 = scmp.ne.s32.totalorder %s146, %s148
    %p155 = scmp.eq.s32.totalorder %s80, 8
    %p156 = por %p154, %p155
    %p157 = scmp.ne.s32.totalorder %s148, %s149
    %p158 = scmp.eq.s32.totalorder %s80, 0
    %p159 = por %p157, %p158
    %p160 = scmp.ne.s32.totalorder %s148, %s149
    %p161 = scmp.eq.s32.totalorder %s81, 8
    %p162 = por %p160, %p161
    %p164 = scmp.ne.s32.totalorder %s149, %s163
    %p165 = scmp.eq.s32.totalorder %s81, 0
    %p166 = por %p164, %p165
    %s168 = sadd.s32 %s167, 1
    %p171 = scmp.eq.s32.totalorder %s75, 8
    %p172 = scmp.ne.s32.totalorder %s167, %s169
    %p173 = scmp.eq.s32.totalorder %s75, 0
    %p174 = por %p172, %p173
    %p175 = scmp.ne.s32.totalorder %s167, %s169
    %p176 = scmp.eq.s32.totalorder %s80, 8
    %p177 = por %p175, %p176
    %p178 = scmp.ne.s32.totalorder %s169, %s170
    %p179 = scmp.eq.s32.totalorder %s80, 0
    %p180 = por %p178, %p179
    %p181 = scmp.ne.s32.totalorder %s169, %s170
    %p182 = scmp.eq.s32.totalorder %s81, 8
    %p183 = por %p181, %p182
    %p185 = scmp.ne.s32.totalorder %s170, %s184
    %p186 = scmp.eq.s32.totalorder %s81, 0
    %p187 = por %p185, %p186
    %s189 = sadd.s32 %s188, 1
    %p192 = scmp.eq.s32.totalorder %s75, 8
    %p193 = scmp.ne.s32.totalorder %s188, %s190
    %p194 = scmp.eq.s32.totalorder %s75, 0
    %p195 = por %p193, %p194
    %p196 = scmp.ne.s32.totalorder %s188, %s190
    %p197 = scmp.eq.s32.totalorder %s80, 8
    %p198 = por %p196, %p197
    %p199 = scmp.ne.s32.totalorder %s190, %s191
    %p200 = scmp.eq.s32.totalorder %s80, 0
    %p201 = por %p199, %p200
    %p202 = scmp.ne.s32.totalorder %s190, %s191
    %p203 = scmp.eq.s32.totalorder %s81, 8
    %p204 = por %p202, %p203
    %p206 = scmp.ne.s32.totalorder %s191, %s205
    %p207 = scmp.eq.s32.totalorder %s81, 0
    %p208 = por %p206, %p207
    %s210 = sadd.s32 %s209, 1
    %p213 = scmp.eq.s32.totalorder %s75, 8
    %p214 = scmp.ne.s32.totalorder %s209, %s211
    %p215 = scmp.eq.s32.totalorder %s75, 0
    %p216 = por %p214, %p215
    %p217 = scmp.ne.s32.totalorder %s209, %s211
    %p218 = scmp.eq.s32.totalorder %s80, 8
    %p219 = por %p217, %p218
    %p220 = scmp.ne.s32.totalorder %s211, %s212
    %p221 = scmp.eq.s32.totalorder %s80, 0
    %p222 = por %p220, %p221
    %p223 = scmp.ne.s32.totalorder %s211, %s212
    %p224 = scmp.eq.s32.totalorder %s81, 8
    %p225 = por %p223, %p224
    %p227 = scmp.ne.s32.totalorder %s212, %s226
    %p228 = scmp.eq.s32.totalorder %s81, 0
    %p229 = por %p227, %p228
    %s231 = sadd.s32 %s230, 1
    %p234 = scmp.eq.s32.totalorder %s75, 8
    %p235 = scmp.ne.s32.totalorder %s230, %s232
    %p236 = scmp.eq.s32.totalorder %s75, 0
    %p237 = por %p235, %p236
    %p238 = scmp.ne.s32.totalorder %s230, %s232
    %p239 = scmp.eq.s32.totalorder %s80, 8
    %p240 = por %p238, %p239
    %p241 = scmp.ne.s32.totalorder %s232, %s233
    %p242 = scmp.eq.s32.totalorder %s80, 0
    %p243 = por %p241, %p242
    %p244 = scmp.ne.s32.totalorder %s232, %s233
    %p245 = scmp.eq.s32.totalorder %s81, 8
    %p246 = por %p244, %p245
    %p248 = scmp.ne.s32.totalorder %s233, %s247
    %p249 = scmp.eq.s32.totalorder %s81, 0
    %p250 = por %p248, %p249
    %s252 = sadd.s32 %s251, 1
    %p255 = scmp.eq.s32.totalorder %s75, 8
    %p256 = scmp.ne.s32.totalorder %s251, %s253
    %p257 = scmp.eq.s32.totalorder %s75, 0
    %p258 = por %p256, %p257
    %p259 = scmp.ne.s32.totalorder %s251, %s253
    %p260 = scmp.eq.s32.totalorder %s80, 8
    %p261 = por %p259, %p260
    %p262 = scmp.ne.s32.totalorder %s253, %s254
    %p263 = scmp.eq.s32.totalorder %s80, 0
    %p264 = por %p262, %p263
    %p265 = scmp.ne.s32.totalorder %s253, %s254
    %p266 = scmp.eq.s32.totalorder %s81, 8
    %p267 = por %p265, %p266
    %p269 = scmp.ne.s32.totalorder %s254, %s268
    %p270 = scmp.eq.s32.totalorder %s81, 0
    %p271 = por %p269, %p270
    %s273 = sadd.s32 %s272, 1
    %p276 = scmp.eq.s32.totalorder %s75, 8
    %p277 = scmp.ne.s32.totalorder %s272, %s274
    %p278 = scmp.eq.s32.totalorder %s75, 0
    %p279 = por %p277, %p278
    %p280 = scmp.ne.s32.totalorder %s272, %s274
    %p281 = scmp.eq.s32.totalorder %s80, 8
    %p282 = por %p280, %p281
    %p283 = scmp.ne.s32.totalorder %s274, %s275
    %p284 = scmp.eq.s32.totalorder %s80, 0
    %p285 = por %p283, %p284
    %p286 = scmp.ne.s32.totalorder %s274, %s275
    %p287 = scmp.eq.s32.totalorder %s81, 8
    %p288 = por %p286, %p287
    %p290 = scmp.ne.s32.totalorder %s275, %s289
    %p291 = scmp.eq.s32.totalorder %s81, 0
    %p292 = por %p290, %p291
    %s294 = sadd.s32 %s293, 1
    %p297 = scmp.eq.s32.totalorder %s75, 8
    %p298 = scmp.ne.s32.totalorder %s293, %s295
    %p299 = scmp.eq.s32.totalorder %s75, 0
    %p300 = por %p298, %p299
    %p301 = scmp.ne.s32.totalorder %s293, %s295
    %p302 = scmp.eq.s32.totalorder %s80, 8
    %p303 = por %p301, %p302
    %p304 = scmp.ne.s32.totalorder %s295, %s296
    %p305 = scmp.eq.s32.totalorder %s80, 0
    %p306 = por %p304, %p305
    %p307 = scmp.ne.s32.totalorder %s295, %s296
    %p308 = scmp.eq.s32.totalorder %s81, 8
    %p309 = por %p307, %p308
    %p311 = scmp.ne.s32.totalorder %s296, %s310
    %p312 = scmp.eq.s32.totalorder %s81, 0
    %p313 = por %p311, %p312
    %s315 = sadd.s32 %s314, 1
    %p318 = scmp.eq.s32.totalorder %s75, 8
    %p319 = scmp.ne.s32.totalorder %s314, %s316
    %p320 = scmp.eq.s32.totalorder %s75, 0
    %p321 = por %p319, %p320
    %p322 = scmp.ne.s32.totalorder %s314, %s316
    %p323 = scmp.eq.s32.totalorder %s80, 8
    %p324 = por %p322, %p323
    %p325 = scmp.ne.s32.totalorder %s316, %s317
    %p326 = scmp.eq.s32.totalorder %s80, 0
    %p327 = por %p325, %p326
    %p328 = scmp.ne.s32.totalorder %s316, %s317
    %p329 = scmp.eq.s32.totalorder %s81, 8
    %p330 = por %p328, %p329
    %p332 = scmp.ne.s32.totalorder %s317, %s331
    %p333 = scmp.eq.s32.totalorder %s81, 0
    %p334 = por %p332, %p333
    %s336 = sadd.s32 %s335, 1
    %p339 = scmp.eq.s32.totalorder %s75, 8
    %p340 = scmp.ne.s32.totalorder %s335, %s337
    %p341 = scmp.eq.s32.totalorder %s75, 0
    %p342 = por %p340, %p341
    %p343 = scmp.ne.s32.totalorder %s335, %s337
    %p344 = scmp.eq.s32.totalorder %s80, 8
    %p345 = por %p343, %p344
    %p346 = scmp.ne.s32.totalorder %s337, %s338
    %p347 = scmp.eq.s32.totalorder %s80, 0
    %p348 = por %p346, %p347
    %p349 = scmp.ne.s32.totalorder %s337, %s338
    %p350 = scmp.eq.s32.totalorder %s81, 8
    %p351 = por %p349, %p350
    %p353 = scmp.ne.s32.totalorder %s338, %s352
    %p354 = scmp.eq.s32.totalorder %s81, 0
    %p355 = por %p353, %p354
    %s357 = sadd.s32 %s356, 1
    %p360 = scmp.eq.s32.totalorder %s75, 8
    %p361 = scmp.ne.s32.totalorder %s356, %s358
    %p362 = scmp.eq.s32.totalorder %s75, 0
    %p363 = por %p361, %p362
    %p364 = scmp.ne.s32.totalorder %s356, %s358
    %p365 = scmp.eq.s32.totalorder %s80, 8
    %p366 = por %p364, %p365
    %p367 = scmp.ne.s32.totalorder %s358, %s359
    %p368 = scmp.eq.s32.totalorder %s80, 0
    %p369 = por %p367, %p368
    %p370 = scmp.ne.s32.totalorder %s358, %s359
    %p371 = scmp.eq.s32.totalorder %s81, 8
    %p372 = por %p370, %p371
    %p374 = scmp.ne.s32.totalorder %s359, %s373
    %p375 = scmp.eq.s32.totalorder %s81, 0
    %p376 = por %p374, %p375
    %s378 = sadd.s32 %s377, 1
    %p381 = scmp.eq.s32.totalorder %s75, 8
    %p382 = scmp.ne.s32.totalorder %s377, %s379
    %p383 = scmp.eq.s32.totalorder %s75, 0
    %p384 = por %p382, %p383
    %p385 = scmp.ne.s32.totalorder %s377, %s379
    %p386 = scmp.eq.s32.totalorder %s80, 8
    %p387 = por %p385, %p386
    %p388 = scmp.ne.s32.totalorder %s379, %s380
    %p389 = scmp.eq.s32.totalorder %s80, 0
    %p390 = por %p388, %p389
    %p391 = scmp.ne.s32.totalorder %s379, %s380
    %p392 = scmp.eq.s32.totalorder %s81, 8
    %p393 = por %p391, %p392
    %p395 = scmp.ne.s32.totalorder %s380, %s394
    %p396 = scmp.eq.s32.totalorder %s81, 0
    %p397 = por %p395, %p396
    %s399 = sadd.s32 %s398, 1
    %p402 = scmp.eq.s32.totalorder %s75, 8
    %p403 = scmp.ne.s32.totalorder %s398, %s400
    %p404 = scmp.eq.s32.totalorder %s75, 0
    %p405 = por %p403, %p404
    %p406 = scmp.ne.s32.totalorder %s398, %s400
    %p407 = scmp.eq.s32.totalorder %s80, 8
    %p408 = por %p406, %p407
    %p409 = scmp.ne.s32.totalorder %s400, %s401
    %p410 = scmp.eq.s32.totalorder %s80, 0
    %p411 = por %p409, %p410
    %p412 = scmp.ne.s32.totalorder %s400, %s401
    %p413 = scmp.eq.s32.totalorder %s81, 8
    %p414 = por %p412, %p413
    %p416 = scmp.ne.s32.totalorder %s401, %s415
    %p417 = scmp.eq.s32.totalorder %s81, 0
    %p418 = por %p416, %p417
    %s420 = sadd.s32 %s419, 1
    %p423 = scmp.eq.s32.totalorder %s75, 8
    %p424 = scmp.ne.s32.totalorder %s419, %s421
    %p425 = scmp.eq.s32.totalorder %s75, 0
    %p426 = por %p424, %p425
    %p427 = scmp.ne.s32.totalorder %s419, %s421
    %p428 = scmp.eq.s32.totalorder %s80, 8
    %p429 = por %p427, %p428
    %p430 = scmp.ne.s32.totalorder %s421, %s422
    %p431 = scmp.eq.s32.totalorder %s80, 0
    %p432 = por %p430, %p431
    %p433 = scmp.ne.s32.totalorder %s421, %s422
    %p434 = scmp.eq.s32.totalorder %s81, 8
    %p435 = por %p433, %p434
    %p437 = scmp.ne.s32.totalorder %s422, %s436
    %p438 = scmp.eq.s32.totalorder %s81, 0
    %p439 = por %p437, %p438
    %s441 = sadd.s32 %s440, 1
    %p444 = scmp.eq.s32.totalorder %s75, 8
    %p445 = scmp.ne.s32.totalorder %s440, %s442
    %p446 = scmp.eq.s32.totalorder %s75, 0
    %p447 = por %p445, %p446
    %p448 = scmp.ne.s32.totalorder %s440, %s442
    %p449 = scmp.eq.s32.totalorder %s80, 8
    %p450 = por %p448, %p449
    %p451 = scmp.ne.s32.totalorder %s442, %s443
    %p452 = scmp.eq.s32.totalorder %s80, 0
    %p453 = por %p451, %p452
    %p454 = scmp.ne.s32.totalorder %s442, %s443
    %p455 = scmp.eq.s32.totalorder %s81, 8
    %p456 = por %p454, %p455
    %p458 = scmp.ne.s32.totalorder %s443, %s457
    %p459 = scmp.eq.s32.totalorder %s81, 0
    %p460 = por %p458, %p459
    %s462 = sadd.s32 %s461, 1
    %p465 = scmp.eq.s32.totalorder %s75, 8
    %p466 = scmp.ne.s32.totalorder %s461, %s463
    %p467 = scmp.eq.s32.totalorder %s75, 0
    %p468 = por %p466, %p467
    %p469 = scmp.ne.s32.totalorder %s461, %s463
    %p470 = scmp.eq.s32.totalorder %s80, 8
    %p471 = por %p469, %p470
    %p472 = scmp.ne.s32.totalorder %s463, %s464
    %p473 = scmp.eq.s32.totalorder %s80, 0
    %p474 = por %p472, %p473
    %p475 = scmp.ne.s32.totalorder %s463, %s464
    %p476 = scmp.eq.s32.totalorder %s81, 8
    %p477 = por %p475, %p476
    %p479 = scmp.ne.s32.totalorder %s464, %s478
    %p480 = scmp.eq.s32.totalorder %s81, 0
    %p481 = por %p479, %p480
    %s483 = sadd.s32 %s482, 1
    %p486 = scmp.eq.s32.totalorder %s75, 8
    %p487 = scmp.ne.s32.totalorder %s482, %s484
    %p488 = scmp.eq.s32.totalorder %s75, 0
    %p489 = por %p487, %p488
    %p490 = scmp.ne.s32.totalorder %s482, %s484
    %p491 = scmp.eq.s32.totalorder %s80, 8
    %p492 = por %p490, %p491
    %p493 = scmp.ne.s32.totalorder %s484, %s485
    %p494 = scmp.eq.s32.totalorder %s80, 0
    %p495 = por %p493, %p494
    %p496 = scmp.ne.s32.totalorder %s484, %s485
    %p497 = scmp.eq.s32.totalorder %s81, 8
    %p498 = por %p496, %p497
    %p500 = scmp.ne.s32.totalorder %s485, %s499
    %p501 = scmp.eq.s32.totalorder %s81, 0
    %p502 = por %p500, %p501
    %s504 = sadd.s32 %s503, 1
    %p507 = scmp.eq.s32.totalorder %s75, 8
    %p508 = scmp.ne.s32.totalorder %s503, %s505
    %p509 = scmp.eq.s32.totalorder %s75, 0
    %p510 = por %p508, %p509
    %p511 = scmp.ne.s32.totalorder %s503, %s505
    %p512 = scmp.eq.s32.totalorder %s80, 8
    %p513 = por %p511, %p512
    %p514 = scmp.ne.s32.totalorder %s505, %s506
    %p515 = scmp.eq.s32.totalorder %s80, 0
    %p516 = por %p514, %p515
    %p517 = scmp.ne.s32.totalorder %s505, %s506
    %p518 = scmp.eq.s32.totalorder %s81, 8
    %p519 = por %p517, %p518
    %p521 = scmp.ne.s32.totalorder %s506, %s520
    %p522 = scmp.eq.s32.totalorder %s81, 0
    %p523 = por %p521, %p522
    %s525 = sadd.s32 %s524, 1
    %p528 = scmp.eq.s32.totalorder %s75, 8
    %p529 = scmp.ne.s32.totalorder %s524, %s526
    %p530 = scmp.eq.s32.totalorder %s75, 0
    %p531 = por %p529, %p530
    %p532 = scmp.ne.s32.totalorder %s524, %s526
    %p533 = scmp.eq.s32.totalorder %s80, 8
    %p534 = por %p532, %p533
    %p535 = scmp.ne.s32.totalorder %s526, %s527
    %p536 = scmp.eq.s32.totalorder %s80, 0
    %p537 = por %p535, %p536
    %p538 = scmp.ne.s32.totalorder %s526, %s527
    %p539 = scmp.eq.s32.totalorder %s81, 8
    %p540 = por %p538, %p539
    %p542 = scmp.ne.s32.totalorder %s527, %s541
    %p543 = scmp.eq.s32.totalorder %s81, 0
    %p544 = por %p542, %p543
    %s546 = sadd.s32 %s545, 1
    %p549 = scmp.eq.s32.totalorder %s75, 8
    %p550 = scmp.ne.s32.totalorder %s545, %s547
    %p551 = scmp.eq.s32.totalorder %s75, 0
    %p552 = por %p550, %p551
    %p553 = scmp.ne.s32.totalorder %s545, %s547
    %p554 = scmp.eq.s32.totalorder %s80, 8
    %p555 = por %p553, %p554
    %p556 = scmp.ne.s32.totalorder %s547, %s548
    %p557 = scmp.eq.s32.totalorder %s80, 0
    %p558 = por %p556, %p557
    %p559 = scmp.ne.s32.totalorder %s547, %s548
    %p560 = scmp.eq.s32.totalorder %s81, 8
    %p561 = por %p559, %p560
    %p563 = scmp.ne.s32.totalorder %s548, %s562
    %p564 = scmp.eq.s32.totalorder %s81, 0
    %p565 = por %p563, %p564
    %s567 = sadd.s32 %s566, 1
    %p570 = scmp.eq.s32.totalorder %s75, 8
    %p571 = scmp.ne.s32.totalorder %s566, %s568
    %p572 = scmp.eq.s32.totalorder %s75, 0
    %p573 = por %p571, %p572
    %p574 = scmp.ne.s32.totalorder %s566, %s568
    %p575 = scmp.eq.s32.totalorder %s80, 8
    %p576 = por %p574, %p575
    %p577 = scmp.ne.s32.totalorder %s568, %s569
    %p578 = scmp.eq.s32.totalorder %s80, 0
    %p579 = por %p577, %p578
    %p580 = scmp.ne.s32.totalorder %s568, %s569
    %p581 = scmp.eq.s32.totalorder %s81, 8
    %p582 = por %p580, %p581
    %p584 = scmp.ne.s32.totalorder %s569, %s583
    %p585 = scmp.eq.s32.totalorder %s81, 0
    %p586 = por %p584, %p585
    %s588 = sadd.s32 %s587, 1
    %p591 = scmp.eq.s32.totalorder %s75, 8
    %p592 = scmp.ne.s32.totalorder %s587, %s589
    %p593 = scmp.eq.s32.totalorder %s75, 0
    %p594 = por %p592, %p593
    %p595 = scmp.ne.s32.totalorder %s587, %s589
    %p596 = scmp.eq.s32.totalorder %s80, 8
    %p597 = por %p595, %p596
    %p598 = scmp.ne.s32.totalorder %s589, %s590
    %p599 = scmp.eq.s32.totalorder %s80, 0
    %p600 = por %p598, %p599
    %p601 = scmp.ne.s32.totalorder %s589, %s590
    %p602 = scmp.eq.s32.totalorder %s81, 8
    %p603 = por %p601, %p602
    %p605 = scmp.ne.s32.totalorder %s590, %s604
    %p606 = scmp.eq.s32.totalorder %s81, 0
    %p607 = por %p605, %p606
    %s609 = sadd.s32 %s608, 1
    %p612 = scmp.eq.s32.totalorder %s75, 8
    %p613 = scmp.ne.s32.totalorder %s608, %s610
    %p614 = scmp.eq.s32.totalorder %s75, 0
    %p615 = por %p613, %p614
    %p616 = scmp.ne.s32.totalorder %s608, %s610
    %p617 = scmp.eq.s32.totalorder %s80, 8
    %p618 = por %p616, %p617
    %p619 = scmp.ne.s32.totalorder %s610, %s611
    %p620 = scmp.eq.s32.totalorder %s80, 0
    %p621 = por %p619, %p620
    %p622 = scmp.ne.s32.totalorder %s610, %s611
    %p623 = scmp.eq.s32.totalorder %s81, 8
    %p624 = por %p622, %p623
    %p626 = scmp.ne.s32.totalorder %s611, %s625
    %p627 = scmp.eq.s32.totalorder %s81, 0
    %p628 = por %p626, %p627
    %s630 = sadd.s32 %s629, 1
    %p633 = scmp.eq.s32.totalorder %s75, 8
    %p634 = scmp.ne.s32.totalorder %s629, %s631
    %p635 = scmp.eq.s32.totalorder %s75, 0
    %p636 = por %p634, %p635
    %p637 = scmp.ne.s32.totalorder %s629, %s631
    %p638 = scmp.eq.s32.totalorder %s80, 8
    %p639 = por %p637, %p638
    %p640 = scmp.ne.s32.totalorder %s631, %s632
    %p641 = scmp.eq.s32.totalorder %s80, 0
    %p642 = por %p640, %p641
    %p643 = scmp.ne.s32.totalorder %s631, %s632
    %p644 = scmp.eq.s32.totalorder %s81, 8
    %p645 = por %p643, %p644
    %p647 = scmp.ne.s32.totalorder %s632, %s646
    %p648 = scmp.eq.s32.totalorder %s81, 0
    %p649 = por %p647, %p648
    %s651 = sadd.s32 %s650, 1
    %p654 = scmp.eq.s32.totalorder %s75, 8
    %p655 = scmp.ne.s32.totalorder %s650, %s652
    %p656 = scmp.eq.s32.totalorder %s75, 0
    %p657 = por %p655, %p656
    %p658 = scmp.ne.s32.totalorder %s650, %s652
    %p659 = scmp.eq.s32.totalorder %s80, 8
    %p660 = por %p658, %p659
    %p661 = scmp.ne.s32.totalorder %s652, %s653
    %p662 = scmp.eq.s32.totalorder %s80, 0
    %p663 = por %p661, %p662
    %p664 = scmp.ne.s32.totalorder %s652, %s653
    %p665 = scmp.eq.s32.totalorder %s81, 8
    %p666 = por %p664, %p665
    %p668 = scmp.ne.s32.totalorder %s653, %s667
    %p669 = scmp.eq.s32.totalorder %s81, 0
    %p670 = por %p668, %p669
    %s672 = sadd.s32 %s671, 1
    %p675 = scmp.eq.s32.totalorder %s75, 8
    %p676 = scmp.ne.s32.totalorder %s671, %s673
    %p677 = scmp.eq.s32.totalorder %s75, 0
    %p678 = por %p676, %p677
    %p679 = scmp.ne.s32.totalorder %s671, %s673
    %p680 = scmp.eq.s32.totalorder %s80, 8
    %p681 = por %p679, %p680
    %p682 = scmp.ne.s32.totalorder %s673, %s674
    %p683 = scmp.eq.s32.totalorder %s80, 0
    %p684 = por %p682, %p683
    %p685 = scmp.ne.s32.totalorder %s673, %s674
    %p686 = scmp.eq.s32.totalorder %s81, 8
    %p687 = por %p685, %p686
    %p689 = scmp.ne.s32.totalorder %s674, %s688
    %p690 = scmp.eq.s32.totalorder %s81, 0
    %p691 = por %p689, %p690
    %s693 = sadd.s32 %s692, 1
    %p696 = scmp.eq.s32.totalorder %s75, 8
    %p697 = scmp.ne.s32.totalorder %s692, %s694
    %p698 = scmp.eq.s32.totalorder %s75, 0
    %p699 = por %p697, %p698
    %p700 = scmp.ne.s32.totalorder %s692, %s694
    %p701 = scmp.eq.s32.totalorder %s80, 8
    %p702 = por %p700, %p701
    %p703 = scmp.ne.s32.totalorder %s694, %s695
    %p704 = scmp.eq.s32.totalorder %s80, 0
    %p705 = por %p703, %p704
    %p706 = scmp.ne.s32.totalorder %s694, %s695
    %p707 = scmp.eq.s32.totalorder %s81, 8
    %p708 = por %p706, %p707
    %p710 = scmp.ne.s32.totalorder %s695, %s709
    %p711 = scmp.eq.s32.totalorder %s81, 0
    %p712 = por %p710, %p711
    %s714 = sadd.s32 %s713, 1
    %p717 = scmp.eq.s32.totalorder %s75, 8
    %p718 = scmp.ne.s32.totalorder %s713, %s715
    %p719 = scmp.eq.s32.totalorder %s75, 0
    %p720 = por %p718, %p719
    %p721 = scmp.ne.s32.totalorder %s713, %s715
    %p722 = scmp.eq.s32.totalorder %s80, 8
    %p723 = por %p721, %p722
    %p724 = scmp.ne.s32.totalorder %s715, %s716
    %p725 = scmp.eq.s32.totalorder %s80, 0
    %p726 = por %p724, %p725
    %p727 = scmp.ne.s32.totalorder %s715, %s716
    %p728 = scmp.eq.s32.totalorder %s81, 8
    %p729 = por %p727, %p728
    %p731 = scmp.ne.s32.totalorder %s716, %s730
    %p732 = scmp.eq.s32.totalorder %s81, 0
    %p733 = por %p731, %p732
    %s735 = sadd.s32 %s734, 1
    %p738 = scmp.eq.s32.totalorder %s75, 8
    %p739 = scmp.ne.s32.totalorder %s734, %s736
    %p740 = scmp.eq.s32.totalorder %s75, 0
    %p741 = por %p739, %p740
    %p742 = scmp.ne.s32.totalorder %s734, %s736
    %p743 = scmp.eq.s32.totalorder %s80, 8
    %p744 = por %p742, %p743
    %p745 = scmp.ne.s32.totalorder %s736, %s737
    %p746 = scmp.eq.s32.totalorder %s80, 0
    %p747 = por %p745, %p746
    %p748 = scmp.ne.s32.totalorder %s736, %s737
    %p749 = scmp.eq.s32.totalorder %s81, 8
    %p750 = por %p748, %p749
    %p752 = scmp.ne.s32.totalorder %s737, %s751
    %p753 = scmp.eq.s32.totalorder %s81, 0
    %p754 = por %p752, %p753
    %s756 = sadd.s32 %s755, 1
    %p759 = scmp.eq.s32.totalorder %s75, 8
    %p760 = scmp.ne.s32.totalorder %s755, %s757
    %p761 = scmp.eq.s32.totalorder %s75, 0
    %p762 = por %p760, %p761
    %p763 = scmp.ne.s32.totalorder %s755, %s757
    %p764 = scmp.eq.s32.totalorder %s80, 8
    %p765 = por %p763, %p764
    %p766 = scmp.ne.s32.totalorder %s757, %s758
    %p767 = scmp.eq.s32.totalorder %s80, 0
    %p768 = por %p766, %p767
    %p769 = scmp.ne.s32.totalorder %s757, %s758
    %p770 = scmp.eq.s32.totalorder %s81, 8
    %p771 = por %p769, %p770
    %p773 = scmp.ne.s32.totalorder %s758, %s772
    %p774 = scmp.eq.s32.totalorder %s81, 0
    %p775 = por %p773, %p774
    %s777 = sadd.s32 %s776, 1
    %p780 = scmp.eq.s32.totalorder %s75, 8
    %p781 = scmp.ne.s32.totalorder %s776, %s778
    %p782 = scmp.eq.s32.totalorder %s75, 0
    %p783 = por %p781, %p782
    %p784 = scmp.ne.s32.totalorder %s776, %s778
    %p785 = scmp.eq.s32.totalorder %s80, 8
    %p786 = por %p784, %p785
    %p787 = scmp.ne.s32.totalorder %s778, %s779
    %p788 = scmp.eq.s32.totalorder %s80, 0
    %p789 = por %p787, %p788
    %p790 = scmp.ne.s32.totalorder %s778, %s779
    %p791 = scmp.eq.s32.totalorder %s81, 8
    %p792 = por %p790, %p791
    %p794 = scmp.ne.s32.totalorder %s779, %s793
    %p795 = scmp.eq.s32.totalorder %s81, 0
    %p796 = por %p794, %p795
    %s798 = sadd.s32 %s797, 1
    %p801 = scmp.eq.s32.totalorder %s75, 8
    %p802 = scmp.ne.s32.totalorder %s797, %s799
    %p803 = scmp.eq.s32.totalorder %s75, 0
    %p804 = por %p802, %p803
    %p805 = scmp.ne.s32.totalorder %s797, %s799
    %p806 = scmp.eq.s32.totalorder %s80, 8
    %p807 = por %p805, %p806
    %p808 = scmp.ne.s32.totalorder %s799, %s800
    %p809 = scmp.eq.s32.totalorder %s80, 0
    %p810 = por %p808, %p809
    %p811 = scmp.ne.s32.totalorder %s799, %s800
    %p812 = scmp.eq.s32.totalorder %s81, 8
    %p813 = por %p811, %p812
    %p815 = scmp.ne.s32.totalorder %s800, %s814
    %p816 = scmp.eq.s32.totalorder %s81, 0
    %p817 = por %p815, %p816
    %p818 = scmp.le.s32.totalorder 1, %s75
    %p819 = scmp.lt.s32.totalorder %s75, 10
    %p820 = pnand %p818, %p819
    %p821 = pneg %p820
    // Predicated region
    $region9: #{forward.1} parent=5 // pred_check
      _
    $region10: #{forward.1} parent=5 // pred_check_branch
      %823 = sbr.rel (%p820) target = $region12
    $region11: #{forward.1} parent=5 // pred_region
      %s824 = ssub.s32 %s75, 1
      // Predicated region
      $region13: #{forward.1} parent=11 // pred_check
        %p825 = pneg %p96
      $region14: #{forward.1} parent=11 // pred_check_branch
        %827 = sbr.rel (%p825) target = $region16
      $region15: #{forward.1} parent=11 // pred_region
        _
      $region16: #{forward.1} parent=11 // pred_fallthru
        _
      // Predicated region
      $region17: #{forward.1} parent=11 // pred_check
        %p828 = pneg %p117
      $region18: #{forward.1} parent=11 // pred_check_branch
        %830 = sbr.rel (%p828) target = $region20
      $region19: #{forward.1} parent=11 // pred_region
        _
      $region20: #{forward.1} parent=11 // pred_fallthru
        _
      // Predicated region
      $region21: #{forward.1} parent=11 // pred_check
        %p831 = pneg %p138
      $region22: #{forward.1} parent=11 // pred_check_branch
        %833 = sbr.rel (%p831) target = $region24
      $region23: #{forward.1} parent=11 // pred_region
        _
      $region24: #{forward.1} parent=11 // pred_fallthru
        _
      // Predicated region
      $region25: #{forward.1} parent=11 // pred_check
        %p834 = pneg %p159
      $region26: #{forward.1} parent=11 // pred_check_branch
        %836 = sbr.rel (%p834) target = $region28
      $region27: #{forward.1} parent=11 // pred_region
        _
      $region28: #{forward.1} parent=11 // pred_fallthru
        _
      // Predicated region
      $region29: #{forward.1} parent=11 // pred_check
        %p837 = pneg %p180
      $region30: #{forward.1} parent=11 // pred_check_branch
        %839 = sbr.rel (%p837) target = $region32
      $region31: #{forward.1} parent=11 // pred_region
        _
      $region32: #{forward.1} parent=11 // pred_fallthru
        _
      // Predicated region
      $region33: #{forward.1} parent=11 // pred_check
        %p840 = pneg %p201
      $region34: #{forward.1} parent=11 // pred_check_branch
        %842 = sbr.rel (%p840) target = $region36
      $region35: #{forward.1} parent=11 // pred_region
        _
      $region36: #{forward.1} parent=11 // pred_fallthru
        _
      // Predicated region
      $region37: #{forward.1} parent=11 // pred_check
        %p843 = pneg %p222
      $region38: #{forward.1} parent=11 // pred_check_branch
        %845 = sbr.rel (%p843) target = $region40
      $region39: #{forward.1} parent=11 // pred_region
        _
      $region40: #{forward.1} parent=11 // pred_fallthru
        _
      // Predicated region
      $region41: #{forward.1} parent=11 // pred_check
        %p846 = pneg %p243
      $region42: #{forward.1} parent=11 // pred_check_branch
        %848 = sbr.rel (%p846) target = $region44
      $region43: #{forward.1} parent=11 // pred_region
        _
      $region44: #{forward.1} parent=11 // pred_fallthru
        _
      // Predicated region
      $region45: #{forward.1} parent=11 // pred_check
        %p849 = pneg %p264
      $region46: #{forward.1} parent=11 // pred_check_branch
        %851 = sbr.rel (%p849) target = $region48
      $region47: #{forward.1} parent=11 // pred_region
        _
      $region48: #{forward.1} parent=11 // pred_fallthru
        _
      // Predicated region
      $region49: #{forward.1} parent=11 // pred_check
        %p852 = pneg %p285
      $region50: #{forward.1} parent=11 // pred_check_branch
        %854 = sbr.rel (%p852) target = $region52
      $region51: #{forward.1} parent=11 // pred_region
        _
      $region52: #{forward.1} parent=11 // pred_fallthru
        _
      // Predicated region
      $region53: #{forward.1} parent=11 // pred_check
        %p855 = pneg %p306
      $region54: #{forward.1} parent=11 // pred_check_branch
        %857 = sbr.rel (%p855) target = $region56
      $region55: #{forward.1} parent=11 // pred_region
        _
      $region56: #{forward.1} parent=11 // pred_fallthru
        _
      // Predicated region
      $region57: #{forward.1} parent=11 // pred_check
        %p858 = pneg %p327
      $region58: #{forward.1} parent=11 // pred_check_branch
        %860 = sbr.rel (%p858) target = $region60
      $region59: #{forward.1} parent=11 // pred_region
        _
      $region60: #{forward.1} parent=11 // pred_fallthru
        _
      // Predicated region
      $region61: #{forward.1} parent=11 // pred_check
        %p861 = pneg %p348
      $region62: #{forward.1} parent=11 // pred_check_branch
        %863 = sbr.rel (%p861) target = $region64
      $region63: #{forward.1} parent=11 // pred_region
        _
      $region64: #{forward.1} parent=11 // pred_fallthru
        _
      // Predicated region
      $region65: #{forward.1} parent=11 // pred_check
        %p864 = pneg %p369
      $region66: #{forward.1} parent=11 // pred_check_branch
        %866 = sbr.rel (%p864) target = $region68
      $region67: #{forward.1} parent=11 // pred_region
        _
      $region68: #{forward.1} parent=11 // pred_fallthru
        _
      // Predicated region
      $region69: #{forward.1} parent=11 // pred_check
        %p867 = pneg %p390
      $region70: #{forward.1} parent=11 // pred_check_branch
        %869 = sbr.rel (%p867) target = $region72
      $region71: #{forward.1} parent=11 // pred_region
        _
      $region72: #{forward.1} parent=11 // pred_fallthru
        _
      // Predicated region
      $region73: #{forward.1} parent=11 // pred_check
        %p870 = pneg %p411
      $region74: #{forward.1} parent=11 // pred_check_branch
        %872 = sbr.rel (%p870) target = $region76
      $region75: #{forward.1} parent=11 // pred_region
        _
      $region76: #{forward.1} parent=11 // pred_fallthru
        _
      // Predicated region
      $region77: #{forward.1} parent=11 // pred_check
        %p873 = pneg %p432
      $region78: #{forward.1} parent=11 // pred_check_branch
        %875 = sbr.rel (%p873) target = $region80
      $region79: #{forward.1} parent=11 // pred_region
        _
      $region80: #{forward.1} parent=11 // pred_fallthru
        _
      // Predicated region
      $region81: #{forward.1} parent=11 // pred_check
        %p876 = pneg %p453
      $region82: #{forward.1} parent=11 // pred_check_branch
        %878 = sbr.rel (%p876) target = $region84
      $region83: #{forward.1} parent=11 // pred_region
        _
      $region84: #{forward.1} parent=11 // pred_fallthru
        _
      // Predicated region
      $region85: #{forward.1} parent=11 // pred_check
        %p879 = pneg %p474
      $region86: #{forward.1} parent=11 // pred_check_branch
        %881 = sbr.rel (%p879) target = $region88
      $region87: #{forward.1} parent=11 // pred_region
        _
      $region88: #{forward.1} parent=11 // pred_fallthru
        _
      // Predicated region
      $region89: #{forward.1} parent=11 // pred_check
        %p882 = pneg %p495
      $region90: #{forward.1} parent=11 // pred_check_branch
        %884 = sbr.rel (%p882) target = $region92
      $region91: #{forward.1} parent=11 // pred_region
        _
      $region92: #{forward.1} parent=11 // pred_fallthru
        _
      // Predicated region
      $region93: #{forward.1} parent=11 // pred_check
        %p885 = pneg %p516
      $region94: #{forward.1} parent=11 // pred_check_branch
        %887 = sbr.rel (%p885) target = $region96
      $region95: #{forward.1} parent=11 // pred_region
        _
      $region96: #{forward.1} parent=11 // pred_fallthru
        _
      // Predicated region
      $region97: #{forward.1} parent=11 // pred_check
        %p888 = pneg %p537
      $region98: #{forward.1} parent=11 // pred_check_branch
        %890 = sbr.rel (%p888) target = $region100
      $region99: #{forward.1} parent=11 // pred_region
        _
      $region100: #{forward.1} parent=11 // pred_fallthru
        _
      // Predicated region
      $region101: #{forward.1} parent=11 // pred_check
        %p891 = pneg %p558
      $region102: #{forward.1} parent=11 // pred_check_branch
        %893 = sbr.rel (%p891) target = $region104
      $region103: #{forward.1} parent=11 // pred_region
        _
      $region104: #{forward.1} parent=11 // pred_fallthru
        _
      // Predicated region
      $region105: #{forward.1} parent=11 // pred_check
        %p894 = pneg %p579
      $region106: #{forward.1} parent=11 // pred_check_branch
        %896 = sbr.rel (%p894) target = $region108
      $region107: #{forward.1} parent=11 // pred_region
        _
      $region108: #{forward.1} parent=11 // pred_fallthru
        _
      // Predicated region
      $region109: #{forward.1} parent=11 // pred_check
        %p897 = pneg %p600
      $region110: #{forward.1} parent=11 // pred_check_branch
        %899 = sbr.rel (%p897) target = $region112
      $region111: #{forward.1} parent=11 // pred_region
        _
      $region112: #{forward.1} parent=11 // pred_fallthru
        _
      // Predicated region
      $region113: #{forward.1} parent=11 // pred_check
        %p900 = pneg %p621
      $region114: #{forward.1} parent=11 // pred_check_branch
        %902 = sbr.rel (%p900) target = $region116
      $region115: #{forward.1} parent=11 // pred_region
        _
      $region116: #{forward.1} parent=11 // pred_fallthru
        _
      // Predicated region
      $region117: #{forward.1} parent=11 // pred_check
        %p903 = pneg %p642
      $region118: #{forward.1} parent=11 // pred_check_branch
        %905 = sbr.rel (%p903) target = $region120
      $region119: #{forward.1} parent=11 // pred_region
        _
      $region120: #{forward.1} parent=11 // pred_fallthru
        _
      // Predicated region
      $region121: #{forward.1} parent=11 // pred_check
        %p906 = pneg %p663
      $region122: #{forward.1} parent=11 // pred_check_branch
        %908 = sbr.rel (%p906) target = $region124
      $region123: #{forward.1} parent=11 // pred_region
        _
      $region124: #{forward.1} parent=11 // pred_fallthru
        _
      // Predicated region
      $region125: #{forward.1} parent=11 // pred_check
        %p909 = pneg %p684
      $region126: #{forward.1} parent=11 // pred_check_branch
        %911 = sbr.rel (%p909) target = $region128
      $region127: #{forward.1} parent=11 // pred_region
        _
      $region128: #{forward.1} parent=11 // pred_fallthru
        _
      // Predicated region
      $region129: #{forward.1} parent=11 // pred_check
        %p912 = pneg %p705
      $region130: #{forward.1} parent=11 // pred_check_branch
        %914 = sbr.rel (%p912) target = $region132
      $region131: #{forward.1} parent=11 // pred_region
        _
      $region132: #{forward.1} parent=11 // pred_fallthru
        _
      // Predicated region
      $region133: #{forward.1} parent=11 // pred_check
        %p915 = pneg %p726
      $region134: #{forward.1} parent=11 // pred_check_branch
        %917 = sbr.rel (%p915) target = $region136
      $region135: #{forward.1} parent=11 // pred_region
        _
      $region136: #{forward.1} parent=11 // pred_fallthru
        _
      // Predicated region
      $region137: #{forward.1} parent=11 // pred_check
        %p918 = pneg %p747
      $region138: #{forward.1} parent=11 // pred_check_branch
        %920 = sbr.rel (%p918) target = $region140
      $region139: #{forward.1} parent=11 // pred_region
        _
      $region140: #{forward.1} parent=11 // pred_fallthru
        _
      // Predicated region
      $region141: #{forward.1} parent=11 // pred_check
        %p921 = pneg %p768
      $region142: #{forward.1} parent=11 // pred_check_branch
        %923 = sbr.rel (%p921) target = $region144
      $region143: #{forward.1} parent=11 // pred_region
        _
      $region144: #{forward.1} parent=11 // pred_fallthru
        _
      // Predicated region
      $region145: #{forward.1} parent=11 // pred_check
        %p924 = pneg %p789
      $region146: #{forward.1} parent=11 // pred_check_branch
        %926 = sbr.rel (%p924) target = $region148
      $region147: #{forward.1} parent=11 // pred_region
        _
      $region148: #{forward.1} parent=11 // pred_fallthru
        _
    $region12: #{forward.1} parent=5 // pred_fallthru
      _
    %p927 = scmp.lt.s32.totalorder %s75, 9
    // Predicated region
    $region149: #{forward.1} parent=5 // pred_check
      %p928 = pneg %p927
    $region150: #{forward.1} parent=5 // pred_check_branch
      %930 = sbr.rel (%p928) target = $region152
    $region151: #{forward.1} parent=5 // pred_region
      _
    $region152: #{forward.1} parent=5 // pred_fallthru
      _
    %p931 = scmp.le.s32.totalorder 1, %s75
    %p932 = scmp.lt.s32.totalorder %s75, 10
    %p933 = pnand %p931, %p932
    %p934 = pneg %p933
    // Predicated region
    $region153: #{forward.1} parent=5 // pred_check
      _
    $region154: #{forward.1} parent=5 // pred_check_branch
      %936 = sbr.rel (%p933) target = $region156
    $region155: #{forward.1} parent=5 // pred_region
      %s937 = ssub.s32 %s75, 1
      %p938 = pneg %p96
      %p939 = pneg %p93
      %p940 = pneg %p117
      %p941 = pneg %p114
      %p942 = pneg %p138
      %p943 = pneg %p135
      %p944 = pneg %p159
      %p945 = pneg %p156
      %p946 = pneg %p180
      %p947 = pneg %p177
      %p948 = pneg %p201
      %p949 = pneg %p198
      %p950 = pneg %p222
      %p951 = pneg %p219
      %p952 = pneg %p243
      %p953 = pneg %p240
      %p954 = pneg %p264
      %p955 = pneg %p261
      %p956 = pneg %p285
      %p957 = pneg %p282
      %p958 = pneg %p306
      %p959 = pneg %p303
      %p960 = pneg %p327
      %p961 = pneg %p324
      %p962 = pneg %p348
      %p963 = pneg %p345
      %p964 = pneg %p369
      %p965 = pneg %p366
      %p966 = pneg %p390
      %p967 = pneg %p387
      %p968 = pneg %p411
      %p969 = pneg %p408
      %p970 = pneg %p432
      %p971 = pneg %p429
      %p972 = pneg %p453
      %p973 = pneg %p450
      %p974 = pneg %p474
      %p975 = pneg %p471
      %p976 = pneg %p495
      %p977 = pneg %p492
      %p978 = pneg %p516
      %p979 = pneg %p513
      %p980 = pneg %p537
      %p981 = pneg %p534
      %p982 = pneg %p558
      %p983 = pneg %p555
      %p984 = pneg %p579
      %p985 = pneg %p576
      %p986 = pneg %p600
      %p987 = pneg %p597
      %p988 = pneg %p621
      %p989 = pneg %p618
      %p990 = pneg %p642
      %p991 = pneg %p639
      %p992 = pneg %p663
      %p993 = pneg %p660
      %p994 = pneg %p684
      %p995 = pneg %p681
      %p996 = pneg %p705
      %p997 = pneg %p702
      %p998 = pneg %p726
      %p999 = pneg %p723
      %p1000 = pneg %p747
      %p1001 = pneg %p744
      %p1002 = pneg %p768
      %p1003 = pneg %p765
      %p1004 = pneg %p789
      %p1005 = pneg %p786
      %p1006 = pneg %p810
      %p1007 = pneg %p807
      %p1008 = scmp.eq.s32.totalorder %s80, 0
      // Predicated region
      $region157: #{forward.1} parent=155 // pred_check
        %p1009 = pneg %p1008
      $region158: #{forward.1} parent=155 // pred_check_branch
        %1011 = sbr.rel (%p1009) target = $region160
      $region159: #{forward.1} parent=155 // pred_region
        %v1012 = vld [vmem:[%s1] sm:$0xff]
        %v1013 = vld [vmem:[%s1 + $0x8] sm:$0xf]
        %vm1014 = vcmask 146432
        %1015 = vst.msk [vmem:[#allocation2] sm:$0xff] %vm1014, %v1012
        %vm1016 = vcmask 142336
        %1017 = vst.msk [vmem:[#allocation2 + $0x8] sm:$0xf] %vm1016, %v1013
        %1018 = vst [vmem:[%s69] sm:$0x1] 0.0
      $region160: #{forward.1} parent=155 // pred_fallthru
        _
      %v1019 = vld [vmem:[%s13] sm:$0x1]
      %v1020 = vld [vmem:[%s15] sm:$0x1]
      %v1021 = vld [vmem:[#allocation2] sm:$0xff]
      %v1022 = vld [vmem:[#allocation2 + $0x8] sm:$0xf]
      %v1023 = vld [vmem:[%s19] sm:$0xff]
      %v1024 = vld [vmem:[%s19 + $0x8] sm:$0xff]
      %v1025 = vld [vmem:[%s21] sm:$0xff]
      %v1026 = vld [vmem:[%s21 + $0x8] sm:$0xff]
      %1028 = vset.pattern.permute.xlu0 0
      %1029 = vperm.xlu0 %1028, %v1025
      %v1030 = vpop.permute.xlu0 %1029
      %1033 = vset.pattern.permute.xlu0 0
      %1034 = vperm.xlu0 %1033, %v1026
      %v1035 = vpop.permute.xlu0 %1034
      %vm1037 = vcmask 97280
      %v1039 = vsel %vm1037, %v1023, 0
      %v1042 = vsel %vm1037, %v1024, 0
      %vm1044 = vcmask 1043456
      %v1046 = vsel %vm1044, %v1022, 0
      %1048 = vmatprep.subr.mxu0 0.0
      %1049 = vmatpush1.msra.mxu0 0.0
      %1050 = vmatprep.subr.mxu0 0.0
      %1051 = vmatpush1.msra.mxu0 0.0
      %1052 = vmatprep.subr.mxu0 0.0
      %1053 = vmatpush1.msra.mxu0 0.0
      %1054 = vmatprep.subr.mxu0 0.0
      %1055 = vmatpush1.msra.mxu0 0.0
      %1056 = vmatprep.subr.mxu0 0.0
      %1057 = vmatpush1.msra.mxu0 0.0
      %1058 = vmatprep.subr.mxu0 0.0
      %1059 = vmatpush1.msra.mxu0 0.0
      %1060 = vmatprep.subr.mxu0 0.0
      %1061 = vmatpush1.msra.mxu0 0.0
      %1062 = vmatprep.subr.mxu0 0.0
      %1063 = vmatpush1.msra.mxu0 0.0
      %1064 = vmatprep.subr.mxu0 0.0
      %1065 = vmatpush1.msra.mxu0 0.0
      %1066 = vmatprep.subr.mxu0 0.0
      %1067 = vmatpush1.msra.mxu0 0.0
      %1068 = vmatprep.subr.mxu0 0.0
      %1069 = vmatpush1.msra.mxu0 0.0
      %1070 = vmatprep.subr.mxu0 0.0
      %1071 = vmatpush1.msra.mxu0 0.0
      %1072 = vmatprep.subr.mxu0 0.0
      %1073 = vmatpush1.msra.mxu0 0.0
      %1074 = vmatprep.subr.mxu0 0.0
      %1075 = vmatpush1.msra.mxu0 0.0
      %1076 = vmatprep.subr.mxu0 0.0
      %1077 = vmatpush1.msra.mxu0 %v1046
      %1078 = vmatprep.subr.mxu0 0.0
      %1079 = vmatpush1.msra.mxu0 %v1021
      %1080 = vmatprep.subr.mxu0 0.0
      %1081 = vmatpush2.msra.mxu0 0.0
      %1082 = vmatprep.subr.mxu0 0.0
      %1083 = vmatpush2.msra.mxu0 0.0
      %1084 = vmatprep.subr.mxu0 0.0
      %1085 = vmatpush2.msra.mxu0 0.0
      %1086 = vmatprep.subr.mxu0 0.0
      %1087 = vmatpush2.msra.mxu0 0.0
      %1088 = vmatprep.subr.mxu0 0.0
      %1089 = vmatpush2.msra.mxu0 0.0
      %1090 = vmatprep.subr.mxu0 0.0
      %1091 = vmatpush2.msra.mxu0 0.0
      %1092 = vmatprep.subr.mxu0 0.0
      %1093 = vmatpush2.msra.mxu0 0.0
      %1094 = vmatprep.subr.mxu0 0.0
      %1095 = vmatpush2.msra.mxu0 0.0
      %1096 = vmatprep.subr.mxu0 0.0
      %1097 = vmatpush2.msra.mxu0 0.0
      %1098 = vmatprep.subr.mxu0 0.0
      %1099 = vmatpush2.msra.mxu0 0.0
      %1100 = vmatprep.subr.mxu0 0.0
      %1101 = vmatpush2.msra.mxu0 0.0
      %1102 = vmatprep.subr.mxu0 0.0
      %1103 = vmatpush2.msra.mxu0 0.0
      %1104 = vmatprep.subr.mxu0 0.0
      %1105 = vmatpush2.msra.mxu0 0.0
      %1106 = vmatprep.subr.mxu0 0.0
      %1107 = vmatpush2.msra.mxu0 0.0
      %1108 = vmatprep.subr.mxu0 0.0
      %1109 = vmatpush2.msra.mxu0 0.0
      %1110 = vmatprep.subr.mxu0 0.0
      %1111 = vmatpush2.msra.mxu0 0.0
      %1112 = vmatprep.mubr.f32.mxu0 0.0
      %1113 = vmatmul.mubr.f32.gmra.mxu0 %v1039
      %v1114 = vpop.f32.mrf.mxu0
      %v1115 = vadd.f32 %v1030, %v1114
      %v1116 = vpop.f32.mrf.mxu0
      %1117 = vmatprep.mubr.f32.mxu0 0.0
      %1118 = vmatmul.mubr.f32.gmra.mxu0 %v1042
      %v1119 = vpop.f32.mrf.mxu0
      %v1120 = vadd.f32 %v1035, %v1119
      %v1121 = vpop.f32.mrf.mxu0
      %1122 = vdwg.mxu0
      %v1123 = vmax.f32 %v1115, 0.0
      %v1124 = vmax.f32 %v1120, 0.0
      %v1126 = vlaneseq
      %v1127 = vshrl.u32 %v1126, 7
      %v1128 = vsub.s32 0, %v1127
      %v1129 = vrot.slane %v1019, %v1128
      %v1131 = vmul.f32 %v1123, %v1129
      %v1132 = vmul.f32 %v1124, %v1129
      %1135 = vrot.lane.b32.xlu0 %v1131, 119
      %v1136 = vpop.permute.xlu0 %1135
      %1137 = vrot.lane.b32.xlu0 %v1132, 119
      %v1138 = vpop.permute.xlu0 %1137
      %vm1139 = vcmask 1046528
      %v1140 = vrot.slane %v1131, 1
      %v1141 = vrot.slane %v1132, 1
      %v1142 = vsel %vm1139, %v1140, %v1141
      %v1143 = vrot.slane %v1136, 1
      %v1144 = vsel %vm1139, %v1141, %v1143
      %v1145 = vrot.slane %v1138, 1
      %v1146 = vsel %vm1139, %v1143, %v1145
      %v1148 = vsel %vm1139, %v1145, 0.0
      %v1149 = vld [vmem:[%s23] sm:$0xff]
      %v1150 = vld [vmem:[%s23 + $0x8] sm:$0xff]
      %v1151 = vld [vmem:[%s23 + $0x10] sm:$0xff]
      %v1152 = vld [vmem:[%s23 + $0x18] sm:$0x1]
      %v1153 = vld [vmem:[%s23 + $0x20] sm:$0x1]
      %v1154 = vld [vmem:[%s23 + $0x28] sm:$0x1]
      %v1155 = vld [vmem:[%s25] sm:$0xff]
      %v1156 = vld [vmem:[%s25 + $0x8] sm:$0xff]
      %v1157 = vld [vmem:[%s25 + $0x10] sm:$0xff]
      %v1158 = vld [vmem:[%s25 + $0x18] sm:$0x1]
      %v1159 = vld [vmem:[%s25 + $0x20] sm:$0x1]
      %v1160 = vld [vmem:[%s25 + $0x28] sm:$0x1]
      %vm1161 = vcmask 72704
      %v1162 = vsel %vm1161, %v1142, 0
      %v1164 = vsel %vm1161, %v1144, 0
      %v1166 = vsel %vm1161, %v1146, 0
      %v1169 = vsel %vm1161, %v1148, 0
      %vm1171 = vcmask 1040384
      %v1173 = vsel %vm1171, %v1158, 0
      %v1176 = vsel %vm1171, %v1159, 0
      %v1179 = vsel %vm1171, %v1160, 0
      %1181 = vmatprep.subr.mxu0 0.0
      %1182 = vmatpush1.msra.mxu0 0.0
      %1183 = vmatprep.subr.mxu0 0.0
      %1184 = vmatpush1.msra.mxu0 0.0
      %1185 = vmatprep.subr.mxu0 0.0
      %1186 = vmatpush1.msra.mxu0 0.0
      %1187 = vmatprep.subr.mxu0 0.0
      %1188 = vmatpush1.msra.mxu0 0.0
      %1189 = vmatprep.subr.mxu0 0.0
      %1190 = vmatpush1.msra.mxu0 0.0
      %1191 = vmatprep.subr.mxu0 0.0
      %1192 = vmatpush1.msra.mxu0 0.0
      %1193 = vmatprep.subr.mxu0 0.0
      %1194 = vmatpush1.msra.mxu0 0.0
      %1195 = vmatprep.subr.mxu0 0.0
      %1196 = vmatpush1.msra.mxu0 0.0
      %1197 = vmatprep.subr.mxu0 0.0
      %1198 = vmatpush1.msra.mxu0 0.0
      %1199 = vmatprep.subr.mxu0 0.0
      %1200 = vmatpush1.msra.mxu0 0.0
      %1201 = vmatprep.subr.mxu0 0.0
      %1202 = vmatpush1.msra.mxu0 0.0
      %1203 = vmatprep.subr.mxu0 0.0
      %1204 = vmatpush1.msra.mxu0 0.0
      %1205 = vmatprep.subr.mxu0 0.0
      %1206 = vmatpush1.msra.mxu0 0.0
      %1207 = vmatprep.subr.mxu0 0.0
      %1208 = vmatpush1.msra.mxu0 0.0
      %1209 = vmatprep.subr.mxu0 %v1176
      %1210 = vmatpush1.msra.mxu0 %v1173
      %1211 = vmatprep.subr.mxu0 %v1156
      %1212 = vmatpush1.msra.mxu0 %v1155
      %1213 = vmatprep.subr.mxu0 0.0
      %1214 = vmatpush2.msra.mxu0 0.0
      %1215 = vmatprep.subr.mxu0 0.0
      %1216 = vmatpush2.msra.mxu0 0.0
      %1217 = vmatprep.subr.mxu0 0.0
      %1218 = vmatpush2.msra.mxu0 0.0
      %1219 = vmatprep.subr.mxu0 0.0
      %1220 = vmatpush2.msra.mxu0 0.0
      %1221 = vmatprep.subr.mxu0 0.0
      %1222 = vmatpush2.msra.mxu0 0.0
      %1223 = vmatprep.subr.mxu0 0.0
      %1224 = vmatpush2.msra.mxu0 0.0
      %1225 = vmatprep.subr.mxu0 0.0
      %1226 = vmatpush2.msra.mxu0 0.0
      %1227 = vmatprep.subr.mxu0 0.0
      %1228 = vmatpush2.msra.mxu0 0.0
      %1229 = vmatprep.subr.mxu0 0.0
      %1230 = vmatpush2.msra.mxu0 0.0
      %1231 = vmatprep.subr.mxu0 0.0
      %1232 = vmatpush2.msra.mxu0 0.0
      %1233 = vmatprep.subr.mxu0 0.0
      %1234 = vmatpush2.msra.mxu0 0.0
      %1235 = vmatprep.subr.mxu0 0.0
      %1236 = vmatpush2.msra.mxu0 0.0
      %1237 = vmatprep.subr.mxu0 0.0
      %1238 = vmatpush2.msra.mxu0 0.0
      %1239 = vmatprep.subr.mxu0 0.0
      %1240 = vmatpush2.msra.mxu0 0.0
      %1241 = vmatprep.subr.mxu0 0.0
      %1242 = vmatpush2.msra.mxu0 0.0
      %1243 = vmatprep.subr.mxu0 0.0
      %1244 = vmatpush2.msra.mxu0 0.0
      %1245 = vmatprep.mubr.f32.mxu0 0.0
      %1246 = vmatmul.mubr.f32.gmra.mxu0 %v1162
      %v1247 = vpop.f32.mrf.mxu0
      %v1248 = vadd.f32 0.0, %v1247
      %v1249 = vpop.f32.mrf.mxu0
      %v1250 = vadd.f32 0.0, %v1249
      %1251 = vmatprep.mubr.f32.mxu0 0.0
      %1252 = vmatmul.mubr.f32.gmra.mxu0 %v1164
      %v1253 = vpop.f32.mrf.mxu0
      %v1254 = vadd.f32 0.0, %v1253
      %v1255 = vpop.f32.mrf.mxu0
      %v1256 = vadd.f32 0.0, %v1255
      %1257 = vmatprep.mubr.f32.mxu0 0.0
      %1258 = vmatmul.mubr.f32.gmra.mxu0 %v1166
      %v1259 = vpop.f32.mrf.mxu0
      %v1260 = vadd.f32 0.0, %v1259
      %v1261 = vpop.f32.mrf.mxu0
      %v1262 = vadd.f32 0.0, %v1261
      %1263 = vmatprep.mubr.f32.mxu0 0.0
      %1264 = vmatmul.mubr.f32.gmra.mxu0 %v1169
      %v1265 = vpop.f32.mrf.mxu0
      %v1266 = vadd.f32 0.0, %v1265
      %v1267 = vpop.f32.mrf.mxu0
      %v1268 = vadd.f32 0.0, %v1267
      %1269 = vdwg.mxu0
      %1270 = vmatprep.subr.mxu0 0.0
      %1271 = vmatpush1.msra.mxu0 0.0
      %1272 = vmatprep.subr.mxu0 0.0
      %1273 = vmatpush1.msra.mxu0 0.0
      %1274 = vmatprep.subr.mxu0 0.0
      %1275 = vmatpush1.msra.mxu0 0.0
      %1276 = vmatprep.subr.mxu0 0.0
      %1277 = vmatpush1.msra.mxu0 0.0
      %1278 = vmatprep.subr.mxu0 0.0
      %1279 = vmatpush1.msra.mxu0 0.0
      %1280 = vmatprep.subr.mxu0 0.0
      %1281 = vmatpush1.msra.mxu0 0.0
      %1282 = vmatprep.subr.mxu0 0.0
      %1283 = vmatpush1.msra.mxu0 0.0
      %1284 = vmatprep.subr.mxu0 0.0
      %1285 = vmatpush1.msra.mxu0 0.0
      %1286 = vmatprep.subr.mxu0 0.0
      %1287 = vmatpush1.msra.mxu0 0.0
      %1288 = vmatprep.subr.mxu0 0.0
      %1289 = vmatpush1.msra.mxu0 0.0
      %1290 = vmatprep.subr.mxu0 0.0
      %1291 = vmatpush1.msra.mxu0 0.0
      %1292 = vmatprep.subr.mxu0 0.0
      %1293 = vmatpush1.msra.mxu0 0.0
      %1294 = vmatprep.subr.mxu0 0.0
      %1295 = vmatpush1.msra.mxu0 0.0
      %1296 = vmatprep.subr.mxu0 0.0
      %1297 = vmatpush1.msra.mxu0 0.0
      %1298 = vmatprep.subr.mxu0 0.0
      %1299 = vmatpush1.msra.mxu0 %v1179
      %1300 = vmatprep.subr.mxu0 0.0
      %1301 = vmatpush1.msra.mxu0 %v1157
      %1302 = vmatprep.subr.mxu0 0.0
      %1303 = vmatpush2.msra.mxu0 0.0
      %1304 = vmatprep.subr.mxu0 0.0
      %1305 = vmatpush2.msra.mxu0 0.0
      %1306 = vmatprep.subr.mxu0 0.0
      %1307 = vmatpush2.msra.mxu0 0.0
      %1308 = vmatprep.subr.mxu0 0.0
      %1309 = vmatpush2.msra.mxu0 0.0
      %1310 = vmatprep.subr.mxu0 0.0
      %1311 = vmatpush2.msra.mxu0 0.0
      %1312 = vmatprep.subr.mxu0 0.0
      %1313 = vmatpush2.msra.mxu0 0.0
      %1314 = vmatprep.subr.mxu0 0.0
      %1315 = vmatpush2.msra.mxu0 0.0
      %1316 = vmatprep.subr.mxu0 0.0
      %1317 = vmatpush2.msra.mxu0 0.0
      %1318 = vmatprep.subr.mxu0 0.0
      %1319 = vmatpush2.msra.mxu0 0.0
      %1320 = vmatprep.subr.mxu0 0.0
      %1321 = vmatpush2.msra.mxu0 0.0
      %1322 = vmatprep.subr.mxu0 0.0
      %1323 = vmatpush2.msra.mxu0 0.0
      %1324 = vmatprep.subr.mxu0 0.0
      %1325 = vmatpush2.msra.mxu0 0.0
      %1326 = vmatprep.subr.mxu0 0.0
      %1327 = vmatpush2.msra.mxu0 0.0
      %1328 = vmatprep.subr.mxu0 0.0
      %1329 = vmatpush2.msra.mxu0 0.0
      %1330 = vmatprep.subr.mxu0 0.0
      %1331 = vmatpush2.msra.mxu0 0.0
      %1332 = vmatprep.subr.mxu0 0.0
      %1333 = vmatpush2.msra.mxu0 0.0
      %1334 = vmatprep.mubr.f32.mxu0 0.0
      %1335 = vmatmul.mubr.f32.gmra.mxu0 %v1162
      %v1336 = vpop.f32.mrf.mxu0
      %v1337 = vadd.f32 0.0, %v1336
      %v1338 = vpop.f32.mrf.mxu0
      %1339 = vmatprep.mubr.f32.mxu0 0.0
      %1340 = vmatmul.mubr.f32.gmra.mxu0 %v1164
      %v1341 = vpop.f32.mrf.mxu0
      %v1342 = vadd.f32 0.0, %v1341
      %v1343 = vpop.f32.mrf.mxu0
      %1344 = vmatprep.mubr.f32.mxu0 0.0
      %1345 = vmatmul.mubr.f32.gmra.mxu0 %v1166
      %v1346 = vpop.f32.mrf.mxu0
      %v1347 = vadd.f32 0.0, %v1346
      %v1348 = vpop.f32.mrf.mxu0
      %1349 = vmatprep.mubr.f32.mxu0 0.0
      %1350 = vmatmul.mubr.f32.gmra.mxu0 %v1169
      %v1351 = vpop.f32.mrf.mxu0
      %v1352 = vadd.f32 0.0, %v1351
      %v1353 = vpop.f32.mrf.mxu0
      %1354 = vdwg.mxu0
      %v1355 = vsel %vm1161, %v1131, 0
      %v1357 = vsel %vm1161, %v1132, 0
      %v1359 = vsel %vm1161, %v1136, 0
      %v1361 = vsel %vm1161, %v1138, 0
      %v1364 = vsel %vm1171, %v1152, 0
      %v1367 = vsel %vm1171, %v1153, 0
      %v1370 = vsel %vm1171, %v1154, 0
      %1372 = vmatprep.subr.mxu0 0.0
      %1373 = vmatpush1.msra.mxu0 0.0
      %1374 = vmatprep.subr.mxu0 0.0
      %1375 = vmatpush1.msra.mxu0 0.0
      %1376 = vmatprep.subr.mxu0 0.0
      %1377 = vmatpush1.msra.mxu0 0.0
      %1378 = vmatprep.subr.mxu0 0.0
      %1379 = vmatpush1.msra.mxu0 0.0
      %1380 = vmatprep.subr.mxu0 0.0
      %1381 = vmatpush1.msra.mxu0 0.0
      %1382 = vmatprep.subr.mxu0 0.0
      %1383 = vmatpush1.msra.mxu0 0.0
      %1384 = vmatprep.subr.mxu0 0.0
      %1385 = vmatpush1.msra.mxu0 0.0
      %1386 = vmatprep.subr.mxu0 0.0
      %1387 = vmatpush1.msra.mxu0 0.0
      %1388 = vmatprep.subr.mxu0 0.0
      %1389 = vmatpush1.msra.mxu0 0.0
      %1390 = vmatprep.subr.mxu0 0.0
      %1391 = vmatpush1.msra.mxu0 0.0
      %1392 = vmatprep.subr.mxu0 0.0
      %1393 = vmatpush1.msra.mxu0 0.0
      %1394 = vmatprep.subr.mxu0 0.0
      %1395 = vmatpush1.msra.mxu0 0.0
      %1396 = vmatprep.subr.mxu0 0.0
      %1397 = vmatpush1.msra.mxu0 0.0
      %1398 = vmatprep.subr.mxu0 0.0
      %1399 = vmatpush1.msra.mxu0 0.0
      %1400 = vmatprep.subr.mxu0 %v1367
      %1401 = vmatpush1.msra.mxu0 %v1364
      %1402 = vmatprep.subr.mxu0 %v1150
      %1403 = vmatpush1.msra.mxu0 %v1149
      %1404 = vmatprep.subr.mxu0 0.0
      %1405 = vmatpush2.msra.mxu0 0.0
      %1406 = vmatprep.subr.mxu0 0.0
      %1407 = vmatpush2.msra.mxu0 0.0
      %1408 = vmatprep.subr.mxu0 0.0
      %1409 = vmatpush2.msra.mxu0 0.0
      %1410 = vmatprep.subr.mxu0 0.0
      %1411 = vmatpush2.msra.mxu0 0.0
      %1412 = vmatprep.subr.mxu0 0.0
      %1413 = vmatpush2.msra.mxu0 0.0
      %1414 = vmatprep.subr.mxu0 0.0
      %1415 = vmatpush2.msra.mxu0 0.0
      %1416 = vmatprep.subr.mxu0 0.0
      %1417 = vmatpush2.msra.mxu0 0.0
      %1418 = vmatprep.subr.mxu0 0.0
      %1419 = vmatpush2.msra.mxu0 0.0
      %1420 = vmatprep.subr.mxu0 0.0
      %1421 = vmatpush2.msra.mxu0 0.0
      %1422 = vmatprep.subr.mxu0 0.0
      %1423 = vmatpush2.msra.mxu0 0.0
      %1424 = vmatprep.subr.mxu0 0.0
      %1425 = vmatpush2.msra.mxu0 0.0
      %1426 = vmatprep.subr.mxu0 0.0
      %1427 = vmatpush2.msra.mxu0 0.0
      %1428 = vmatprep.subr.mxu0 0.0
      %1429 = vmatpush2.msra.mxu0 0.0
      %1430 = vmatprep.subr.mxu0 0.0
      %1431 = vmatpush2.msra.mxu0 0.0
      %1432 = vmatprep.subr.mxu0 0.0
      %1433 = vmatpush2.msra.mxu0 0.0
      %1434 = vmatprep.subr.mxu0 0.0
      %1435 = vmatpush2.msra.mxu0 0.0
      %1436 = vmatprep.mubr.f32.mxu0 0.0
      %1437 = vmatmul.mubr.f32.gmra.mxu0 %v1355
      %v1438 = vpop.f32.mrf.mxu0
      %v1439 = vadd.f32 %v1248, %v1438
      %v1440 = vpop.f32.mrf.mxu0
      %v1441 = vadd.f32 %v1250, %v1440
      %1442 = vmatprep.mubr.f32.mxu0 0.0
      %1443 = vmatmul.mubr.f32.gmra.mxu0 %v1357
      %v1444 = vpop.f32.mrf.mxu0
      %v1445 = vadd.f32 %v1254, %v1444
      %v1446 = vpop.f32.mrf.mxu0
      %v1447 = vadd.f32 %v1256, %v1446
      %1448 = vmatprep.mubr.f32.mxu0 0.0
      %1449 = vmatmul.mubr.f32.gmra.mxu0 %v1359
      %v1450 = vpop.f32.mrf.mxu0
      %v1451 = vadd.f32 %v1260, %v1450
      %v1452 = vpop.f32.mrf.mxu0
      %v1453 = vadd.f32 %v1262, %v1452
      %1454 = vmatprep.mubr.f32.mxu0 0.0
      %1455 = vmatmul.mubr.f32.gmra.mxu0 %v1361
      %v1456 = vpop.f32.mrf.mxu0
      %v1457 = vadd.f32 %v1266, %v1456
      %v1458 = vpop.f32.mrf.mxu0
      %v1459 = vadd.f32 %v1268, %v1458
      %1460 = vdwg.mxu0
      %1461 = vmatprep.subr.mxu0 0.0
      %1462 = vmatpush1.msra.mxu0 0.0
      %1463 = vmatprep.subr.mxu0 0.0
      %1464 = vmatpush1.msra.mxu0 0.0
      %1465 = vmatprep.subr.mxu0 0.0
      %1466 = vmatpush1.msra.mxu0 0.0
      %1467 = vmatprep.subr.mxu0 0.0
      %1468 = vmatpush1.msra.mxu0 0.0
      %1469 = vmatprep.subr.mxu0 0.0
      %1470 = vmatpush1.msra.mxu0 0.0
      %1471 = vmatprep.subr.mxu0 0.0
      %1472 = vmatpush1.msra.mxu0 0.0
      %1473 = vmatprep.subr.mxu0 0.0
      %1474 = vmatpush1.msra.mxu0 0.0
      %1475 = vmatprep.subr.mxu0 0.0
      %1476 = vmatpush1.msra.mxu0 0.0
      %1477 = vmatprep.subr.mxu0 0.0
      %1478 = vmatpush1.msra.mxu0 0.0
      %1479 = vmatprep.subr.mxu0 0.0
      %1480 = vmatpush1.msra.mxu0 0.0
      %1481 = vmatprep.subr.mxu0 0.0
      %1482 = vmatpush1.msra.mxu0 0.0
      %1483 = vmatprep.subr.mxu0 0.0
      %1484 = vmatpush1.msra.mxu0 0.0
      %1485 = vmatprep.subr.mxu0 0.0
      %1486 = vmatpush1.msra.mxu0 0.0
      %1487 = vmatprep.subr.mxu0 0.0
      %1488 = vmatpush1.msra.mxu0 0.0
      %1489 = vmatprep.subr.mxu0 0.0
      %1490 = vmatpush1.msra.mxu0 %v1370
      %1491 = vmatprep.subr.mxu0 0.0
      %1492 = vmatpush1.msra.mxu0 %v1151
      %1493 = vmatprep.subr.mxu0 0.0
      %1494 = vmatpush2.msra.mxu0 0.0
      %1495 = vmatprep.subr.mxu0 0.0
      %1496 = vmatpush2.msra.mxu0 0.0
      %1497 = vmatprep.subr.mxu0 0.0
      %1498 = vmatpush2.msra.mxu0 0.0
      %1499 = vmatprep.subr.mxu0 0.0
      %1500 = vmatpush2.msra.mxu0 0.0
      %1501 = vmatprep.subr.mxu0 0.0
      %1502 = vmatpush2.msra.mxu0 0.0
      %1503 = vmatprep.subr.mxu0 0.0
      %1504 = vmatpush2.msra.mxu0 0.0
      %1505 = vmatprep.subr.mxu0 0.0
      %1506 = vmatpush2.msra.mxu0 0.0
      %1507 = vmatprep.subr.mxu0 0.0
      %1508 = vmatpush2.msra.mxu0 0.0
      %1509 = vmatprep.subr.mxu0 0.0
      %1510 = vmatpush2.msra.mxu0 0.0
      %1511 = vmatprep.subr.mxu0 0.0
      %1512 = vmatpush2.msra.mxu0 0.0
      %1513 = vmatprep.subr.mxu0 0.0
      %1514 = vmatpush2.msra.mxu0 0.0
      %1515 = vmatprep.subr.mxu0 0.0
      %1516 = vmatpush2.msra.mxu0 0.0
      %1517 = vmatprep.subr.mxu0 0.0
      %1518 = vmatpush2.msra.mxu0 0.0
      %1519 = vmatprep.subr.mxu0 0.0
      %1520 = vmatpush2.msra.mxu0 0.0
      %1521 = vmatprep.subr.mxu0 0.0
      %1522 = vmatpush2.msra.mxu0 0.0
      %1523 = vmatprep.subr.mxu0 0.0
      %1524 = vmatpush2.msra.mxu0 0.0
      %1525 = vmatprep.mubr.f32.mxu0 0.0
      %1526 = vmatmul.mubr.f32.gmra.mxu0 %v1355
      %v1527 = vpop.f32.mrf.mxu0
      %v1528 = vadd.f32 %v1337, %v1527
      %v1529 = vpop.f32.mrf.mxu0
      %1530 = vmatprep.mubr.f32.mxu0 0.0
      %1531 = vmatmul.mubr.f32.gmra.mxu0 %v1357
      %v1532 = vpop.f32.mrf.mxu0
      %v1533 = vadd.f32 %v1342, %v1532
      %v1534 = vpop.f32.mrf.mxu0
      %1535 = vmatprep.mubr.f32.mxu0 0.0
      %1536 = vmatmul.mubr.f32.gmra.mxu0 %v1359
      %v1537 = vpop.f32.mrf.mxu0
      %v1538 = vadd.f32 %v1347, %v1537
      %v1539 = vpop.f32.mrf.mxu0
      %1540 = vmatprep.mubr.f32.mxu0 0.0
      %1541 = vmatmul.mubr.f32.gmra.mxu0 %v1361
      %v1542 = vpop.f32.mrf.mxu0
      %v1543 = vadd.f32 %v1352, %v1542
      %v1544 = vpop.f32.mrf.mxu0
      %1545 = vdwg.mxu0
      %v1546 = vld [vmem:[%s27] sm:$0x7]
      %v1548 = vlaneseq
      %v1549 = vshrl.u32 %v1548, 7
      %v1550 = vsub.s32 0, %v1549
      %v1551 = vrot.slane %v1546, %v1550
      %v1552 = vlaneseq
      %v1553 = vshrl.u32 %v1552, 7
      %v1554 = vsub.s32 1, %v1553
      %v1555 = vrot.slane %v1546, %v1554
      %v1556 = vlaneseq
      %v1557 = vshrl.u32 %v1556, 7
      %v1558 = vsub.s32 2, %v1557
      %v1559 = vrot.slane %v1546, %v1558
      %v1563 = vadd.f32 %v1439, %v1551
      %v1564 = vadd.f32 %v1441, %v1555
      %v1565 = vadd.f32 %v1528, %v1559
      %v1566 = vadd.f32 %v1445, %v1551
      %v1567 = vadd.f32 %v1447, %v1555
      %v1568 = vadd.f32 %v1533, %v1559
      %v1569 = vadd.f32 %v1451, %v1551
      %v1570 = vadd.f32 %v1453, %v1555
      %v1571 = vadd.f32 %v1538, %v1559
      %v1572 = vadd.f32 %v1457, %v1551
      %v1573 = vadd.f32 %v1459, %v1555
      %v1574 = vadd.f32 %v1543, %v1559
      %v1575 = vld [vmem:[%s17] sm:$0xff]
      %v1576 = vld [vmem:[%s17 + $0x8] sm:$0xff]
      %v1577 = vld [vmem:[%s17 + $0x10] sm:$0xff]
      %v1578 = vld [vmem:[%s17 + $0x18] sm:$0xff]
      %1580 = vset.pattern.permute.xlu0 0
      %1581 = vperm.xlu0 %1580, %v1575
      %v1582 = vpop.permute.xlu0 %1581
      %1585 = vset.pattern.permute.xlu0 0
      %1586 = vperm.xlu0 %1585, %v1576
      %v1587 = vpop.permute.xlu0 %1586
      %1590 = vset.pattern.permute.xlu0 0
      %1591 = vperm.xlu0 %1590, %v1577
      %v1592 = vpop.permute.xlu0 %1591
      %1595 = vset.pattern.permute.xlu0 0
      %1596 = vperm.xlu0 %1595, %v1578
      %v1597 = vpop.permute.xlu0 %1596
      %v1599 = vmul.f32 %v1563, %v1582
      %v1600 = vmul.f32 %v1564, %v1582
      %v1601 = vmul.f32 %v1565, %v1582
      %v1602 = vmul.f32 %v1566, %v1587
      %v1603 = vmul.f32 %v1567, %v1587
      %v1604 = vmul.f32 %v1568, %v1587
      %v1605 = vmul.f32 %v1569, %v1592
      %v1606 = vmul.f32 %v1570, %v1592
      %v1607 = vmul.f32 %v1571, %v1592
      %v1608 = vmul.f32 %v1572, %v1597
      %v1609 = vmul.f32 %v1573, %v1597
      %v1610 = vmul.f32 %v1574, %v1597
      %v1611 = vadd.f32 %v1599, %v1602
      %v1612 = vadd.f32 %v1611, %v1605
      %v1613 = vadd.f32 %v1612, %v1608
      %v1614 = vrot.slane %v1613, 4
      %v1615 = vadd.f32 %v1613, %v1614
      %v1616 = vrot.slane %v1615, 2
      %v1617 = vadd.f32 %v1615, %v1616
      %v1618 = vrot.slane %v1617, 1
      %v1619 = vadd.f32 %v1617, %v1618
      %v1620 = vadd.f32 %v1600, %v1603
      %v1621 = vadd.f32 %v1620, %v1606
      %v1622 = vadd.f32 %v1621, %v1609
      %v1623 = vrot.slane %v1622, 4
      %v1624 = vadd.f32 %v1622, %v1623
      %v1625 = vrot.slane %v1624, 2
      %v1626 = vadd.f32 %v1624, %v1625
      %v1627 = vrot.slane %v1626, 1
      %v1628 = vadd.f32 %v1626, %v1627
      %v1629 = vadd.f32 %v1601, %v1604
      %v1630 = vadd.f32 %v1629, %v1607
      %v1631 = vadd.f32 %v1630, %v1610
      %v1632 = vrot.slane %v1631, 4
      %v1633 = vadd.f32 %v1631, %v1632
      %v1634 = vrot.slane %v1633, 2
      %v1635 = vadd.f32 %v1633, %v1634
      %v1636 = vrot.slane %v1635, 1
      %v1637 = vadd.f32 %v1635, %v1636
      %v1638 = vmul.f32 %v1619, 0.033333335
      %v1639 = vmul.f32 %v1628, 0.033333335
      %v1640 = vmul.f32 %v1637, 0.033333335
      %v1641 = vsub.f32 %v1563, %v1638
      %v1642 = vsub.f32 %v1564, %v1639
      %v1643 = vsub.f32 %v1565, %v1640
      %v1644 = vsub.f32 %v1566, %v1638
      %v1645 = vsub.f32 %v1567, %v1639
      %v1646 = vsub.f32 %v1568, %v1640
      %v1647 = vsub.f32 %v1569, %v1638
      %v1648 = vsub.f32 %v1570, %v1639
      %v1649 = vsub.f32 %v1571, %v1640
      %v1650 = vsub.f32 %v1572, %v1638
      %v1651 = vsub.f32 %v1573, %v1639
      %v1652 = vsub.f32 %v1574, %v1640
      %v1653 = vmul.f32 %v1641, %v1641
      %v1654 = vmul.f32 %v1642, %v1642
      %v1655 = vmul.f32 %v1643, %v1643
      %v1656 = vmul.f32 %v1644, %v1644
      %v1657 = vmul.f32 %v1645, %v1645
      %v1658 = vmul.f32 %v1646, %v1646
      %v1659 = vmul.f32 %v1647, %v1647
      %v1660 = vmul.f32 %v1648, %v1648
      %v1661 = vmul.f32 %v1649, %v1649
      %v1662 = vmul.f32 %v1650, %v1650
      %v1663 = vmul.f32 %v1651, %v1651
      %v1664 = vmul.f32 %v1652, %v1652
      %v1665 = vmul.f32 %v1653, %v1582
      %v1666 = vmul.f32 %v1654, %v1582
      %v1667 = vmul.f32 %v1655, %v1582
      %v1668 = vmul.f32 %v1656, %v1587
      %v1669 = vmul.f32 %v1657, %v1587
      %v1670 = vmul.f32 %v1658, %v1587
      %v1671 = vmul.f32 %v1659, %v1592
      %v1672 = vmul.f32 %v1660, %v1592
      %v1673 = vmul.f32 %v1661, %v1592
      %v1674 = vmul.f32 %v1662, %v1597
      %v1675 = vmul.f32 %v1663, %v1597
      %v1676 = vmul.f32 %v1664, %v1597
      %v1677 = vadd.f32 %v1665, %v1668
      %v1678 = vadd.f32 %v1677, %v1671
      %v1679 = vadd.f32 %v1678, %v1674
      %v1680 = vrot.slane %v1679, 4
      %v1681 = vadd.f32 %v1679, %v1680
      %v1682 = vrot.slane %v1681, 2
      %v1683 = vadd.f32 %v1681, %v1682
      %v1684 = vrot.slane %v1683, 1
      %v1685 = vadd.f32 %v1683, %v1684
      %v1686 = vadd.f32 %v1666, %v1669
      %v1687 = vadd.f32 %v1686, %v1672
      %v1688 = vadd.f32 %v1687, %v1675
      %v1689 = vrot.slane %v1688, 4
      %v1690 = vadd.f32 %v1688, %v1689
      %v1691 = vrot.slane %v1690, 2
      %v1692 = vadd.f32 %v1690, %v1691
      %v1693 = vrot.slane %v1692, 1
      %v1694 = vadd.f32 %v1692, %v1693
      %v1695 = vadd.f32 %v1667, %v1670
      %v1696 = vadd.f32 %v1695, %v1673
      %v1697 = vadd.f32 %v1696, %v1676
      %v1698 = vrot.slane %v1697, 4
      %v1699 = vadd.f32 %v1697, %v1698
      %v1700 = vrot.slane %v1699, 2
      %v1701 = vadd.f32 %v1699, %v1700
      %v1702 = vrot.slane %v1701, 1
      %v1703 = vadd.f32 %v1701, %v1702
      %v1704 = vmul.f32 %v1685, 0.033333335
      %v1705 = vmul.f32 %v1694, 0.033333335
      %v1706 = vmul.f32 %v1703, 0.033333335
      %v1707 = vadd.f32 %v1704, 1e-05
      %v1708 = vadd.f32 %v1705, 1e-05
      %v1709 = vadd.f32 %v1706, 1e-05
      %v1710 = vrsqrt.pop %v1707
      %v1711 = vrsqrt.pop %v1708
      %v1712 = vrsqrt.pop %v1709
      %v1713 = vmul.f32 %v1641, %v1710
      %v1714 = vmul.f32 %v1642, %v1711
      %v1715 = vmul.f32 %v1643, %v1712
      %v1716 = vmul.f32 %v1644, %v1710
      %v1717 = vmul.f32 %v1645, %v1711
      %v1718 = vmul.f32 %v1646, %v1712
      %v1719 = vmul.f32 %v1647, %v1710
      %v1720 = vmul.f32 %v1648, %v1711
      %v1721 = vmul.f32 %v1649, %v1712
      %v1722 = vmul.f32 %v1650, %v1710
      %v1723 = vmul.f32 %v1651, %v1711
      %v1724 = vmul.f32 %v1652, %v1712
      %v1725 = vld [vmem:[%s29] sm:$0x7]
      %v1727 = vlaneseq
      %v1728 = vshrl.u32 %v1727, 7
      %v1729 = vsub.s32 0, %v1728
      %v1730 = vrot.slane %v1725, %v1729
      %v1731 = vlaneseq
      %v1732 = vshrl.u32 %v1731, 7
      %v1733 = vsub.s32 1, %v1732
      %v1734 = vrot.slane %v1725, %v1733
      %v1735 = vlaneseq
      %v1736 = vshrl.u32 %v1735, 7
      %v1737 = vsub.s32 2, %v1736
      %v1738 = vrot.slane %v1725, %v1737
      %v1742 = vmul.f32 %v1713, %v1730
      %v1743 = vmul.f32 %v1714, %v1734
      %v1744 = vmul.f32 %v1715, %v1738
      %v1745 = vmul.f32 %v1716, %v1730
      %v1746 = vmul.f32 %v1717, %v1734
      %v1747 = vmul.f32 %v1718, %v1738
      %v1748 = vmul.f32 %v1719, %v1730
      %v1749 = vmul.f32 %v1720, %v1734
      %v1750 = vmul.f32 %v1721, %v1738
      %v1751 = vmul.f32 %v1722, %v1730
      %v1752 = vmul.f32 %v1723, %v1734
      %v1753 = vmul.f32 %v1724, %v1738
      %v1754 = vld [vmem:[%s31] sm:$0x7]
      %v1756 = vlaneseq
      %v1757 = vshrl.u32 %v1756, 7
      %v1758 = vsub.s32 0, %v1757
      %v1759 = vrot.slane %v1754, %v1758
      %v1760 = vlaneseq
      %v1761 = vshrl.u32 %v1760, 7
      %v1762 = vsub.s32 1, %v1761
      %v1763 = vrot.slane %v1754, %v1762
      %v1764 = vlaneseq
      %v1765 = vshrl.u32 %v1764, 7
      %v1766 = vsub.s32 2, %v1765
      %v1767 = vrot.slane %v1754, %v1766
      %v1771 = vadd.f32 %v1742, %v1759
      %v1772 = vadd.f32 %v1743, %v1763
      %v1773 = vadd.f32 %v1744, %v1767
      %v1774 = vadd.f32 %v1745, %v1759
      %v1775 = vadd.f32 %v1746, %v1763
      %v1776 = vadd.f32 %v1747, %v1767
      %v1777 = vadd.f32 %v1748, %v1759
      %v1778 = vadd.f32 %v1749, %v1763
      %v1779 = vadd.f32 %v1750, %v1767
      %v1780 = vadd.f32 %v1751, %v1759
      %v1781 = vadd.f32 %v1752, %v1763
      %v1782 = vadd.f32 %v1753, %v1767
      %v1783 = vmax.f32 %v1771, 0.0
      %v1784 = vmax.f32 %v1772, 0.0
      %v1785 = vmax.f32 %v1773, 0.0
      %v1786 = vmax.f32 %v1774, 0.0
      %v1787 = vmax.f32 %v1775, 0.0
      %v1788 = vmax.f32 %v1776, 0.0
      %v1789 = vmax.f32 %v1777, 0.0
      %v1790 = vmax.f32 %v1778, 0.0
      %v1791 = vmax.f32 %v1779, 0.0
      %v1792 = vmax.f32 %v1780, 0.0
      %v1793 = vmax.f32 %v1781, 0.0
      %v1794 = vmax.f32 %v1782, 0.0
      %v1795 = vmul.f32 %v1783, %v1582
      %v1796 = vmul.f32 %v1784, %v1582
      %v1797 = vmul.f32 %v1785, %v1582
      %v1798 = vmul.f32 %v1786, %v1587
      %v1799 = vmul.f32 %v1787, %v1587
      %v1800 = vmul.f32 %v1788, %v1587
      %v1801 = vmul.f32 %v1789, %v1592
      %v1802 = vmul.f32 %v1790, %v1592
      %v1803 = vmul.f32 %v1791, %v1592
      %v1804 = vmul.f32 %v1792, %v1597
      %v1805 = vmul.f32 %v1793, %v1597
      %v1806 = vmul.f32 %v1794, %v1597
      %v1819 = vrot.slane %v1795, 7
      %v1820 = vrot.slane %v1796, 7
      %v1821 = vrot.slane %v1797, 7
      %v1822 = vrot.slane %v1798, 7
      %v1823 = vsel %vm1171, %v1819, %v1822
      %v1824 = vrot.slane %v1799, 7
      %v1825 = vsel %vm1171, %v1820, %v1824
      %v1826 = vrot.slane %v1800, 7
      %v1827 = vsel %vm1171, %v1821, %v1826
      %v1828 = vrot.slane %v1801, 7
      %v1829 = vsel %vm1171, %v1822, %v1828
      %v1830 = vrot.slane %v1802, 7
      %v1831 = vsel %vm1171, %v1824, %v1830
      %v1832 = vrot.slane %v1803, 7
      %v1833 = vsel %vm1171, %v1826, %v1832
      %v1834 = vrot.slane %v1804, 7
      %v1835 = vsel %vm1171, %v1828, %v1834
      %v1836 = vrot.slane %v1805, 7
      %v1837 = vsel %vm1171, %v1830, %v1836
      %v1838 = vrot.slane %v1806, 7
      %v1839 = vsel %vm1171, %v1832, %v1838
      %v1852 = vsel %vm1171, 0.0, %v1819
      %v1853 = vsel %vm1171, 0.0, %v1820
      %v1854 = vsel %vm1171, 0.0, %v1821
      %v1855 = vld [vmem:[%s33] sm:$0xff]
      %v1856 = vld [vmem:[%s33 + $0x8] sm:$0xff]
      %v1857 = vld [vmem:[%s33 + $0x10] sm:$0xff]
      %v1858 = vld [vmem:[%s33 + $0x18] sm:$0xff]
      %v1859 = vld [vmem:[%s33 + $0x20] sm:$0xff]
      %v1860 = vld [vmem:[%s33 + $0x28] sm:$0xff]
      %v1861 = vld [vmem:[%s33 + $0x30] sm:$0xff]
      %v1862 = vld [vmem:[%s33 + $0x38] sm:$0xff]
      %v1863 = vld [vmem:[%s33 + $0x40] sm:$0xff]
      %v1864 = vld [vmem:[%s33 + $0x48] sm:$0xff]
      %v1865 = vld [vmem:[%s33 + $0x50] sm:$0xff]
      %v1866 = vld [vmem:[%s33 + $0x58] sm:$0xff]
      %v1867 = vld [vmem:[%s33 + $0x60] sm:$0xff]
      %v1868 = vld [vmem:[%s33 + $0x68] sm:$0xff]
      %v1869 = vld [vmem:[%s33 + $0x70] sm:$0xff]
      %v1870 = vld [vmem:[%s33 + $0x78] sm:$0xff]
      %v1871 = vld [vmem:[%s33 + $0x80] sm:$0xff]
      %v1872 = vld [vmem:[%s33 + $0x88] sm:$0xff]
      %v1873 = vld [vmem:[%s33 + $0x90] sm:$0xff]
      %v1874 = vld [vmem:[%s33 + $0x98] sm:$0xff]
      %v1875 = vld [vmem:[%s33 + $0xa0] sm:$0xff]
      %v1876 = vld [vmem:[%s33 + $0xa8] sm:$0xff]
      %v1877 = vld [vmem:[%s33 + $0xb0] sm:$0xff]
      %v1878 = vld [vmem:[%s33 + $0xb8] sm:$0xff]
      %v1879 = vld [vmem:[%s33 + $0xc0] sm:$0xff]
      %v1880 = vld [vmem:[%s33 + $0xc8] sm:$0xff]
      %v1881 = vld [vmem:[%s33 + $0xd0] sm:$0xff]
      %v1882 = vld [vmem:[%s33 + $0xd8] sm:$0xff]
      %v1883 = vld [vmem:[%s33 + $0xe0] sm:$0xff]
      %v1884 = vld [vmem:[%s33 + $0xe8] sm:$0xff]
      %v1885 = vld [vmem:[%s33 + $0xf0] sm:$0xff]
      %v1886 = vld [vmem:[%s33 + $0xf8] sm:$0xff]
      %v1887 = vld [vmem:[%s33 + $0x100] sm:$0xff]
      %v1888 = vld [vmem:[%s33 + $0x108] sm:$0xff]
      %v1889 = vld [vmem:[%s33 + $0x110] sm:$0xff]
      %v1890 = vld [vmem:[%s33 + $0x118] sm:$0xff]
      %v1891 = vld [vmem:[%s33 + $0x120] sm:$0xff]
      %v1892 = vld [vmem:[%s33 + $0x128] sm:$0xff]
      %v1893 = vld [vmem:[%s33 + $0x130] sm:$0xff]
      %v1894 = vld [vmem:[%s33 + $0x138] sm:$0xff]
      %v1895 = vld [vmem:[%s33 + $0x140] sm:$0xff]
      %v1896 = vld [vmem:[%s33 + $0x148] sm:$0xff]
      %v1897 = vld [vmem:[%s33 + $0x150] sm:$0xff]
      %v1898 = vld [vmem:[%s33 + $0x158] sm:$0xff]
      %v1899 = vld [vmem:[%s33 + $0x160] sm:$0xff]
      %v1900 = vld [vmem:[%s33 + $0x168] sm:$0xff]
      %v1901 = vld [vmem:[%s33 + $0x170] sm:$0xff]
      %v1902 = vld [vmem:[%s33 + $0x178] sm:$0xff]
      %v1903 = vld [vmem:[%s33 + $0x180] sm:$0xff]
      %v1904 = vld [vmem:[%s33 + $0x188] sm:$0xff]
      %v1905 = vld [vmem:[%s33 + $0x190] sm:$0xff]
      %v1906 = vld [vmem:[%s33 + $0x198] sm:$0xff]
      %v1907 = vld [vmem:[%s33 + $0x1a0] sm:$0xff]
      %v1908 = vld [vmem:[%s33 + $0x1a8] sm:$0xff]
      %v1909 = vld [vmem:[%s33 + $0x1b0] sm:$0xff]
      %v1910 = vld [vmem:[%s33 + $0x1b8] sm:$0xff]
      %v1911 = vld [vmem:[%s33 + $0x1c0] sm:$0xff]
      %v1912 = vld [vmem:[%s33 + $0x1c8] sm:$0xff]
      %v1913 = vld [vmem:[%s33 + $0x1d0] sm:$0xff]
      %v1914 = vld [vmem:[%s33 + $0x1d8] sm:$0xff]
      %v1915 = vld [vmem:[%s33 + $0x1e0] sm:$0xff]
      %v1916 = vld [vmem:[%s33 + $0x1e8] sm:$0xff]
      %v1917 = vld [vmem:[%s33 + $0x1f0] sm:$0xff]
      %v1918 = vld [vmem:[%s33 + $0x1f8] sm:$0xff]
      %v1919 = vld [vmem:[%s33 + $0x200] sm:$0xff]
      %v1920 = vld [vmem:[%s33 + $0x208] sm:$0xff]
      %v1921 = vld [vmem:[%s33 + $0x210] sm:$0xff]
      %v1922 = vld [vmem:[%s33 + $0x218] sm:$0xff]
      %v1923 = vld [vmem:[%s33 + $0x220] sm:$0xff]
      %v1924 = vld [vmem:[%s33 + $0x228] sm:$0xff]
      %v1925 = vld [vmem:[%s33 + $0x230] sm:$0xff]
      %v1926 = vld [vmem:[%s33 + $0x238] sm:$0xff]
      %v1927 = vld [vmem:[%s33 + $0x240] sm:$0xff]
      %v1928 = vld [vmem:[%s33 + $0x248] sm:$0xff]
      %v1929 = vld [vmem:[%s33 + $0x250] sm:$0xff]
      %v1930 = vld [vmem:[%s33 + $0x258] sm:$0xff]
      %v1931 = vld [vmem:[%s33 + $0x260] sm:$0xff]
      %v1932 = vld [vmem:[%s33 + $0x268] sm:$0xff]
      %v1933 = vld [vmem:[%s33 + $0x270] sm:$0xff]
      %v1934 = vld [vmem:[%s33 + $0x278] sm:$0xff]
      %v1935 = vld [vmem:[%s33 + $0x280] sm:$0xff]
      %v1936 = vld [vmem:[%s33 + $0x288] sm:$0xff]
      %v1937 = vld [vmem:[%s33 + $0x290] sm:$0xff]
      %v1938 = vld [vmem:[%s33 + $0x298] sm:$0xff]
      %v1939 = vld [vmem:[%s33 + $0x2a0] sm:$0xff]
      %v1940 = vld [vmem:[%s33 + $0x2a8] sm:$0xff]
      %v1941 = vld [vmem:[%s33 + $0x2b0] sm:$0xff]
      %v1942 = vld [vmem:[%s33 + $0x2b8] sm:$0xff]
      %v1943 = vld [vmem:[%s33 + $0x2c0] sm:$0xff]
      %v1944 = vld [vmem:[%s33 + $0x2c8] sm:$0xff]
      %v1945 = vld [vmem:[%s33 + $0x2d0] sm:$0xff]
      %v1946 = vld [vmem:[%s33 + $0x2d8] sm:$0xff]
      %v1947 = vld [vmem:[%s33 + $0x2e0] sm:$0xff]
      %v1948 = vld [vmem:[%s33 + $0x2e8] sm:$0xff]
      %v1949 = vld [vmem:[%s33 + $0x2f0] sm:$0xff]
      %v1950 = vld [vmem:[%s33 + $0x2f8] sm:$0xff]
      %v1951 = vld [vmem:[%s33 + $0x300] sm:$0xff]
      %v1952 = vld [vmem:[%s33 + $0x308] sm:$0xff]
      %v1953 = vld [vmem:[%s33 + $0x310] sm:$0xff]
      %v1954 = vld [vmem:[%s33 + $0x318] sm:$0xff]
      %v1955 = vld [vmem:[%s33 + $0x320] sm:$0xff]
      %v1956 = vld [vmem:[%s33 + $0x328] sm:$0xff]
      %v1957 = vld [vmem:[%s33 + $0x330] sm:$0xff]
      %v1958 = vld [vmem:[%s33 + $0x338] sm:$0xff]
      %v1959 = vld [vmem:[%s33 + $0x340] sm:$0xff]
      %v1960 = vld [vmem:[%s33 + $0x348] sm:$0xff]
      %v1961 = vld [vmem:[%s33 + $0x350] sm:$0xff]
      %v1962 = vld [vmem:[%s33 + $0x358] sm:$0xff]
      %v1963 = vld [vmem:[%s33 + $0x360] sm:$0xff]
      %v1964 = vld [vmem:[%s33 + $0x368] sm:$0xff]
      %v1965 = vld [vmem:[%s33 + $0x370] sm:$0xff]
      %v1966 = vld [vmem:[%s33 + $0x378] sm:$0xff]
      %v1967 = vld [vmem:[%s33 + $0x380] sm:$0xff]
      %v1968 = vld [vmem:[%s33 + $0x388] sm:$0xff]
      %v1969 = vld [vmem:[%s33 + $0x390] sm:$0xff]
      %v1970 = vld [vmem:[%s33 + $0x398] sm:$0xff]
      %v1971 = vld [vmem:[%s33 + $0x3a0] sm:$0xff]
      %v1972 = vld [vmem:[%s33 + $0x3a8] sm:$0xff]
      %v1973 = vld [vmem:[%s33 + $0x3b0] sm:$0xff]
      %v1974 = vld [vmem:[%s33 + $0x3b8] sm:$0xff]
      %v1975 = vld [vmem:[%s33 + $0x3c0] sm:$0xff]
      %v1976 = vld [vmem:[%s33 + $0x3c8] sm:$0xff]
      %v1977 = vld [vmem:[%s33 + $0x3d0] sm:$0xff]
      %v1978 = vld [vmem:[%s33 + $0x3d8] sm:$0xff]
      %v1979 = vld [vmem:[%s33 + $0x3e0] sm:$0xff]
      %v1980 = vld [vmem:[%s33 + $0x3e8] sm:$0xff]
      %v1981 = vld [vmem:[%s33 + $0x3f0] sm:$0xff]
      %v1982 = vld [vmem:[%s33 + $0x3f8] sm:$0xff]
      %v1983 = vld [vmem:[%s33 + $0x400] sm:$0xff]
      %v1984 = vld [vmem:[%s33 + $0x408] sm:$0xff]
      %v1985 = vld [vmem:[%s33 + $0x410] sm:$0xff]
      %v1986 = vld [vmem:[%s33 + $0x418] sm:$0xff]
      %v1987 = vld [vmem:[%s33 + $0x420] sm:$0xff]
      %v1988 = vld [vmem:[%s33 + $0x428] sm:$0xff]
      %v1989 = vld [vmem:[%s33 + $0x430] sm:$0xff]
      %v1990 = vld [vmem:[%s33 + $0x438] sm:$0xff]
      %v1991 = vld [vmem:[%s33 + $0x440] sm:$0xff]
      %v1992 = vld [vmem:[%s33 + $0x448] sm:$0xff]
      %v1993 = vld [vmem:[%s33 + $0x450] sm:$0xff]
      %v1994 = vld [vmem:[%s33 + $0x458] sm:$0xff]
      %v1995 = vld [vmem:[%s33 + $0x460] sm:$0xff]
      %v1996 = vld [vmem:[%s33 + $0x468] sm:$0xff]
      %v1997 = vld [vmem:[%s33 + $0x470] sm:$0xff]
      %v1998 = vld [vmem:[%s33 + $0x478] sm:$0xff]
      %v1999 = vld [vmem:[%s33 + $0x480] sm:$0xff]
      %v2000 = vld [vmem:[%s33 + $0x488] sm:$0xff]
      %v2001 = vld [vmem:[%s33 + $0x490] sm:$0xff]
      %v2002 = vld [vmem:[%s33 + $0x498] sm:$0xff]
      %v2003 = vld [vmem:[%s33 + $0x4a0] sm:$0xff]
      %v2004 = vld [vmem:[%s33 + $0x4a8] sm:$0xff]
      %v2005 = vld [vmem:[%s33 + $0x4b0] sm:$0xff]
      %v2006 = vld [vmem:[%s33 + $0x4b8] sm:$0xff]
      %v2007 = vld [vmem:[%s33 + $0x4c0] sm:$0xff]
      %v2008 = vld [vmem:[%s33 + $0x4c8] sm:$0xff]
      %v2009 = vld [vmem:[%s33 + $0x4d0] sm:$0xff]
      %v2010 = vld [vmem:[%s33 + $0x4d8] sm:$0xff]
      %v2011 = vld [vmem:[%s33 + $0x4e0] sm:$0xff]
      %v2012 = vld [vmem:[%s33 + $0x4e8] sm:$0xff]
      %v2013 = vld [vmem:[%s33 + $0x4f0] sm:$0xff]
      %v2014 = vld [vmem:[%s33 + $0x4f8] sm:$0xff]
      %v2015 = vld [vmem:[%s33 + $0x500] sm:$0xff]
      %v2016 = vld [vmem:[%s33 + $0x508] sm:$0xff]
      %v2017 = vld [vmem:[%s33 + $0x510] sm:$0xff]
      %v2018 = vld [vmem:[%s33 + $0x518] sm:$0xff]
      %v2019 = vld [vmem:[%s33 + $0x520] sm:$0xff]
      %v2020 = vld [vmem:[%s33 + $0x528] sm:$0xff]
      %v2021 = vld [vmem:[%s33 + $0x530] sm:$0xff]
      %v2022 = vld [vmem:[%s33 + $0x538] sm:$0xff]
      %v2023 = vld [vmem:[%s33 + $0x540] sm:$0xff]
      %v2024 = vld [vmem:[%s33 + $0x548] sm:$0xff]
      %v2025 = vld [vmem:[%s33 + $0x550] sm:$0xff]
      %v2026 = vld [vmem:[%s33 + $0x558] sm:$0xff]
      %v2027 = vld [vmem:[%s33 + $0x560] sm:$0xff]
      %v2028 = vld [vmem:[%s33 + $0x568] sm:$0xff]
      %v2029 = vld [vmem:[%s33 + $0x570] sm:$0xff]
      %v2030 = vld [vmem:[%s33 + $0x578] sm:$0xff]
      %v2031 = vld [vmem:[%s33 + $0x580] sm:$0xff]
      %v2032 = vld [vmem:[%s33 + $0x588] sm:$0xff]
      %v2033 = vld [vmem:[%s33 + $0x590] sm:$0xff]
      %v2034 = vld [vmem:[%s33 + $0x598] sm:$0xff]
      %v2035 = vld [vmem:[%s33 + $0x5a0] sm:$0xff]
      %v2036 = vld [vmem:[%s33 + $0x5a8] sm:$0xff]
      %v2037 = vld [vmem:[%s33 + $0x5b0] sm:$0xff]
      %v2038 = vld [vmem:[%s33 + $0x5b8] sm:$0xff]
      %v2039 = vld [vmem:[%s33 + $0x5c0] sm:$0xff]
      %v2040 = vld [vmem:[%s33 + $0x5c8] sm:$0xff]
      %v2041 = vld [vmem:[%s33 + $0x5d0] sm:$0xff]
      %v2042 = vld [vmem:[%s33 + $0x5d8] sm:$0xff]
      %v2043 = vld [vmem:[%s33 + $0x5e0] sm:$0xff]
      %v2044 = vld [vmem:[%s33 + $0x5e8] sm:$0xff]
      %v2045 = vld [vmem:[%s33 + $0x5f0] sm:$0xff]
      %v2046 = vld [vmem:[%s33 + $0x5f8] sm:$0xff]
      %v2047 = vld [vmem:[%s33 + $0x600] sm:$0xff]
      %v2048 = vld [vmem:[%s33 + $0x608] sm:$0xff]
      %v2049 = vld [vmem:[%s33 + $0x610] sm:$0xff]
      %v2050 = vld [vmem:[%s33 + $0x618] sm:$0xff]
      %v2051 = vld [vmem:[%s33 + $0x620] sm:$0xff]
      %v2052 = vld [vmem:[%s33 + $0x628] sm:$0xff]
      %v2053 = vld [vmem:[%s33 + $0x630] sm:$0xff]
      %v2054 = vld [vmem:[%s33 + $0x638] sm:$0xff]
      %v2055 = vld [vmem:[%s33 + $0x640] sm:$0xff]
      %v2056 = vld [vmem:[%s33 + $0x648] sm:$0xff]
      %v2057 = vld [vmem:[%s33 + $0x650] sm:$0xff]
      %v2058 = vld [vmem:[%s33 + $0x658] sm:$0xff]
      %v2059 = vld [vmem:[%s33 + $0x660] sm:$0xff]
      %v2060 = vld [vmem:[%s33 + $0x668] sm:$0xff]
      %v2061 = vld [vmem:[%s33 + $0x670] sm:$0xff]
      %v2062 = vld [vmem:[%s33 + $0x678] sm:$0xff]
      %v2063 = vld [vmem:[%s33 + $0x680] sm:$0xff]
      %v2064 = vld [vmem:[%s33 + $0x688] sm:$0xff]
      %v2065 = vld [vmem:[%s33 + $0x690] sm:$0xff]
      %v2066 = vld [vmem:[%s33 + $0x698] sm:$0xff]
      %v2067 = vld [vmem:[%s33 + $0x6a0] sm:$0xff]
      %v2068 = vld [vmem:[%s33 + $0x6a8] sm:$0xff]
      %v2069 = vld [vmem:[%s33 + $0x6b0] sm:$0xff]
      %v2070 = vld [vmem:[%s33 + $0x6b8] sm:$0xff]
      %v2071 = vld [vmem:[%s33 + $0x6c0] sm:$0xff]
      %v2072 = vld [vmem:[%s33 + $0x6c8] sm:$0xff]
      %v2073 = vld [vmem:[%s33 + $0x6d0] sm:$0xff]
      %v2074 = vld [vmem:[%s33 + $0x6d8] sm:$0xff]
      %v2075 = vld [vmem:[%s33 + $0x6e0] sm:$0xff]
      %v2076 = vld [vmem:[%s33 + $0x6e8] sm:$0xff]
      %v2077 = vld [vmem:[%s33 + $0x6f0] sm:$0xff]
      %v2078 = vld [vmem:[%s33 + $0x6f8] sm:$0xff]
      %v2079 = vld [vmem:[%s33 + $0x700] sm:$0xff]
      %v2080 = vld [vmem:[%s33 + $0x708] sm:$0xff]
      %v2081 = vld [vmem:[%s33 + $0x710] sm:$0xff]
      %v2082 = vld [vmem:[%s33 + $0x718] sm:$0xff]
      %v2083 = vld [vmem:[%s33 + $0x720] sm:$0xff]
      %v2084 = vld [vmem:[%s33 + $0x728] sm:$0xff]
      %v2085 = vld [vmem:[%s33 + $0x730] sm:$0xff]
      %v2086 = vld [vmem:[%s33 + $0x738] sm:$0xff]
      %v2087 = vld [vmem:[%s33 + $0x740] sm:$0xff]
      %v2088 = vld [vmem:[%s33 + $0x748] sm:$0xff]
      %v2089 = vld [vmem:[%s33 + $0x750] sm:$0xff]
      %v2090 = vld [vmem:[%s33 + $0x758] sm:$0xff]
      %v2091 = vld [vmem:[%s33 + $0x760] sm:$0xff]
      %v2092 = vld [vmem:[%s33 + $0x768] sm:$0xff]
      %v2093 = vld [vmem:[%s33 + $0x770] sm:$0xff]
      %v2094 = vld [vmem:[%s33 + $0x778] sm:$0xff]
      %v2095 = vld [vmem:[%s33 + $0x780] sm:$0xff]
      %v2096 = vld [vmem:[%s33 + $0x788] sm:$0xff]
      %v2097 = vld [vmem:[%s33 + $0x790] sm:$0xff]
      %v2098 = vld [vmem:[%s33 + $0x798] sm:$0xff]
      %v2099 = vld [vmem:[%s33 + $0x7a0] sm:$0xff]
      %v2100 = vld [vmem:[%s33 + $0x7a8] sm:$0xff]
      %v2101 = vld [vmem:[%s33 + $0x7b0] sm:$0xff]
      %v2102 = vld [vmem:[%s33 + $0x7b8] sm:$0xff]
      %v2103 = vld [vmem:[%s33 + $0x7c0] sm:$0xff]
      %v2104 = vld [vmem:[%s33 + $0x7c8] sm:$0xff]
      %v2105 = vld [vmem:[%s33 + $0x7d0] sm:$0xff]
      %v2106 = vld [vmem:[%s33 + $0x7d8] sm:$0xff]
      %v2107 = vld [vmem:[%s33 + $0x7e0] sm:$0xff]
      %v2108 = vld [vmem:[%s33 + $0x7e8] sm:$0xff]
      %v2109 = vld [vmem:[%s33 + $0x7f0] sm:$0xff]
      %v2110 = vld [vmem:[%s33 + $0x7f8] sm:$0xff]
      %v2111 = vld [vmem:[%s33 + $0x800] sm:$0xff]
      %v2112 = vld [vmem:[%s33 + $0x808] sm:$0xff]
      %v2113 = vld [vmem:[%s33 + $0x810] sm:$0xff]
      %v2114 = vld [vmem:[%s33 + $0x818] sm:$0xff]
      %v2115 = vld [vmem:[%s33 + $0x820] sm:$0xff]
      %v2116 = vld [vmem:[%s33 + $0x828] sm:$0xff]
      %v2117 = vld [vmem:[%s33 + $0x830] sm:$0xff]
      %v2118 = vld [vmem:[%s33 + $0x838] sm:$0xff]
      %v2119 = vld [vmem:[%s33 + $0x840] sm:$0xff]
      %v2120 = vld [vmem:[%s33 + $0x848] sm:$0xff]
      %v2121 = vld [vmem:[%s33 + $0x850] sm:$0xff]
      %v2122 = vld [vmem:[%s33 + $0x858] sm:$0xff]
      %v2123 = vld [vmem:[%s33 + $0x860] sm:$0xff]
      %v2124 = vld [vmem:[%s33 + $0x868] sm:$0xff]
      %v2125 = vld [vmem:[%s33 + $0x870] sm:$0xff]
      %v2126 = vld [vmem:[%s33 + $0x878] sm:$0xff]
      %v2127 = vld [vmem:[%s33 + $0x880] sm:$0xff]
      %v2128 = vld [vmem:[%s33 + $0x888] sm:$0xff]
      %v2129 = vld [vmem:[%s33 + $0x890] sm:$0xff]
      %v2130 = vld [vmem:[%s33 + $0x898] sm:$0xff]
      %v2131 = vld [vmem:[%s33 + $0x8a0] sm:$0xff]
      %v2132 = vld [vmem:[%s33 + $0x8a8] sm:$0xff]
      %v2133 = vld [vmem:[%s33 + $0x8b0] sm:$0xff]
      %v2134 = vld [vmem:[%s33 + $0x8b8] sm:$0xff]
      %v2135 = vld [vmem:[%s33 + $0x8c0] sm:$0xff]
      %v2136 = vld [vmem:[%s33 + $0x8c8] sm:$0xff]
      %v2137 = vld [vmem:[%s33 + $0x8d0] sm:$0xff]
      %v2138 = vld [vmem:[%s33 + $0x8d8] sm:$0xff]
      %v2139 = vld [vmem:[%s33 + $0x8e0] sm:$0xff]
      %v2140 = vld [vmem:[%s33 + $0x8e8] sm:$0xff]
      %v2141 = vld [vmem:[%s33 + $0x8f0] sm:$0xff]
      %v2142 = vld [vmem:[%s33 + $0x8f8] sm:$0xff]
      %v2143 = vld [vmem:[%s35] sm:$0xff]
      %v2144 = vld [vmem:[%s35 + $0x8] sm:$0xff]
      %v2145 = vld [vmem:[%s35 + $0x10] sm:$0xff]
      %v2146 = vld [vmem:[%s35 + $0x18] sm:$0xff]
      %v2147 = vld [vmem:[%s35 + $0x20] sm:$0xff]
      %v2148 = vld [vmem:[%s35 + $0x28] sm:$0xff]
      %v2149 = vld [vmem:[%s35 + $0x30] sm:$0xff]
      %v2150 = vld [vmem:[%s35 + $0x38] sm:$0xff]
      %v2151 = vld [vmem:[%s35 + $0x40] sm:$0xff]
      %v2152 = vld [vmem:[%s35 + $0x48] sm:$0xff]
      %v2153 = vld [vmem:[%s35 + $0x50] sm:$0xff]
      %v2154 = vld [vmem:[%s35 + $0x58] sm:$0xff]
      %v2155 = vld [vmem:[%s35 + $0x60] sm:$0xff]
      %v2156 = vld [vmem:[%s35 + $0x68] sm:$0xff]
      %v2157 = vld [vmem:[%s35 + $0x70] sm:$0xff]
      %v2158 = vld [vmem:[%s35 + $0x78] sm:$0xff]
      %v2159 = vld [vmem:[%s35 + $0x80] sm:$0xff]
      %v2160 = vld [vmem:[%s35 + $0x88] sm:$0xff]
      %v2161 = vld [vmem:[%s35 + $0x90] sm:$0xff]
      %v2162 = vld [vmem:[%s35 + $0x98] sm:$0xff]
      %v2163 = vld [vmem:[%s35 + $0xa0] sm:$0xff]
      %v2164 = vld [vmem:[%s35 + $0xa8] sm:$0xff]
      %v2165 = vld [vmem:[%s35 + $0xb0] sm:$0xff]
      %v2166 = vld [vmem:[%s35 + $0xb8] sm:$0xff]
      %v2167 = vld [vmem:[%s35 + $0xc0] sm:$0xff]
      %v2168 = vld [vmem:[%s35 + $0xc8] sm:$0xff]
      %v2169 = vld [vmem:[%s35 + $0xd0] sm:$0xff]
      %v2170 = vld [vmem:[%s35 + $0xd8] sm:$0xff]
      %v2171 = vld [vmem:[%s35 + $0xe0] sm:$0xff]
      %v2172 = vld [vmem:[%s35 + $0xe8] sm:$0xff]
      %v2173 = vld [vmem:[%s35 + $0xf0] sm:$0xff]
      %v2174 = vld [vmem:[%s35 + $0xf8] sm:$0xff]
      %v2175 = vld [vmem:[%s35 + $0x100] sm:$0xff]
      %v2176 = vld [vmem:[%s35 + $0x108] sm:$0xff]
      %v2177 = vld [vmem:[%s35 + $0x110] sm:$0xff]
      %v2178 = vld [vmem:[%s35 + $0x118] sm:$0xff]
      %v2179 = vld [vmem:[%s35 + $0x120] sm:$0xff]
      %v2180 = vld [vmem:[%s35 + $0x128] sm:$0xff]
      %v2181 = vld [vmem:[%s35 + $0x130] sm:$0xff]
      %v2182 = vld [vmem:[%s35 + $0x138] sm:$0xff]
      %v2183 = vld [vmem:[%s35 + $0x140] sm:$0xff]
      %v2184 = vld [vmem:[%s35 + $0x148] sm:$0xff]
      %v2185 = vld [vmem:[%s35 + $0x150] sm:$0xff]
      %v2186 = vld [vmem:[%s35 + $0x158] sm:$0xff]
      %v2187 = vld [vmem:[%s35 + $0x160] sm:$0xff]
      %v2188 = vld [vmem:[%s35 + $0x168] sm:$0xff]
      %v2189 = vld [vmem:[%s35 + $0x170] sm:$0xff]
      %v2190 = vld [vmem:[%s35 + $0x178] sm:$0xff]
      %v2191 = vld [vmem:[%s35 + $0x180] sm:$0xff]
      %v2192 = vld [vmem:[%s35 + $0x188] sm:$0xff]
      %v2193 = vld [vmem:[%s35 + $0x190] sm:$0xff]
      %v2194 = vld [vmem:[%s35 + $0x198] sm:$0xff]
      %v2195 = vld [vmem:[%s35 + $0x1a0] sm:$0xff]
      %v2196 = vld [vmem:[%s35 + $0x1a8] sm:$0xff]
      %v2197 = vld [vmem:[%s35 + $0x1b0] sm:$0xff]
      %v2198 = vld [vmem:[%s35 + $0x1b8] sm:$0xff]
      %v2199 = vld [vmem:[%s35 + $0x1c0] sm:$0xff]
      %v2200 = vld [vmem:[%s35 + $0x1c8] sm:$0xff]
      %v2201 = vld [vmem:[%s35 + $0x1d0] sm:$0xff]
      %v2202 = vld [vmem:[%s35 + $0x1d8] sm:$0xff]
      %v2203 = vld [vmem:[%s35 + $0x1e0] sm:$0xff]
      %v2204 = vld [vmem:[%s35 + $0x1e8] sm:$0xff]
      %v2205 = vld [vmem:[%s35 + $0x1f0] sm:$0xff]
      %v2206 = vld [vmem:[%s35 + $0x1f8] sm:$0xff]
      %v2207 = vld [vmem:[%s35 + $0x200] sm:$0xff]
      %v2208 = vld [vmem:[%s35 + $0x208] sm:$0xff]
      %v2209 = vld [vmem:[%s35 + $0x210] sm:$0xff]
      %v2210 = vld [vmem:[%s35 + $0x218] sm:$0xff]
      %v2211 = vld [vmem:[%s35 + $0x220] sm:$0xff]
      %v2212 = vld [vmem:[%s35 + $0x228] sm:$0xff]
      %v2213 = vld [vmem:[%s35 + $0x230] sm:$0xff]
      %v2214 = vld [vmem:[%s35 + $0x238] sm:$0xff]
      %v2215 = vld [vmem:[%s35 + $0x240] sm:$0xff]
      %v2216 = vld [vmem:[%s35 + $0x248] sm:$0xff]
      %v2217 = vld [vmem:[%s35 + $0x250] sm:$0xff]
      %v2218 = vld [vmem:[%s35 + $0x258] sm:$0xff]
      %v2219 = vld [vmem:[%s35 + $0x260] sm:$0xff]
      %v2220 = vld [vmem:[%s35 + $0x268] sm:$0xff]
      %v2221 = vld [vmem:[%s35 + $0x270] sm:$0xff]
      %v2222 = vld [vmem:[%s35 + $0x278] sm:$0xff]
      %v2223 = vld [vmem:[%s35 + $0x280] sm:$0xff]
      %v2224 = vld [vmem:[%s35 + $0x288] sm:$0xff]
      %v2225 = vld [vmem:[%s35 + $0x290] sm:$0xff]
      %v2226 = vld [vmem:[%s35 + $0x298] sm:$0xff]
      %v2227 = vld [vmem:[%s35 + $0x2a0] sm:$0xff]
      %v2228 = vld [vmem:[%s35 + $0x2a8] sm:$0xff]
      %v2229 = vld [vmem:[%s35 + $0x2b0] sm:$0xff]
      %v2230 = vld [vmem:[%s35 + $0x2b8] sm:$0xff]
      %v2231 = vld [vmem:[%s35 + $0x2c0] sm:$0xff]
      %v2232 = vld [vmem:[%s35 + $0x2c8] sm:$0xff]
      %v2233 = vld [vmem:[%s35 + $0x2d0] sm:$0xff]
      %v2234 = vld [vmem:[%s35 + $0x2d8] sm:$0xff]
      %v2235 = vld [vmem:[%s35 + $0x2e0] sm:$0xff]
      %v2236 = vld [vmem:[%s35 + $0x2e8] sm:$0xff]
      %v2237 = vld [vmem:[%s35 + $0x2f0] sm:$0xff]
      %v2238 = vld [vmem:[%s35 + $0x2f8] sm:$0xff]
      %v2239 = vld [vmem:[%s35 + $0x300] sm:$0xff]
      %v2240 = vld [vmem:[%s35 + $0x308] sm:$0xff]
      %v2241 = vld [vmem:[%s35 + $0x310] sm:$0xff]
      %v2242 = vld [vmem:[%s35 + $0x318] sm:$0xff]
      %v2243 = vld [vmem:[%s35 + $0x320] sm:$0xff]
      %v2244 = vld [vmem:[%s35 + $0x328] sm:$0xff]
      %v2245 = vld [vmem:[%s35 + $0x330] sm:$0xff]
      %v2246 = vld [vmem:[%s35 + $0x338] sm:$0xff]
      %v2247 = vld [vmem:[%s35 + $0x340] sm:$0xff]
      %v2248 = vld [vmem:[%s35 + $0x348] sm:$0xff]
      %v2249 = vld [vmem:[%s35 + $0x350] sm:$0xff]
      %v2250 = vld [vmem:[%s35 + $0x358] sm:$0xff]
      %v2251 = vld [vmem:[%s35 + $0x360] sm:$0xff]
      %v2252 = vld [vmem:[%s35 + $0x368] sm:$0xff]
      %v2253 = vld [vmem:[%s35 + $0x370] sm:$0xff]
      %v2254 = vld [vmem:[%s35 + $0x378] sm:$0xff]
      %v2255 = vld [vmem:[%s35 + $0x380] sm:$0xff]
      %v2256 = vld [vmem:[%s35 + $0x388] sm:$0xff]
      %v2257 = vld [vmem:[%s35 + $0x390] sm:$0xff]
      %v2258 = vld [vmem:[%s35 + $0x398] sm:$0xff]
      %v2259 = vld [vmem:[%s35 + $0x3a0] sm:$0xff]
      %v2260 = vld [vmem:[%s35 + $0x3a8] sm:$0xff]
      %v2261 = vld [vmem:[%s35 + $0x3b0] sm:$0xff]
      %v2262 = vld [vmem:[%s35 + $0x3b8] sm:$0xff]
      %v2263 = vld [vmem:[%s35 + $0x3c0] sm:$0xff]
      %v2264 = vld [vmem:[%s35 + $0x3c8] sm:$0xff]
      %v2265 = vld [vmem:[%s35 + $0x3d0] sm:$0xff]
      %v2266 = vld [vmem:[%s35 + $0x3d8] sm:$0xff]
      %v2267 = vld [vmem:[%s35 + $0x3e0] sm:$0xff]
      %v2268 = vld [vmem:[%s35 + $0x3e8] sm:$0xff]
      %v2269 = vld [vmem:[%s35 + $0x3f0] sm:$0xff]
      %v2270 = vld [vmem:[%s35 + $0x3f8] sm:$0xff]
      %v2271 = vld [vmem:[%s35 + $0x400] sm:$0xff]
      %v2272 = vld [vmem:[%s35 + $0x408] sm:$0xff]
      %v2273 = vld [vmem:[%s35 + $0x410] sm:$0xff]
      %v2274 = vld [vmem:[%s35 + $0x418] sm:$0xff]
      %v2275 = vld [vmem:[%s35 + $0x420] sm:$0xff]
      %v2276 = vld [vmem:[%s35 + $0x428] sm:$0xff]
      %v2277 = vld [vmem:[%s35 + $0x430] sm:$0xff]
      %v2278 = vld [vmem:[%s35 + $0x438] sm:$0xff]
      %v2279 = vld [vmem:[%s35 + $0x440] sm:$0xff]
      %v2280 = vld [vmem:[%s35 + $0x448] sm:$0xff]
      %v2281 = vld [vmem:[%s35 + $0x450] sm:$0xff]
      %v2282 = vld [vmem:[%s35 + $0x458] sm:$0xff]
      %v2283 = vld [vmem:[%s35 + $0x460] sm:$0xff]
      %v2284 = vld [vmem:[%s35 + $0x468] sm:$0xff]
      %v2285 = vld [vmem:[%s35 + $0x470] sm:$0xff]
      %v2286 = vld [vmem:[%s35 + $0x478] sm:$0xff]
      %v2287 = vld [vmem:[%s35 + $0x480] sm:$0xff]
      %v2288 = vld [vmem:[%s35 + $0x488] sm:$0xff]
      %v2289 = vld [vmem:[%s35 + $0x490] sm:$0xff]
      %v2290 = vld [vmem:[%s35 + $0x498] sm:$0xff]
      %v2291 = vld [vmem:[%s35 + $0x4a0] sm:$0xff]
      %v2292 = vld [vmem:[%s35 + $0x4a8] sm:$0xff]
      %v2293 = vld [vmem:[%s35 + $0x4b0] sm:$0xff]
      %v2294 = vld [vmem:[%s35 + $0x4b8] sm:$0xff]
      %v2295 = vld [vmem:[%s35 + $0x4c0] sm:$0xff]
      %v2296 = vld [vmem:[%s35 + $0x4c8] sm:$0xff]
      %v2297 = vld [vmem:[%s35 + $0x4d0] sm:$0xff]
      %v2298 = vld [vmem:[%s35 + $0x4d8] sm:$0xff]
      %v2299 = vld [vmem:[%s35 + $0x4e0] sm:$0xff]
      %v2300 = vld [vmem:[%s35 + $0x4e8] sm:$0xff]
      %v2301 = vld [vmem:[%s35 + $0x4f0] sm:$0xff]
      %v2302 = vld [vmem:[%s35 + $0x4f8] sm:$0xff]
      %v2303 = vld [vmem:[%s35 + $0x500] sm:$0xff]
      %v2304 = vld [vmem:[%s35 + $0x508] sm:$0xff]
      %v2305 = vld [vmem:[%s35 + $0x510] sm:$0xff]
      %v2306 = vld [vmem:[%s35 + $0x518] sm:$0xff]
      %v2307 = vld [vmem:[%s35 + $0x520] sm:$0xff]
      %v2308 = vld [vmem:[%s35 + $0x528] sm:$0xff]
      %v2309 = vld [vmem:[%s35 + $0x530] sm:$0xff]
      %v2310 = vld [vmem:[%s35 + $0x538] sm:$0xff]
      %v2311 = vld [vmem:[%s35 + $0x540] sm:$0xff]
      %v2312 = vld [vmem:[%s35 + $0x548] sm:$0xff]
      %v2313 = vld [vmem:[%s35 + $0x550] sm:$0xff]
      %v2314 = vld [vmem:[%s35 + $0x558] sm:$0xff]
      %v2315 = vld [vmem:[%s35 + $0x560] sm:$0xff]
      %v2316 = vld [vmem:[%s35 + $0x568] sm:$0xff]
      %v2317 = vld [vmem:[%s35 + $0x570] sm:$0xff]
      %v2318 = vld [vmem:[%s35 + $0x578] sm:$0xff]
      %v2319 = vld [vmem:[%s35 + $0x580] sm:$0xff]
      %v2320 = vld [vmem:[%s35 + $0x588] sm:$0xff]
      %v2321 = vld [vmem:[%s35 + $0x590] sm:$0xff]
      %v2322 = vld [vmem:[%s35 + $0x598] sm:$0xff]
      %v2323 = vld [vmem:[%s35 + $0x5a0] sm:$0xff]
      %v2324 = vld [vmem:[%s35 + $0x5a8] sm:$0xff]
      %v2325 = vld [vmem:[%s35 + $0x5b0] sm:$0xff]
      %v2326 = vld [vmem:[%s35 + $0x5b8] sm:$0xff]
      %v2327 = vld [vmem:[%s35 + $0x5c0] sm:$0xff]
      %v2328 = vld [vmem:[%s35 + $0x5c8] sm:$0xff]
      %v2329 = vld [vmem:[%s35 + $0x5d0] sm:$0xff]
      %v2330 = vld [vmem:[%s35 + $0x5d8] sm:$0xff]
      %v2331 = vld [vmem:[%s35 + $0x5e0] sm:$0xff]
      %v2332 = vld [vmem:[%s35 + $0x5e8] sm:$0xff]
      %v2333 = vld [vmem:[%s35 + $0x5f0] sm:$0xff]
      %v2334 = vld [vmem:[%s35 + $0x5f8] sm:$0xff]
      %v2335 = vld [vmem:[%s35 + $0x600] sm:$0xff]
      %v2336 = vld [vmem:[%s35 + $0x608] sm:$0xff]
      %v2337 = vld [vmem:[%s35 + $0x610] sm:$0xff]
      %v2338 = vld [vmem:[%s35 + $0x618] sm:$0xff]
      %v2339 = vld [vmem:[%s35 + $0x620] sm:$0xff]
      %v2340 = vld [vmem:[%s35 + $0x628] sm:$0xff]
      %v2341 = vld [vmem:[%s35 + $0x630] sm:$0xff]
      %v2342 = vld [vmem:[%s35 + $0x638] sm:$0xff]
      %v2343 = vld [vmem:[%s35 + $0x640] sm:$0xff]
      %v2344 = vld [vmem:[%s35 + $0x648] sm:$0xff]
      %v2345 = vld [vmem:[%s35 + $0x650] sm:$0xff]
      %v2346 = vld [vmem:[%s35 + $0x658] sm:$0xff]
      %v2347 = vld [vmem:[%s35 + $0x660] sm:$0xff]
      %v2348 = vld [vmem:[%s35 + $0x668] sm:$0xff]
      %v2349 = vld [vmem:[%s35 + $0x670] sm:$0xff]
      %v2350 = vld [vmem:[%s35 + $0x678] sm:$0xff]
      %v2351 = vld [vmem:[%s35 + $0x680] sm:$0xff]
      %v2352 = vld [vmem:[%s35 + $0x688] sm:$0xff]
      %v2353 = vld [vmem:[%s35 + $0x690] sm:$0xff]
      %v2354 = vld [vmem:[%s35 + $0x698] sm:$0xff]
      %v2355 = vld [vmem:[%s35 + $0x6a0] sm:$0xff]
      %v2356 = vld [vmem:[%s35 + $0x6a8] sm:$0xff]
      %v2357 = vld [vmem:[%s35 + $0x6b0] sm:$0xff]
      %v2358 = vld [vmem:[%s35 + $0x6b8] sm:$0xff]
      %v2359 = vld [vmem:[%s35 + $0x6c0] sm:$0xff]
      %v2360 = vld [vmem:[%s35 + $0x6c8] sm:$0xff]
      %v2361 = vld [vmem:[%s35 + $0x6d0] sm:$0xff]
      %v2362 = vld [vmem:[%s35 + $0x6d8] sm:$0xff]
      %v2363 = vld [vmem:[%s35 + $0x6e0] sm:$0xff]
      %v2364 = vld [vmem:[%s35 + $0x6e8] sm:$0xff]
      %v2365 = vld [vmem:[%s35 + $0x6f0] sm:$0xff]
      %v2366 = vld [vmem:[%s35 + $0x6f8] sm:$0xff]
      %v2367 = vld [vmem:[%s35 + $0x700] sm:$0xff]
      %v2368 = vld [vmem:[%s35 + $0x708] sm:$0xff]
      %v2369 = vld [vmem:[%s35 + $0x710] sm:$0xff]
      %v2370 = vld [vmem:[%s35 + $0x718] sm:$0xff]
      %v2371 = vld [vmem:[%s35 + $0x720] sm:$0xff]
      %v2372 = vld [vmem:[%s35 + $0x728] sm:$0xff]
      %v2373 = vld [vmem:[%s35 + $0x730] sm:$0xff]
      %v2374 = vld [vmem:[%s35 + $0x738] sm:$0xff]
      %v2375 = vld [vmem:[%s35 + $0x740] sm:$0xff]
      %v2376 = vld [vmem:[%s35 + $0x748] sm:$0xff]
      %v2377 = vld [vmem:[%s35 + $0x750] sm:$0xff]
      %v2378 = vld [vmem:[%s35 + $0x758] sm:$0xff]
      %v2379 = vld [vmem:[%s35 + $0x760] sm:$0xff]
      %v2380 = vld [vmem:[%s35 + $0x768] sm:$0xff]
      %v2381 = vld [vmem:[%s35 + $0x770] sm:$0xff]
      %v2382 = vld [vmem:[%s35 + $0x778] sm:$0xff]
      %v2383 = vld [vmem:[%s35 + $0x780] sm:$0xff]
      %v2384 = vld [vmem:[%s35 + $0x788] sm:$0xff]
      %v2385 = vld [vmem:[%s35 + $0x790] sm:$0xff]
      %v2386 = vld [vmem:[%s35 + $0x798] sm:$0xff]
      %v2387 = vld [vmem:[%s35 + $0x7a0] sm:$0xff]
      %v2388 = vld [vmem:[%s35 + $0x7a8] sm:$0xff]
      %v2389 = vld [vmem:[%s35 + $0x7b0] sm:$0xff]
      %v2390 = vld [vmem:[%s35 + $0x7b8] sm:$0xff]
      %v2391 = vld [vmem:[%s35 + $0x7c0] sm:$0xff]
      %v2392 = vld [vmem:[%s35 + $0x7c8] sm:$0xff]
      %v2393 = vld [vmem:[%s35 + $0x7d0] sm:$0xff]
      %v2394 = vld [vmem:[%s35 + $0x7d8] sm:$0xff]
      %v2395 = vld [vmem:[%s35 + $0x7e0] sm:$0xff]
      %v2396 = vld [vmem:[%s35 + $0x7e8] sm:$0xff]
      %v2397 = vld [vmem:[%s35 + $0x7f0] sm:$0xff]
      %v2398 = vld [vmem:[%s35 + $0x7f8] sm:$0xff]
      %v2399 = vld [vmem:[%s35 + $0x800] sm:$0xff]
      %v2400 = vld [vmem:[%s35 + $0x808] sm:$0xff]
      %v2401 = vld [vmem:[%s35 + $0x810] sm:$0xff]
      %v2402 = vld [vmem:[%s35 + $0x818] sm:$0xff]
      %v2403 = vld [vmem:[%s35 + $0x820] sm:$0xff]
      %v2404 = vld [vmem:[%s35 + $0x828] sm:$0xff]
      %v2405 = vld [vmem:[%s35 + $0x830] sm:$0xff]
      %v2406 = vld [vmem:[%s35 + $0x838] sm:$0xff]
      %v2407 = vld [vmem:[%s35 + $0x840] sm:$0xff]
      %v2408 = vld [vmem:[%s35 + $0x848] sm:$0xff]
      %v2409 = vld [vmem:[%s35 + $0x850] sm:$0xff]
      %v2410 = vld [vmem:[%s35 + $0x858] sm:$0xff]
      %v2411 = vld [vmem:[%s35 + $0x860] sm:$0xff]
      %v2412 = vld [vmem:[%s35 + $0x868] sm:$0xff]
      %v2413 = vld [vmem:[%s35 + $0x870] sm:$0xff]
      %v2414 = vld [vmem:[%s35 + $0x878] sm:$0xff]
      %v2415 = vld [vmem:[%s35 + $0x880] sm:$0xff]
      %v2416 = vld [vmem:[%s35 + $0x888] sm:$0xff]
      %v2417 = vld [vmem:[%s35 + $0x890] sm:$0xff]
      %v2418 = vld [vmem:[%s35 + $0x898] sm:$0xff]
      %v2419 = vld [vmem:[%s35 + $0x8a0] sm:$0xff]
      %v2420 = vld [vmem:[%s35 + $0x8a8] sm:$0xff]
      %v2421 = vld [vmem:[%s35 + $0x8b0] sm:$0xff]
      %v2422 = vld [vmem:[%s35 + $0x8b8] sm:$0xff]
      %v2423 = vld [vmem:[%s35 + $0x8c0] sm:$0xff]
      %v2424 = vld [vmem:[%s35 + $0x8c8] sm:$0xff]
      %v2425 = vld [vmem:[%s35 + $0x8d0] sm:$0xff]
      %v2426 = vld [vmem:[%s35 + $0x8d8] sm:$0xff]
      %v2427 = vld [vmem:[%s35 + $0x8e0] sm:$0xff]
      %v2428 = vld [vmem:[%s35 + $0x8e8] sm:$0xff]
      %v2429 = vld [vmem:[%s35 + $0x8f0] sm:$0xff]
      %v2430 = vld [vmem:[%s35 + $0x8f8] sm:$0xff]
      %2431 = vmatprep.subr.mxu0 %v2234
      %2432 = vmatpush1.msra.mxu0 %v2233
      %2433 = vmatprep.subr.mxu0 %v2228
      %2434 = vmatpush1.msra.mxu0 %v2227
      %2435 = vmatprep.subr.mxu0 %v2222
      %2436 = vmatpush1.msra.mxu0 %v2221
      %2437 = vmatprep.subr.mxu0 %v2216
      %2438 = vmatpush1.msra.mxu0 %v2215
      %2439 = vmatprep.subr.mxu0 %v2210
      %2440 = vmatpush1.msra.mxu0 %v2209
      %2441 = vmatprep.subr.mxu0 %v2204
      %2442 = vmatpush1.msra.mxu0 %v2203
      %2443 = vmatprep.subr.mxu0 %v2198
      %2444 = vmatpush1.msra.mxu0 %v2197
      %2445 = vmatprep.subr.mxu0 %v2192
      %2446 = vmatpush1.msra.mxu0 %v2191
      %2447 = vmatprep.subr.mxu0 %v2186
      %2448 = vmatpush1.msra.mxu0 %v2185
      %2449 = vmatprep.subr.mxu0 %v2180
      %2450 = vmatpush1.msra.mxu0 %v2179
      %2451 = vmatprep.subr.mxu0 %v2174
      %2452 = vmatpush1.msra.mxu0 %v2173
      %2453 = vmatprep.subr.mxu0 %v2168
      %2454 = vmatpush1.msra.mxu0 %v2167
      %2455 = vmatprep.subr.mxu0 %v2162
      %2456 = vmatpush1.msra.mxu0 %v2161
      %2457 = vmatprep.subr.mxu0 %v2156
      %2458 = vmatpush1.msra.mxu0 %v2155
      %2459 = vmatprep.subr.mxu0 %v2150
      %2460 = vmatpush1.msra.mxu0 %v2149
      %2461 = vmatprep.subr.mxu0 %v2144
      %2462 = vmatpush1.msra.mxu0 %v2143
      %2463 = vmatprep.subr.mxu0 %v2330
      %2464 = vmatpush2.msra.mxu0 %v2329
      %2465 = vmatprep.subr.mxu0 %v2324
      %2466 = vmatpush2.msra.mxu0 %v2323
      %2467 = vmatprep.subr.mxu0 %v2318
      %2468 = vmatpush2.msra.mxu0 %v2317
      %2469 = vmatprep.subr.mxu0 %v2312
      %2470 = vmatpush2.msra.mxu0 %v2311
      %2471 = vmatprep.subr.mxu0 %v2306
      %2472 = vmatpush2.msra.mxu0 %v2305
      %2473 = vmatprep.subr.mxu0 %v2300
      %2474 = vmatpush2.msra.mxu0 %v2299
      %2475 = vmatprep.subr.mxu0 %v2294
      %2476 = vmatpush2.msra.mxu0 %v2293
      %2477 = vmatprep.subr.mxu0 %v2288
      %2478 = vmatpush2.msra.mxu0 %v2287
      %2479 = vmatprep.subr.mxu0 %v2282
      %2480 = vmatpush2.msra.mxu0 %v2281
      %2481 = vmatprep.subr.mxu0 %v2276
      %2482 = vmatpush2.msra.mxu0 %v2275
      %2483 = vmatprep.subr.mxu0 %v2270
      %2484 = vmatpush2.msra.mxu0 %v2269
      %2485 = vmatprep.subr.mxu0 %v2264
      %2486 = vmatpush2.msra.mxu0 %v2263
      %2487 = vmatprep.subr.mxu0 %v2258
      %2488 = vmatpush2.msra.mxu0 %v2257
      %2489 = vmatprep.subr.mxu0 %v2252
      %2490 = vmatpush2.msra.mxu0 %v2251
      %2491 = vmatprep.subr.mxu0 %v2246
      %2492 = vmatpush2.msra.mxu0 %v2245
      %2493 = vmatprep.subr.mxu0 %v2240
      %2494 = vmatpush2.msra.mxu0 %v2239
      %2495 = vmatprep.mubr.f32.mxu0 %v1796
      %2496 = vmatmul.mubr.f32.gmra.mxu0 %v1795
      %v2497 = vpop.f32.mrf.mxu0
      %v2498 = vadd.f32 0.0, %v2497
      %v2499 = vpop.f32.mrf.mxu0
      %2500 = vmatprep.mubr.f32.mxu0 %v1799
      %2501 = vmatmul.mubr.f32.gmra.mxu0 %v1798
      %v2502 = vpop.f32.mrf.mxu0
      %v2503 = vadd.f32 0.0, %v2502
      %v2504 = vpop.f32.mrf.mxu0
      %2505 = vmatprep.mubr.f32.mxu0 %v1802
      %2506 = vmatmul.mubr.f32.gmra.mxu0 %v1801
      %v2507 = vpop.f32.mrf.mxu0
      %v2508 = vadd.f32 0.0, %v2507
      %v2509 = vpop.f32.mrf.mxu0
      %2510 = vmatprep.mubr.f32.mxu0 %v1805
      %2511 = vmatmul.mubr.f32.gmra.mxu0 %v1804
      %v2512 = vpop.f32.mrf.mxu0
      %v2513 = vadd.f32 0.0, %v2512
      %v2514 = vpop.f32.mrf.mxu0
      %2515 = vdwg.mxu0
      %2516 = vmatprep.subr.mxu0 %v2426
      %2517 = vmatpush1.msra.mxu0 %v2425
      %2518 = vmatprep.subr.mxu0 %v2420
      %2519 = vmatpush1.msra.mxu0 %v2419
      %2520 = vmatprep.subr.mxu0 %v2414
      %2521 = vmatpush1.msra.mxu0 %v2413
      %2522 = vmatprep.subr.mxu0 %v2408
      %2523 = vmatpush1.msra.mxu0 %v2407
      %2524 = vmatprep.subr.mxu0 %v2402
      %2525 = vmatpush1.msra.mxu0 %v2401
      %2526 = vmatprep.subr.mxu0 %v2396
      %2527 = vmatpush1.msra.mxu0 %v2395
      %2528 = vmatprep.subr.mxu0 %v2390
      %2529 = vmatpush1.msra.mxu0 %v2389
      %2530 = vmatprep.subr.mxu0 %v2384
      %2531 = vmatpush1.msra.mxu0 %v2383
      %2532 = vmatprep.subr.mxu0 %v2378
      %2533 = vmatpush1.msra.mxu0 %v2377
      %2534 = vmatprep.subr.mxu0 %v2372
      %2535 = vmatpush1.msra.mxu0 %v2371
      %2536 = vmatprep.subr.mxu0 %v2366
      %2537 = vmatpush1.msra.mxu0 %v2365
      %2538 = vmatprep.subr.mxu0 %v2360
      %2539 = vmatpush1.msra.mxu0 %v2359
      %2540 = vmatprep.subr.mxu0 %v2354
      %2541 = vmatpush1.msra.mxu0 %v2353
      %2542 = vmatprep.subr.mxu0 %v2348
      %2543 = vmatpush1.msra.mxu0 %v2347
      %2544 = vmatprep.subr.mxu0 %v2342
      %2545 = vmatpush1.msra.mxu0 %v2341
      %2546 = vmatprep.subr.mxu0 %v2336
      %2547 = vmatpush1.msra.mxu0 %v2335
      %2548 = vmatprep.subr.mxu0 0.0
      %2549 = vmatpush2.msra.mxu0 0.0
      %2550 = vmatprep.subr.mxu0 0.0
      %2551 = vmatpush2.msra.mxu0 0.0
      %2552 = vmatprep.subr.mxu0 0.0
      %2553 = vmatpush2.msra.mxu0 0.0
      %2554 = vmatprep.subr.mxu0 0.0
      %2555 = vmatpush2.msra.mxu0 0.0
      %2556 = vmatprep.subr.mxu0 0.0
      %2557 = vmatpush2.msra.mxu0 0.0
      %2558 = vmatprep.subr.mxu0 0.0
      %2559 = vmatpush2.msra.mxu0 0.0
      %2560 = vmatprep.subr.mxu0 0.0
      %2561 = vmatpush2.msra.mxu0 0.0
      %2562 = vmatprep.subr.mxu0 0.0
      %2563 = vmatpush2.msra.mxu0 0.0
      %2564 = vmatprep.subr.mxu0 0.0
      %2565 = vmatpush2.msra.mxu0 0.0
      %2566 = vmatprep.subr.mxu0 0.0
      %2567 = vmatpush2.msra.mxu0 0.0
      %2568 = vmatprep.subr.mxu0 0.0
      %2569 = vmatpush2.msra.mxu0 0.0
      %2570 = vmatprep.subr.mxu0 0.0
      %2571 = vmatpush2.msra.mxu0 0.0
      %2572 = vmatprep.subr.mxu0 0.0
      %2573 = vmatpush2.msra.mxu0 0.0
      %2574 = vmatprep.subr.mxu0 0.0
      %2575 = vmatpush2.msra.mxu0 0.0
      %2576 = vmatprep.subr.mxu0 0.0
      %2577 = vmatpush2.msra.mxu0 0.0
      %2578 = vmatprep.subr.mxu0 0.0
      %2579 = vmatpush2.msra.mxu0 0.0
      %2580 = vmatprep.mubr.f32.mxu0 0.0
      %2581 = vmatmul.mubr.f32.gmra.mxu0 %v1797
      %v2582 = vpop.f32.mrf.mxu0
      %v2583 = vadd.f32 %v2498, %v2582
      %v2584 = vpop.f32.mrf.mxu0
      %2585 = vmatprep.mubr.f32.mxu0 0.0
      %2586 = vmatmul.mubr.f32.gmra.mxu0 %v1800
      %v2587 = vpop.f32.mrf.mxu0
      %v2588 = vadd.f32 %v2503, %v2587
      %v2589 = vpop.f32.mrf.mxu0
      %2590 = vmatprep.mubr.f32.mxu0 0.0
      %2591 = vmatmul.mubr.f32.gmra.mxu0 %v1803
      %v2592 = vpop.f32.mrf.mxu0
      %v2593 = vadd.f32 %v2508, %v2592
      %v2594 = vpop.f32.mrf.mxu0
      %2595 = vmatprep.mubr.f32.mxu0 0.0
      %2596 = vmatmul.mubr.f32.gmra.mxu0 %v1806
      %v2597 = vpop.f32.mrf.mxu0
      %v2598 = vadd.f32 %v2513, %v2597
      %v2599 = vpop.f32.mrf.mxu0
      %2600 = vdwg.mxu0
      %2601 = vmatprep.subr.mxu0 %v2236
      %2602 = vmatpush1.msra.mxu0 %v2235
      %2603 = vmatprep.subr.mxu0 %v2230
      %2604 = vmatpush1.msra.mxu0 %v2229
      %2605 = vmatprep.subr.mxu0 %v2224
      %2606 = vmatpush1.msra.mxu0 %v2223
      %2607 = vmatprep.subr.mxu0 %v2218
      %2608 = vmatpush1.msra.mxu0 %v2217
      %2609 = vmatprep.subr.mxu0 %v2212
      %2610 = vmatpush1.msra.mxu0 %v2211
      %2611 = vmatprep.subr.mxu0 %v2206
      %2612 = vmatpush1.msra.mxu0 %v2205
      %2613 = vmatprep.subr.mxu0 %v2200
      %2614 = vmatpush1.msra.mxu0 %v2199
      %2615 = vmatprep.subr.mxu0 %v2194
      %2616 = vmatpush1.msra.mxu0 %v2193
      %2617 = vmatprep.subr.mxu0 %v2188
      %2618 = vmatpush1.msra.mxu0 %v2187
      %2619 = vmatprep.subr.mxu0 %v2182
      %2620 = vmatpush1.msra.mxu0 %v2181
      %2621 = vmatprep.subr.mxu0 %v2176
      %2622 = vmatpush1.msra.mxu0 %v2175
      %2623 = vmatprep.subr.mxu0 %v2170
      %2624 = vmatpush1.msra.mxu0 %v2169
      %2625 = vmatprep.subr.mxu0 %v2164
      %2626 = vmatpush1.msra.mxu0 %v2163
      %2627 = vmatprep.subr.mxu0 %v2158
      %2628 = vmatpush1.msra.mxu0 %v2157
      %2629 = vmatprep.subr.mxu0 %v2152
      %2630 = vmatpush1.msra.mxu0 %v2151
      %2631 = vmatprep.subr.mxu0 %v2146
      %2632 = vmatpush1.msra.mxu0 %v2145
      %2633 = vmatprep.subr.mxu0 %v2332
      %2634 = vmatpush2.msra.mxu0 %v2331
      %2635 = vmatprep.subr.mxu0 %v2326
      %2636 = vmatpush2.msra.mxu0 %v2325
      %2637 = vmatprep.subr.mxu0 %v2320
      %2638 = vmatpush2.msra.mxu0 %v2319
      %2639 = vmatprep.subr.mxu0 %v2314
      %2640 = vmatpush2.msra.mxu0 %v2313
      %2641 = vmatprep.subr.mxu0 %v2308
      %2642 = vmatpush2.msra.mxu0 %v2307
      %2643 = vmatprep.subr.mxu0 %v2302
      %2644 = vmatpush2.msra.mxu0 %v2301
      %2645 = vmatprep.subr.mxu0 %v2296
      %2646 = vmatpush2.msra.mxu0 %v2295
      %2647 = vmatprep.subr.mxu0 %v2290
      %2648 = vmatpush2.msra.mxu0 %v2289
      %2649 = vmatprep.subr.mxu0 %v2284
      %2650 = vmatpush2.msra.mxu0 %v2283
      %2651 = vmatprep.subr.mxu0 %v2278
      %2652 = vmatpush2.msra.mxu0 %v2277
      %2653 = vmatprep.subr.mxu0 %v2272
      %2654 = vmatpush2.msra.mxu0 %v2271
      %2655 = vmatprep.subr.mxu0 %v2266
      %2656 = vmatpush2.msra.mxu0 %v2265
      %2657 = vmatprep.subr.mxu0 %v2260
      %2658 = vmatpush2.msra.mxu0 %v2259
      %2659 = vmatprep.subr.mxu0 %v2254
      %2660 = vmatpush2.msra.mxu0 %v2253
      %2661 = vmatprep.subr.mxu0 %v2248
      %2662 = vmatpush2.msra.mxu0 %v2247
      %2663 = vmatprep.subr.mxu0 %v2242
      %2664 = vmatpush2.msra.mxu0 %v2241
      %2665 = vmatprep.mubr.f32.mxu0 %v1796
      %2666 = vmatmul.mubr.f32.gmra.mxu0 %v1795
      %v2667 = vpop.f32.mrf.mxu0
      %v2668 = vadd.f32 0.0, %v2667
      %v2669 = vpop.f32.mrf.mxu0
      %2670 = vmatprep.mubr.f32.mxu0 %v1799
      %2671 = vmatmul.mubr.f32.gmra.mxu0 %v1798
      %v2672 = vpop.f32.mrf.mxu0
      %v2673 = vadd.f32 0.0, %v2672
      %v2674 = vpop.f32.mrf.mxu0
      %2675 = vmatprep.mubr.f32.mxu0 %v1802
      %2676 = vmatmul.mubr.f32.gmra.mxu0 %v1801
      %v2677 = vpop.f32.mrf.mxu0
      %v2678 = vadd.f32 0.0, %v2677
      %v2679 = vpop.f32.mrf.mxu0
      %2680 = vmatprep.mubr.f32.mxu0 %v1805
      %2681 = vmatmul.mubr.f32.gmra.mxu0 %v1804
      %v2682 = vpop.f32.mrf.mxu0
      %v2683 = vadd.f32 0.0, %v2682
      %v2684 = vpop.f32.mrf.mxu0
      %2685 = vdwg.mxu0
      %2686 = vmatprep.subr.mxu0 %v2428
      %2687 = vmatpush1.msra.mxu0 %v2427
      %2688 = vmatprep.subr.mxu0 %v2422
      %2689 = vmatpush1.msra.mxu0 %v2421
      %2690 = vmatprep.subr.mxu0 %v2416
      %2691 = vmatpush1.msra.mxu0 %v2415
      %2692 = vmatprep.subr.mxu0 %v2410
      %2693 = vmatpush1.msra.mxu0 %v2409
      %2694 = vmatprep.subr.mxu0 %v2404
      %2695 = vmatpush1.msra.mxu0 %v2403
      %2696 = vmatprep.subr.mxu0 %v2398
      %2697 = vmatpush1.msra.mxu0 %v2397
      %2698 = vmatprep.subr.mxu0 %v2392
      %2699 = vmatpush1.msra.mxu0 %v2391
      %2700 = vmatprep.subr.mxu0 %v2386
      %2701 = vmatpush1.msra.mxu0 %v2385
      %2702 = vmatprep.subr.mxu0 %v2380
      %2703 = vmatpush1.msra.mxu0 %v2379
      %2704 = vmatprep.subr.mxu0 %v2374
      %2705 = vmatpush1.msra.mxu0 %v2373
      %2706 = vmatprep.subr.mxu0 %v2368
      %2707 = vmatpush1.msra.mxu0 %v2367
      %2708 = vmatprep.subr.mxu0 %v2362
      %2709 = vmatpush1.msra.mxu0 %v2361
      %2710 = vmatprep.subr.mxu0 %v2356
      %2711 = vmatpush1.msra.mxu0 %v2355
      %2712 = vmatprep.subr.mxu0 %v2350
      %2713 = vmatpush1.msra.mxu0 %v2349
      %2714 = vmatprep.subr.mxu0 %v2344
      %2715 = vmatpush1.msra.mxu0 %v2343
      %2716 = vmatprep.subr.mxu0 %v2338
      %2717 = vmatpush1.msra.mxu0 %v2337
      %2718 = vmatprep.subr.mxu0 0.0
      %2719 = vmatpush2.msra.mxu0 0.0
      %2720 = vmatprep.subr.mxu0 0.0
      %2721 = vmatpush2.msra.mxu0 0.0
      %2722 = vmatprep.subr.mxu0 0.0
      %2723 = vmatpush2.msra.mxu0 0.0
      %2724 = vmatprep.subr.mxu0 0.0
      %2725 = vmatpush2.msra.mxu0 0.0
      %2726 = vmatprep.subr.mxu0 0.0
      %2727 = vmatpush2.msra.mxu0 0.0
      %2728 = vmatprep.subr.mxu0 0.0
      %2729 = vmatpush2.msra.mxu0 0.0
      %2730 = vmatprep.subr.mxu0 0.0
      %2731 = vmatpush2.msra.mxu0 0.0
      %2732 = vmatprep.subr.mxu0 0.0
      %2733 = vmatpush2.msra.mxu0 0.0
      %2734 = vmatprep.subr.mxu0 0.0
      %2735 = vmatpush2.msra.mxu0 0.0
      %2736 = vmatprep.subr.mxu0 0.0
      %2737 = vmatpush2.msra.mxu0 0.0
      %2738 = vmatprep.subr.mxu0 0.0
      %2739 = vmatpush2.msra.mxu0 0.0
      %2740 = vmatprep.subr.mxu0 0.0
      %2741 = vmatpush2.msra.mxu0 0.0
      %2742 = vmatprep.subr.mxu0 0.0
      %2743 = vmatpush2.msra.mxu0 0.0
      %2744 = vmatprep.subr.mxu0 0.0
      %2745 = vmatpush2.msra.mxu0 0.0
      %2746 = vmatprep.subr.mxu0 0.0
      %2747 = vmatpush2.msra.mxu0 0.0
      %2748 = vmatprep.subr.mxu0 0.0
      %2749 = vmatpush2.msra.mxu0 0.0
      %2750 = vmatprep.mubr.f32.mxu0 0.0
      %2751 = vmatmul.mubr.f32.gmra.mxu0 %v1797
      %v2752 = vpop.f32.mrf.mxu0
      %v2753 = vadd.f32 %v2668, %v2752
      %v2754 = vpop.f32.mrf.mxu0
      %2755 = vmatprep.mubr.f32.mxu0 0.0
      %2756 = vmatmul.mubr.f32.gmra.mxu0 %v1800
      %v2757 = vpop.f32.mrf.mxu0
      %v2758 = vadd.f32 %v2673, %v2757
      %v2759 = vpop.f32.mrf.mxu0
      %2760 = vmatprep.mubr.f32.mxu0 0.0
      %2761 = vmatmul.mubr.f32.gmra.mxu0 %v1803
      %v2762 = vpop.f32.mrf.mxu0
      %v2763 = vadd.f32 %v2678, %v2762
      %v2764 = vpop.f32.mrf.mxu0
      %2765 = vmatprep.mubr.f32.mxu0 0.0
      %2766 = vmatmul.mubr.f32.gmra.mxu0 %v1806
      %v2767 = vpop.f32.mrf.mxu0
      %v2768 = vadd.f32 %v2683, %v2767
      %v2769 = vpop.f32.mrf.mxu0
      %2770 = vdwg.mxu0
      %2771 = vmatprep.subr.mxu0 %v2238
      %2772 = vmatpush1.msra.mxu0 %v2237
      %2773 = vmatprep.subr.mxu0 %v2232
      %2774 = vmatpush1.msra.mxu0 %v2231
      %2775 = vmatprep.subr.mxu0 %v2226
      %2776 = vmatpush1.msra.mxu0 %v2225
      %2777 = vmatprep.subr.mxu0 %v2220
      %2778 = vmatpush1.msra.mxu0 %v2219
      %2779 = vmatprep.subr.mxu0 %v2214
      %2780 = vmatpush1.msra.mxu0 %v2213
      %2781 = vmatprep.subr.mxu0 %v2208
      %2782 = vmatpush1.msra.mxu0 %v2207
      %2783 = vmatprep.subr.mxu0 %v2202
      %2784 = vmatpush1.msra.mxu0 %v2201
      %2785 = vmatprep.subr.mxu0 %v2196
      %2786 = vmatpush1.msra.mxu0 %v2195
      %2787 = vmatprep.subr.mxu0 %v2190
      %2788 = vmatpush1.msra.mxu0 %v2189
      %2789 = vmatprep.subr.mxu0 %v2184
      %2790 = vmatpush1.msra.mxu0 %v2183
      %2791 = vmatprep.subr.mxu0 %v2178
      %2792 = vmatpush1.msra.mxu0 %v2177
      %2793 = vmatprep.subr.mxu0 %v2172
      %2794 = vmatpush1.msra.mxu0 %v2171
      %2795 = vmatprep.subr.mxu0 %v2166
      %2796 = vmatpush1.msra.mxu0 %v2165
      %2797 = vmatprep.subr.mxu0 %v2160
      %2798 = vmatpush1.msra.mxu0 %v2159
      %2799 = vmatprep.subr.mxu0 %v2154
      %2800 = vmatpush1.msra.mxu0 %v2153
      %2801 = vmatprep.subr.mxu0 %v2148
      %2802 = vmatpush1.msra.mxu0 %v2147
      %2803 = vmatprep.subr.mxu0 %v2334
      %2804 = vmatpush2.msra.mxu0 %v2333
      %2805 = vmatprep.subr.mxu0 %v2328
      %2806 = vmatpush2.msra.mxu0 %v2327
      %2807 = vmatprep.subr.mxu0 %v2322
      %2808 = vmatpush2.msra.mxu0 %v2321
      %2809 = vmatprep.subr.mxu0 %v2316
      %2810 = vmatpush2.msra.mxu0 %v2315
      %2811 = vmatprep.subr.mxu0 %v2310
      %2812 = vmatpush2.msra.mxu0 %v2309
      %2813 = vmatprep.subr.mxu0 %v2304
      %2814 = vmatpush2.msra.mxu0 %v2303
      %2815 = vmatprep.subr.mxu0 %v2298
      %2816 = vmatpush2.msra.mxu0 %v2297
      %2817 = vmatprep.subr.mxu0 %v2292
      %2818 = vmatpush2.msra.mxu0 %v2291
      %2819 = vmatprep.subr.mxu0 %v2286
      %2820 = vmatpush2.msra.mxu0 %v2285
      %2821 = vmatprep.subr.mxu0 %v2280
      %2822 = vmatpush2.msra.mxu0 %v2279
      %2823 = vmatprep.subr.mxu0 %v2274
      %2824 = vmatpush2.msra.mxu0 %v2273
      %2825 = vmatprep.subr.mxu0 %v2268
      %2826 = vmatpush2.msra.mxu0 %v2267
      %2827 = vmatprep.subr.mxu0 %v2262
      %2828 = vmatpush2.msra.mxu0 %v2261
      %2829 = vmatprep.subr.mxu0 %v2256
      %2830 = vmatpush2.msra.mxu0 %v2255
      %2831 = vmatprep.subr.mxu0 %v2250
      %2832 = vmatpush2.msra.mxu0 %v2249
      %2833 = vmatprep.subr.mxu0 %v2244
      %2834 = vmatpush2.msra.mxu0 %v2243
      %2835 = vmatprep.mubr.f32.mxu0 %v1796
      %2836 = vmatmul.mubr.f32.gmra.mxu0 %v1795
      %v2837 = vpop.f32.mrf.mxu0
      %v2838 = vadd.f32 0.0, %v2837
      %v2839 = vpop.f32.mrf.mxu0
      %2840 = vmatprep.mubr.f32.mxu0 %v1799
      %2841 = vmatmul.mubr.f32.gmra.mxu0 %v1798
      %v2842 = vpop.f32.mrf.mxu0
      %v2843 = vadd.f32 0.0, %v2842
      %v2844 = vpop.f32.mrf.mxu0
      %2845 = vmatprep.mubr.f32.mxu0 %v1802
      %2846 = vmatmul.mubr.f32.gmra.mxu0 %v1801
      %v2847 = vpop.f32.mrf.mxu0
      %v2848 = vadd.f32 0.0, %v2847
      %v2849 = vpop.f32.mrf.mxu0
      %2850 = vmatprep.mubr.f32.mxu0 %v1805
      %2851 = vmatmul.mubr.f32.gmra.mxu0 %v1804
      %v2852 = vpop.f32.mrf.mxu0
      %v2853 = vadd.f32 0.0, %v2852
      %v2854 = vpop.f32.mrf.mxu0
      %2855 = vdwg.mxu0
      %2856 = vmatprep.subr.mxu0 %v2430
      %2857 = vmatpush1.msra.mxu0 %v2429
      %2858 = vmatprep.subr.mxu0 %v2424
      %2859 = vmatpush1.msra.mxu0 %v2423
      %2860 = vmatprep.subr.mxu0 %v2418
      %2861 = vmatpush1.msra.mxu0 %v2417
      %2862 = vmatprep.subr.mxu0 %v2412
      %2863 = vmatpush1.msra.mxu0 %v2411
      %2864 = vmatprep.subr.mxu0 %v2406
      %2865 = vmatpush1.msra.mxu0 %v2405
      %2866 = vmatprep.subr.mxu0 %v2400
      %2867 = vmatpush1.msra.mxu0 %v2399
      %2868 = vmatprep.subr.mxu0 %v2394
      %2869 = vmatpush1.msra.mxu0 %v2393
      %2870 = vmatprep.subr.mxu0 %v2388
      %2871 = vmatpush1.msra.mxu0 %v2387
      %2872 = vmatprep.subr.mxu0 %v2382
      %2873 = vmatpush1.msra.mxu0 %v2381
      %2874 = vmatprep.subr.mxu0 %v2376
      %2875 = vmatpush1.msra.mxu0 %v2375
      %2876 = vmatprep.subr.mxu0 %v2370
      %2877 = vmatpush1.msra.mxu0 %v2369
      %2878 = vmatprep.subr.mxu0 %v2364
      %2879 = vmatpush1.msra.mxu0 %v2363
      %2880 = vmatprep.subr.mxu0 %v2358
      %2881 = vmatpush1.msra.mxu0 %v2357
      %2882 = vmatprep.subr.mxu0 %v2352
      %2883 = vmatpush1.msra.mxu0 %v2351
      %2884 = vmatprep.subr.mxu0 %v2346
      %2885 = vmatpush1.msra.mxu0 %v2345
      %2886 = vmatprep.subr.mxu0 %v2340
      %2887 = vmatpush1.msra.mxu0 %v2339
      %2888 = vmatprep.subr.mxu0 0.0
      %2889 = vmatpush2.msra.mxu0 0.0
      %2890 = vmatprep.subr.mxu0 0.0
      %2891 = vmatpush2.msra.mxu0 0.0
      %2892 = vmatprep.subr.mxu0 0.0
      %2893 = vmatpush2.msra.mxu0 0.0
      %2894 = vmatprep.subr.mxu0 0.0
      %2895 = vmatpush2.msra.mxu0 0.0
      %2896 = vmatprep.subr.mxu0 0.0
      %2897 = vmatpush2.msra.mxu0 0.0
      %2898 = vmatprep.subr.mxu0 0.0
      %2899 = vmatpush2.msra.mxu0 0.0
      %2900 = vmatprep.subr.mxu0 0.0
      %2901 = vmatpush2.msra.mxu0 0.0
      %2902 = vmatprep.subr.mxu0 0.0
      %2903 = vmatpush2.msra.mxu0 0.0
      %2904 = vmatprep.subr.mxu0 0.0
      %2905 = vmatpush2.msra.mxu0 0.0
      %2906 = vmatprep.subr.mxu0 0.0
      %2907 = vmatpush2.msra.mxu0 0.0
      %2908 = vmatprep.subr.mxu0 0.0
      %2909 = vmatpush2.msra.mxu0 0.0
      %2910 = vmatprep.subr.mxu0 0.0
      %2911 = vmatpush2.msra.mxu0 0.0
      %2912 = vmatprep.subr.mxu0 0.0
      %2913 = vmatpush2.msra.mxu0 0.0
      %2914 = vmatprep.subr.mxu0 0.0
      %2915 = vmatpush2.msra.mxu0 0.0
      %2916 = vmatprep.subr.mxu0 0.0
      %2917 = vmatpush2.msra.mxu0 0.0
      %2918 = vmatprep.subr.mxu0 0.0
      %2919 = vmatpush2.msra.mxu0 0.0
      %2920 = vmatprep.mubr.f32.mxu0 0.0
      %2921 = vmatmul.mubr.f32.gmra.mxu0 %v1797
      %v2922 = vpop.f32.mrf.mxu0
      %v2923 = vadd.f32 %v2838, %v2922
      %v2924 = vpop.f32.mrf.mxu0
      %2925 = vmatprep.mubr.f32.mxu0 0.0
      %2926 = vmatmul.mubr.f32.gmra.mxu0 %v1800
      %v2927 = vpop.f32.mrf.mxu0
      %v2928 = vadd.f32 %v2843, %v2927
      %v2929 = vpop.f32.mrf.mxu0
      %2930 = vmatprep.mubr.f32.mxu0 0.0
      %2931 = vmatmul.mubr.f32.gmra.mxu0 %v1803
      %v2932 = vpop.f32.mrf.mxu0
      %v2933 = vadd.f32 %v2848, %v2932
      %v2934 = vpop.f32.mrf.mxu0
      %2935 = vmatprep.mubr.f32.mxu0 0.0
      %2936 = vmatmul.mubr.f32.gmra.mxu0 %v1806
      %v2937 = vpop.f32.mrf.mxu0
      %v2938 = vadd.f32 %v2853, %v2937
      %v2939 = vpop.f32.mrf.mxu0
      %2940 = vdwg.mxu0
      %2941 = vmatprep.subr.mxu0 %v1946
      %2942 = vmatpush1.msra.mxu0 %v1945
      %2943 = vmatprep.subr.mxu0 %v1940
      %2944 = vmatpush1.msra.mxu0 %v1939
      %2945 = vmatprep.subr.mxu0 %v1934
      %2946 = vmatpush1.msra.mxu0 %v1933
      %2947 = vmatprep.subr.mxu0 %v1928
      %2948 = vmatpush1.msra.mxu0 %v1927
      %2949 = vmatprep.subr.mxu0 %v1922
      %2950 = vmatpush1.msra.mxu0 %v1921
      %2951 = vmatprep.subr.mxu0 %v1916
      %2952 = vmatpush1.msra.mxu0 %v1915
      %2953 = vmatprep.subr.mxu0 %v1910
      %2954 = vmatpush1.msra.mxu0 %v1909
      %2955 = vmatprep.subr.mxu0 %v1904
      %2956 = vmatpush1.msra.mxu0 %v1903
      %2957 = vmatprep.subr.mxu0 %v1898
      %2958 = vmatpush1.msra.mxu0 %v1897
      %2959 = vmatprep.subr.mxu0 %v1892
      %2960 = vmatpush1.msra.mxu0 %v1891
      %2961 = vmatprep.subr.mxu0 %v1886
      %2962 = vmatpush1.msra.mxu0 %v1885
      %2963 = vmatprep.subr.mxu0 %v1880
      %2964 = vmatpush1.msra.mxu0 %v1879
      %2965 = vmatprep.subr.mxu0 %v1874
      %2966 = vmatpush1.msra.mxu0 %v1873
      %2967 = vmatprep.subr.mxu0 %v1868
      %2968 = vmatpush1.msra.mxu0 %v1867
      %2969 = vmatprep.subr.mxu0 %v1862
      %2970 = vmatpush1.msra.mxu0 %v1861
      %2971 = vmatprep.subr.mxu0 %v1856
      %2972 = vmatpush1.msra.mxu0 %v1855
      %2973 = vmatprep.subr.mxu0 %v2042
      %2974 = vmatpush2.msra.mxu0 %v2041
      %2975 = vmatprep.subr.mxu0 %v2036
      %2976 = vmatpush2.msra.mxu0 %v2035
      %2977 = vmatprep.subr.mxu0 %v2030
      %2978 = vmatpush2.msra.mxu0 %v2029
      %2979 = vmatprep.subr.mxu0 %v2024
      %2980 = vmatpush2.msra.mxu0 %v2023
      %2981 = vmatprep.subr.mxu0 %v2018
      %2982 = vmatpush2.msra.mxu0 %v2017
      %2983 = vmatprep.subr.mxu0 %v2012
      %2984 = vmatpush2.msra.mxu0 %v2011
      %2985 = vmatprep.subr.mxu0 %v2006
      %2986 = vmatpush2.msra.mxu0 %v2005
      %2987 = vmatprep.subr.mxu0 %v2000
      %2988 = vmatpush2.msra.mxu0 %v1999
      %2989 = vmatprep.subr.mxu0 %v1994
      %2990 = vmatpush2.msra.mxu0 %v1993
      %2991 = vmatprep.subr.mxu0 %v1988
      %2992 = vmatpush2.msra.mxu0 %v1987
      %2993 = vmatprep.subr.mxu0 %v1982
      %2994 = vmatpush2.msra.mxu0 %v1981
      %2995 = vmatprep.subr.mxu0 %v1976
      %2996 = vmatpush2.msra.mxu0 %v1975
      %2997 = vmatprep.subr.mxu0 %v1970
      %2998 = vmatpush2.msra.mxu0 %v1969
      %2999 = vmatprep.subr.mxu0 %v1964
      %3000 = vmatpush2.msra.mxu0 %v1963
      %3001 = vmatprep.subr.mxu0 %v1958
      %3002 = vmatpush2.msra.mxu0 %v1957
      %3003 = vmatprep.subr.mxu0 %v1952
      %3004 = vmatpush2.msra.mxu0 %v1951
      %3005 = vmatprep.mubr.f32.mxu0 %v1853
      %3006 = vmatmul.mubr.f32.gmra.mxu0 %v1852
      %v3007 = vpop.f32.mrf.mxu0
      %v3008 = vadd.f32 %v2583, %v3007
      %v3009 = vpop.f32.mrf.mxu0
      %3010 = vmatprep.mubr.f32.mxu0 %v1825
      %3011 = vmatmul.mubr.f32.gmra.mxu0 %v1823
      %v3012 = vpop.f32.mrf.mxu0
      %v3013 = vadd.f32 %v2588, %v3012
      %v3014 = vpop.f32.mrf.mxu0
      %3015 = vmatprep.mubr.f32.mxu0 %v1831
      %3016 = vmatmul.mubr.f32.gmra.mxu0 %v1829
      %v3017 = vpop.f32.mrf.mxu0
      %v3018 = vadd.f32 %v2593, %v3017
      %v3019 = vpop.f32.mrf.mxu0
      %3020 = vmatprep.mubr.f32.mxu0 %v1837
      %3021 = vmatmul.mubr.f32.gmra.mxu0 %v1835
      %v3022 = vpop.f32.mrf.mxu0
      %v3023 = vadd.f32 %v2598, %v3022
      %v3024 = vpop.f32.mrf.mxu0
      %3025 = vdwg.mxu0
      %3026 = vmatprep.subr.mxu0 %v2138
      %3027 = vmatpush1.msra.mxu0 %v2137
      %3028 = vmatprep.subr.mxu0 %v2132
      %3029 = vmatpush1.msra.mxu0 %v2131
      %3030 = vmatprep.subr.mxu0 %v2126
      %3031 = vmatpush1.msra.mxu0 %v2125
      %3032 = vmatprep.subr.mxu0 %v2120
      %3033 = vmatpush1.msra.mxu0 %v2119
      %3034 = vmatprep.subr.mxu0 %v2114
      %3035 = vmatpush1.msra.mxu0 %v2113
      %3036 = vmatprep.subr.mxu0 %v2108
      %3037 = vmatpush1.msra.mxu0 %v2107
      %3038 = vmatprep.subr.mxu0 %v2102
      %3039 = vmatpush1.msra.mxu0 %v2101
      %3040 = vmatprep.subr.mxu0 %v2096
      %3041 = vmatpush1.msra.mxu0 %v2095
      %3042 = vmatprep.subr.mxu0 %v2090
      %3043 = vmatpush1.msra.mxu0 %v2089
      %3044 = vmatprep.subr.mxu0 %v2084
      %3045 = vmatpush1.msra.mxu0 %v2083
      %3046 = vmatprep.subr.mxu0 %v2078
      %3047 = vmatpush1.msra.mxu0 %v2077
      %3048 = vmatprep.subr.mxu0 %v2072
      %3049 = vmatpush1.msra.mxu0 %v2071
      %3050 = vmatprep.subr.mxu0 %v2066
      %3051 = vmatpush1.msra.mxu0 %v2065
      %3052 = vmatprep.subr.mxu0 %v2060
      %3053 = vmatpush1.msra.mxu0 %v2059
      %3054 = vmatprep.subr.mxu0 %v2054
      %3055 = vmatpush1.msra.mxu0 %v2053
      %3056 = vmatprep.subr.mxu0 %v2048
      %3057 = vmatpush1.msra.mxu0 %v2047
      %3058 = vmatprep.subr.mxu0 0.0
      %3059 = vmatpush2.msra.mxu0 0.0
      %3060 = vmatprep.subr.mxu0 0.0
      %3061 = vmatpush2.msra.mxu0 0.0
      %3062 = vmatprep.subr.mxu0 0.0
      %3063 = vmatpush2.msra.mxu0 0.0
      %3064 = vmatprep.subr.mxu0 0.0
      %3065 = vmatpush2.msra.mxu0 0.0
      %3066 = vmatprep.subr.mxu0 0.0
      %3067 = vmatpush2.msra.mxu0 0.0
      %3068 = vmatprep.subr.mxu0 0.0
      %3069 = vmatpush2.msra.mxu0 0.0
      %3070 = vmatprep.subr.mxu0 0.0
      %3071 = vmatpush2.msra.mxu0 0.0
      %3072 = vmatprep.subr.mxu0 0.0
      %3073 = vmatpush2.msra.mxu0 0.0
      %3074 = vmatprep.subr.mxu0 0.0
      %3075 = vmatpush2.msra.mxu0 0.0
      %3076 = vmatprep.subr.mxu0 0.0
      %3077 = vmatpush2.msra.mxu0 0.0
      %3078 = vmatprep.subr.mxu0 0.0
      %3079 = vmatpush2.msra.mxu0 0.0
      %3080 = vmatprep.subr.mxu0 0.0
      %3081 = vmatpush2.msra.mxu0 0.0
      %3082 = vmatprep.subr.mxu0 0.0
      %3083 = vmatpush2.msra.mxu0 0.0
      %3084 = vmatprep.subr.mxu0 0.0
      %3085 = vmatpush2.msra.mxu0 0.0
      %3086 = vmatprep.subr.mxu0 0.0
      %3087 = vmatpush2.msra.mxu0 0.0
      %3088 = vmatprep.subr.mxu0 0.0
      %3089 = vmatpush2.msra.mxu0 0.0
      %3090 = vmatprep.mubr.f32.mxu0 0.0
      %3091 = vmatmul.mubr.f32.gmra.mxu0 %v1854
      %v3092 = vpop.f32.mrf.mxu0
      %v3093 = vadd.f32 %v3008, %v3092
      %v3094 = vpop.f32.mrf.mxu0
      %3095 = vmatprep.mubr.f32.mxu0 0.0
      %3096 = vmatmul.mubr.f32.gmra.mxu0 %v1827
      %v3097 = vpop.f32.mrf.mxu0
      %v3098 = vadd.f32 %v3013, %v3097
      %v3099 = vpop.f32.mrf.mxu0
      %3100 = vmatprep.mubr.f32.mxu0 0.0
      %3101 = vmatmul.mubr.f32.gmra.mxu0 %v1833
      %v3102 = vpop.f32.mrf.mxu0
      %v3103 = vadd.f32 %v3018, %v3102
      %v3104 = vpop.f32.mrf.mxu0
      %3105 = vmatprep.mubr.f32.mxu0 0.0
      %3106 = vmatmul.mubr.f32.gmra.mxu0 %v1839
      %v3107 = vpop.f32.mrf.mxu0
      %v3108 = vadd.f32 %v3023, %v3107
      %v3109 = vpop.f32.mrf.mxu0
      %3110 = vdwg.mxu0
      %3111 = vmatprep.subr.mxu0 %v1948
      %3112 = vmatpush1.msra.mxu0 %v1947
      %3113 = vmatprep.subr.mxu0 %v1942
      %3114 = vmatpush1.msra.mxu0 %v1941
      %3115 = vmatprep.subr.mxu0 %v1936
      %3116 = vmatpush1.msra.mxu0 %v1935
      %3117 = vmatprep.subr.mxu0 %v1930
      %3118 = vmatpush1.msra.mxu0 %v1929
      %3119 = vmatprep.subr.mxu0 %v1924
      %3120 = vmatpush1.msra.mxu0 %v1923
      %3121 = vmatprep.subr.mxu0 %v1918
      %3122 = vmatpush1.msra.mxu0 %v1917
      %3123 = vmatprep.subr.mxu0 %v1912
      %3124 = vmatpush1.msra.mxu0 %v1911
      %3125 = vmatprep.subr.mxu0 %v1906
      %3126 = vmatpush1.msra.mxu0 %v1905
      %3127 = vmatprep.subr.mxu0 %v1900
      %3128 = vmatpush1.msra.mxu0 %v1899
      %3129 = vmatprep.subr.mxu0 %v1894
      %3130 = vmatpush1.msra.mxu0 %v1893
      %3131 = vmatprep.subr.mxu0 %v1888
      %3132 = vmatpush1.msra.mxu0 %v1887
      %3133 = vmatprep.subr.mxu0 %v1882
      %3134 = vmatpush1.msra.mxu0 %v1881
      %3135 = vmatprep.subr.mxu0 %v1876
      %3136 = vmatpush1.msra.mxu0 %v1875
      %3137 = vmatprep.subr.mxu0 %v1870
      %3138 = vmatpush1.msra.mxu0 %v1869
      %3139 = vmatprep.subr.mxu0 %v1864
      %3140 = vmatpush1.msra.mxu0 %v1863
      %3141 = vmatprep.subr.mxu0 %v1858
      %3142 = vmatpush1.msra.mxu0 %v1857
      %3143 = vmatprep.subr.mxu0 %v2044
      %3144 = vmatpush2.msra.mxu0 %v2043
      %3145 = vmatprep.subr.mxu0 %v2038
      %3146 = vmatpush2.msra.mxu0 %v2037
      %3147 = vmatprep.subr.mxu0 %v2032
      %3148 = vmatpush2.msra.mxu0 %v2031
      %3149 = vmatprep.subr.mxu0 %v2026
      %3150 = vmatpush2.msra.mxu0 %v2025
      %3151 = vmatprep.subr.mxu0 %v2020
      %3152 = vmatpush2.msra.mxu0 %v2019
      %3153 = vmatprep.subr.mxu0 %v2014
      %3154 = vmatpush2.msra.mxu0 %v2013
      %3155 = vmatprep.subr.mxu0 %v2008
      %3156 = vmatpush2.msra.mxu0 %v2007
      %3157 = vmatprep.subr.mxu0 %v2002
      %3158 = vmatpush2.msra.mxu0 %v2001
      %3159 = vmatprep.subr.mxu0 %v1996
      %3160 = vmatpush2.msra.mxu0 %v1995
      %3161 = vmatprep.subr.mxu0 %v1990
      %3162 = vmatpush2.msra.mxu0 %v1989
      %3163 = vmatprep.subr.mxu0 %v1984
      %3164 = vmatpush2.msra.mxu0 %v1983
      %3165 = vmatprep.subr.mxu0 %v1978
      %3166 = vmatpush2.msra.mxu0 %v1977
      %3167 = vmatprep.subr.mxu0 %v1972
      %3168 = vmatpush2.msra.mxu0 %v1971
      %3169 = vmatprep.subr.mxu0 %v1966
      %3170 = vmatpush2.msra.mxu0 %v1965
      %3171 = vmatprep.subr.mxu0 %v1960
      %3172 = vmatpush2.msra.mxu0 %v1959
      %3173 = vmatprep.subr.mxu0 %v1954
      %3174 = vmatpush2.msra.mxu0 %v1953
      %3175 = vmatprep.mubr.f32.mxu0 %v1853
      %3176 = vmatmul.mubr.f32.gmra.mxu0 %v1852
      %v3177 = vpop.f32.mrf.mxu0
      %v3178 = vadd.f32 %v2753, %v3177
      %v3179 = vpop.f32.mrf.mxu0
      %3180 = vmatprep.mubr.f32.mxu0 %v1825
      %3181 = vmatmul.mubr.f32.gmra.mxu0 %v1823
      %v3182 = vpop.f32.mrf.mxu0
      %v3183 = vadd.f32 %v2758, %v3182
      %v3184 = vpop.f32.mrf.mxu0
      %3185 = vmatprep.mubr.f32.mxu0 %v1831
      %3186 = vmatmul.mubr.f32.gmra.mxu0 %v1829
      %v3187 = vpop.f32.mrf.mxu0
      %v3188 = vadd.f32 %v2763, %v3187
      %v3189 = vpop.f32.mrf.mxu0
      %3190 = vmatprep.mubr.f32.mxu0 %v1837
      %3191 = vmatmul.mubr.f32.gmra.mxu0 %v1835
      %v3192 = vpop.f32.mrf.mxu0
      %v3193 = vadd.f32 %v2768, %v3192
      %v3194 = vpop.f32.mrf.mxu0
      %3195 = vdwg.mxu0
      %3196 = vmatprep.subr.mxu0 %v2140
      %3197 = vmatpush1.msra.mxu0 %v2139
      %3198 = vmatprep.subr.mxu0 %v2134
      %3199 = vmatpush1.msra.mxu0 %v2133
      %3200 = vmatprep.subr.mxu0 %v2128
      %3201 = vmatpush1.msra.mxu0 %v2127
      %3202 = vmatprep.subr.mxu0 %v2122
      %3203 = vmatpush1.msra.mxu0 %v2121
      %3204 = vmatprep.subr.mxu0 %v2116
      %3205 = vmatpush1.msra.mxu0 %v2115
      %3206 = vmatprep.subr.mxu0 %v2110
      %3207 = vmatpush1.msra.mxu0 %v2109
      %3208 = vmatprep.subr.mxu0 %v2104
      %3209 = vmatpush1.msra.mxu0 %v2103
      %3210 = vmatprep.subr.mxu0 %v2098
      %3211 = vmatpush1.msra.mxu0 %v2097
      %3212 = vmatprep.subr.mxu0 %v2092
      %3213 = vmatpush1.msra.mxu0 %v2091
      %3214 = vmatprep.subr.mxu0 %v2086
      %3215 = vmatpush1.msra.mxu0 %v2085
      %3216 = vmatprep.subr.mxu0 %v2080
      %3217 = vmatpush1.msra.mxu0 %v2079
      %3218 = vmatprep.subr.mxu0 %v2074
      %3219 = vmatpush1.msra.mxu0 %v2073
      %3220 = vmatprep.subr.mxu0 %v2068
      %3221 = vmatpush1.msra.mxu0 %v2067
      %3222 = vmatprep.subr.mxu0 %v2062
      %3223 = vmatpush1.msra.mxu0 %v2061
      %3224 = vmatprep.subr.mxu0 %v2056
      %3225 = vmatpush1.msra.mxu0 %v2055
      %3226 = vmatprep.subr.mxu0 %v2050
      %3227 = vmatpush1.msra.mxu0 %v2049
      %3228 = vmatprep.subr.mxu0 0.0
      %3229 = vmatpush2.msra.mxu0 0.0
      %3230 = vmatprep.subr.mxu0 0.0
      %3231 = vmatpush2.msra.mxu0 0.0
      %3232 = vmatprep.subr.mxu0 0.0
      %3233 = vmatpush2.msra.mxu0 0.0
      %3234 = vmatprep.subr.mxu0 0.0
      %3235 = vmatpush2.msra.mxu0 0.0
      %3236 = vmatprep.subr.mxu0 0.0
      %3237 = vmatpush2.msra.mxu0 0.0
      %3238 = vmatprep.subr.mxu0 0.0
      %3239 = vmatpush2.msra.mxu0 0.0
      %3240 = vmatprep.subr.mxu0 0.0
      %3241 = vmatpush2.msra.mxu0 0.0
      %3242 = vmatprep.subr.mxu0 0.0
      %3243 = vmatpush2.msra.mxu0 0.0
      %3244 = vmatprep.subr.mxu0 0.0
      %3245 = vmatpush2.msra.mxu0 0.0
      %3246 = vmatprep.subr.mxu0 0.0
      %3247 = vmatpush2.msra.mxu0 0.0
      %3248 = vmatprep.subr.mxu0 0.0
      %3249 = vmatpush2.msra.mxu0 0.0
      %3250 = vmatprep.subr.mxu0 0.0
      %3251 = vmatpush2.msra.mxu0 0.0
      %3252 = vmatprep.subr.mxu0 0.0
      %3253 = vmatpush2.msra.mxu0 0.0
      %3254 = vmatprep.subr.mxu0 0.0
      %3255 = vmatpush2.msra.mxu0 0.0
      %3256 = vmatprep.subr.mxu0 0.0
      %3257 = vmatpush2.msra.mxu0 0.0
      %3258 = vmatprep.subr.mxu0 0.0
      %3259 = vmatpush2.msra.mxu0 0.0
      %3260 = vmatprep.mubr.f32.mxu0 0.0
      %3261 = vmatmul.mubr.f32.gmra.mxu0 %v1854
      %v3262 = vpop.f32.mrf.mxu0
      %v3263 = vadd.f32 %v3178, %v3262
      %v3264 = vpop.f32.mrf.mxu0
      %3265 = vmatprep.mubr.f32.mxu0 0.0
      %3266 = vmatmul.mubr.f32.gmra.mxu0 %v1827
      %v3267 = vpop.f32.mrf.mxu0
      %v3268 = vadd.f32 %v3183, %v3267
      %v3269 = vpop.f32.mrf.mxu0
      %3270 = vmatprep.mubr.f32.mxu0 0.0
      %3271 = vmatmul.mubr.f32.gmra.mxu0 %v1833
      %v3272 = vpop.f32.mrf.mxu0
      %v3273 = vadd.f32 %v3188, %v3272
      %v3274 = vpop.f32.mrf.mxu0
      %3275 = vmatprep.mubr.f32.mxu0 0.0
      %3276 = vmatmul.mubr.f32.gmra.mxu0 %v1839
      %v3277 = vpop.f32.mrf.mxu0
      %v3278 = vadd.f32 %v3193, %v3277
      %v3279 = vpop.f32.mrf.mxu0
      %3280 = vdwg.mxu0
      %3281 = vmatprep.subr.mxu0 %v1950
      %3282 = vmatpush1.msra.mxu0 %v1949
      %3283 = vmatprep.subr.mxu0 %v1944
      %3284 = vmatpush1.msra.mxu0 %v1943
      %3285 = vmatprep.subr.mxu0 %v1938
      %3286 = vmatpush1.msra.mxu0 %v1937
      %3287 = vmatprep.subr.mxu0 %v1932
      %3288 = vmatpush1.msra.mxu0 %v1931
      %3289 = vmatprep.subr.mxu0 %v1926
      %3290 = vmatpush1.msra.mxu0 %v1925
      %3291 = vmatprep.subr.mxu0 %v1920
      %3292 = vmatpush1.msra.mxu0 %v1919
      %3293 = vmatprep.subr.mxu0 %v1914
      %3294 = vmatpush1.msra.mxu0 %v1913
      %3295 = vmatprep.subr.mxu0 %v1908
      %3296 = vmatpush1.msra.mxu0 %v1907
      %3297 = vmatprep.subr.mxu0 %v1902
      %3298 = vmatpush1.msra.mxu0 %v1901
      %3299 = vmatprep.subr.mxu0 %v1896
      %3300 = vmatpush1.msra.mxu0 %v1895
      %3301 = vmatprep.subr.mxu0 %v1890
      %3302 = vmatpush1.msra.mxu0 %v1889
      %3303 = vmatprep.subr.mxu0 %v1884
      %3304 = vmatpush1.msra.mxu0 %v1883
      %3305 = vmatprep.subr.mxu0 %v1878
      %3306 = vmatpush1.msra.mxu0 %v1877
      %3307 = vmatprep.subr.mxu0 %v1872
      %3308 = vmatpush1.msra.mxu0 %v1871
      %3309 = vmatprep.subr.mxu0 %v1866
      %3310 = vmatpush1.msra.mxu0 %v1865
      %3311 = vmatprep.subr.mxu0 %v1860
      %3312 = vmatpush1.msra.mxu0 %v1859
      %3313 = vmatprep.subr.mxu0 %v2046
      %3314 = vmatpush2.msra.mxu0 %v2045
      %3315 = vmatprep.subr.mxu0 %v2040
      %3316 = vmatpush2.msra.mxu0 %v2039
      %3317 = vmatprep.subr.mxu0 %v2034
      %3318 = vmatpush2.msra.mxu0 %v2033
      %3319 = vmatprep.subr.mxu0 %v2028
      %3320 = vmatpush2.msra.mxu0 %v2027
      %3321 = vmatprep.subr.mxu0 %v2022
      %3322 = vmatpush2.msra.mxu0 %v2021
      %3323 = vmatprep.subr.mxu0 %v2016
      %3324 = vmatpush2.msra.mxu0 %v2015
      %3325 = vmatprep.subr.mxu0 %v2010
      %3326 = vmatpush2.msra.mxu0 %v2009
      %3327 = vmatprep.subr.mxu0 %v2004
      %3328 = vmatpush2.msra.mxu0 %v2003
      %3329 = vmatprep.subr.mxu0 %v1998
      %3330 = vmatpush2.msra.mxu0 %v1997
      %3331 = vmatprep.subr.mxu0 %v1992
      %3332 = vmatpush2.msra.mxu0 %v1991
      %3333 = vmatprep.subr.mxu0 %v1986
      %3334 = vmatpush2.msra.mxu0 %v1985
      %3335 = vmatprep.subr.mxu0 %v1980
      %3336 = vmatpush2.msra.mxu0 %v1979
      %3337 = vmatprep.subr.mxu0 %v1974
      %3338 = vmatpush2.msra.mxu0 %v1973
      %3339 = vmatprep.subr.mxu0 %v1968
      %3340 = vmatpush2.msra.mxu0 %v1967
      %3341 = vmatprep.subr.mxu0 %v1962
      %3342 = vmatpush2.msra.mxu0 %v1961
      %3343 = vmatprep.subr.mxu0 %v1956
      %3344 = vmatpush2.msra.mxu0 %v1955
      %3345 = vmatprep.mubr.f32.mxu0 %v1853
      %3346 = vmatmul.mubr.f32.gmra.mxu0 %v1852
      %v3347 = vpop.f32.mrf.mxu0
      %v3348 = vadd.f32 %v2923, %v3347
      %v3349 = vpop.f32.mrf.mxu0
      %3350 = vmatprep.mubr.f32.mxu0 %v1825
      %3351 = vmatmul.mubr.f32.gmra.mxu0 %v1823
      %v3352 = vpop.f32.mrf.mxu0
      %v3353 = vadd.f32 %v2928, %v3352
      %v3354 = vpop.f32.mrf.mxu0
      %3355 = vmatprep.mubr.f32.mxu0 %v1831
      %3356 = vmatmul.mubr.f32.gmra.mxu0 %v1829
      %v3357 = vpop.f32.mrf.mxu0
      %v3358 = vadd.f32 %v2933, %v3357
      %v3359 = vpop.f32.mrf.mxu0
      %3360 = vmatprep.mubr.f32.mxu0 %v1837
      %3361 = vmatmul.mubr.f32.gmra.mxu0 %v1835
      %v3362 = vpop.f32.mrf.mxu0
      %v3363 = vadd.f32 %v2938, %v3362
      %v3364 = vpop.f32.mrf.mxu0
      %3365 = vdwg.mxu0
      %3366 = vmatprep.subr.mxu0 %v2142
      %3367 = vmatpush1.msra.mxu0 %v2141
      %3368 = vmatprep.subr.mxu0 %v2136
      %3369 = vmatpush1.msra.mxu0 %v2135
      %3370 = vmatprep.subr.mxu0 %v2130
      %3371 = vmatpush1.msra.mxu0 %v2129
      %3372 = vmatprep.subr.mxu0 %v2124
      %3373 = vmatpush1.msra.mxu0 %v2123
      %3374 = vmatprep.subr.mxu0 %v2118
      %3375 = vmatpush1.msra.mxu0 %v2117
      %3376 = vmatprep.subr.mxu0 %v2112
      %3377 = vmatpush1.msra.mxu0 %v2111
      %3378 = vmatprep.subr.mxu0 %v2106
      %3379 = vmatpush1.msra.mxu0 %v2105
      %3380 = vmatprep.subr.mxu0 %v2100
      %3381 = vmatpush1.msra.mxu0 %v2099
      %3382 = vmatprep.subr.mxu0 %v2094
      %3383 = vmatpush1.msra.mxu0 %v2093
      %3384 = vmatprep.subr.mxu0 %v2088
      %3385 = vmatpush1.msra.mxu0 %v2087
      %3386 = vmatprep.subr.mxu0 %v2082
      %3387 = vmatpush1.msra.mxu0 %v2081
      %3388 = vmatprep.subr.mxu0 %v2076
      %3389 = vmatpush1.msra.mxu0 %v2075
      %3390 = vmatprep.subr.mxu0 %v2070
      %3391 = vmatpush1.msra.mxu0 %v2069
      %3392 = vmatprep.subr.mxu0 %v2064
      %3393 = vmatpush1.msra.mxu0 %v2063
      %3394 = vmatprep.subr.mxu0 %v2058
      %3395 = vmatpush1.msra.mxu0 %v2057
      %3396 = vmatprep.subr.mxu0 %v2052
      %3397 = vmatpush1.msra.mxu0 %v2051
      %3398 = vmatprep.subr.mxu0 0.0
      %3399 = vmatpush2.msra.mxu0 0.0
      %3400 = vmatprep.subr.mxu0 0.0
      %3401 = vmatpush2.msra.mxu0 0.0
      %3402 = vmatprep.subr.mxu0 0.0
      %3403 = vmatpush2.msra.mxu0 0.0
      %3404 = vmatprep.subr.mxu0 0.0
      %3405 = vmatpush2.msra.mxu0 0.0
      %3406 = vmatprep.subr.mxu0 0.0
      %3407 = vmatpush2.msra.mxu0 0.0
      %3408 = vmatprep.subr.mxu0 0.0
      %3409 = vmatpush2.msra.mxu0 0.0
      %3410 = vmatprep.subr.mxu0 0.0
      %3411 = vmatpush2.msra.mxu0 0.0
      %3412 = vmatprep.subr.mxu0 0.0
      %3413 = vmatpush2.msra.mxu0 0.0
      %3414 = vmatprep.subr.mxu0 0.0
      %3415 = vmatpush2.msra.mxu0 0.0
      %3416 = vmatprep.subr.mxu0 0.0
      %3417 = vmatpush2.msra.mxu0 0.0
      %3418 = vmatprep.subr.mxu0 0.0
      %3419 = vmatpush2.msra.mxu0 0.0
      %3420 = vmatprep.subr.mxu0 0.0
      %3421 = vmatpush2.msra.mxu0 0.0
      %3422 = vmatprep.subr.mxu0 0.0
      %3423 = vmatpush2.msra.mxu0 0.0
      %3424 = vmatprep.subr.mxu0 0.0
      %3425 = vmatpush2.msra.mxu0 0.0
      %3426 = vmatprep.subr.mxu0 0.0
      %3427 = vmatpush2.msra.mxu0 0.0
      %3428 = vmatprep.subr.mxu0 0.0
      %3429 = vmatpush2.msra.mxu0 0.0
      %3430 = vmatprep.mubr.f32.mxu0 0.0
      %3431 = vmatmul.mubr.f32.gmra.mxu0 %v1854
      %v3432 = vpop.f32.mrf.mxu0
      %v3433 = vadd.f32 %v3348, %v3432
      %v3434 = vpop.f32.mrf.mxu0
      %3435 = vmatprep.mubr.f32.mxu0 0.0
      %3436 = vmatmul.mubr.f32.gmra.mxu0 %v1827
      %v3437 = vpop.f32.mrf.mxu0
      %v3438 = vadd.f32 %v3353, %v3437
      %v3439 = vpop.f32.mrf.mxu0
      %3440 = vmatprep.mubr.f32.mxu0 0.0
      %3441 = vmatmul.mubr.f32.gmra.mxu0 %v1833
      %v3442 = vpop.f32.mrf.mxu0
      %v3443 = vadd.f32 %v3358, %v3442
      %v3444 = vpop.f32.mrf.mxu0
      %3445 = vmatprep.mubr.f32.mxu0 0.0
      %3446 = vmatmul.mubr.f32.gmra.mxu0 %v1839
      %v3447 = vpop.f32.mrf.mxu0
      %v3448 = vadd.f32 %v3363, %v3447
      %v3449 = vpop.f32.mrf.mxu0
      %3450 = vdwg.mxu0
      %v3451 = vld [vmem:[%s37] sm:$0x3f]
      %v3453 = vlaneseq
      %v3454 = vshrl.u32 %v3453, 7
      %v3455 = vsub.s32 0, %v3454
      %v3456 = vrot.slane %v3451, %v3455
      %v3457 = vlaneseq
      %v3458 = vshrl.u32 %v3457, 7
      %v3459 = vsub.s32 2, %v3458
      %v3460 = vrot.slane %v3451, %v3459
      %v3461 = vlaneseq
      %v3462 = vshrl.u32 %v3461, 7
      %v3463 = vsub.s32 4, %v3462
      %v3464 = vrot.slane %v3451, %v3463
      %v3468 = vadd.f32 %v3093, %v3456
      %v3469 = vadd.f32 %v3263, %v3460
      %v3470 = vadd.f32 %v3433, %v3464
      %v3471 = vadd.f32 %v3098, %v3456
      %v3472 = vadd.f32 %v3268, %v3460
      %v3473 = vadd.f32 %v3438, %v3464
      %v3474 = vadd.f32 %v3103, %v3456
      %v3475 = vadd.f32 %v3273, %v3460
      %v3476 = vadd.f32 %v3443, %v3464
      %v3477 = vadd.f32 %v3108, %v3456
      %v3478 = vadd.f32 %v3278, %v3460
      %v3479 = vadd.f32 %v3448, %v3464
      %v3480 = vadd.f32 %v3468, %v3471
      %v3481 = vadd.f32 %v3480, %v3474
      %v3482 = vadd.f32 %v3481, %v3477
      %v3483 = vrot.slane %v3482, 4
      %v3484 = vadd.f32 %v3482, %v3483
      %v3485 = vrot.slane %v3484, 2
      %v3486 = vadd.f32 %v3484, %v3485
      %v3487 = vrot.slane %v3486, 1
      %v3488 = vadd.f32 %v3486, %v3487
      %v3489 = vadd.f32 %v3469, %v3472
      %v3490 = vadd.f32 %v3489, %v3475
      %v3491 = vadd.f32 %v3490, %v3478
      %v3492 = vrot.slane %v3491, 4
      %v3493 = vadd.f32 %v3491, %v3492
      %v3494 = vrot.slane %v3493, 2
      %v3495 = vadd.f32 %v3493, %v3494
      %v3496 = vrot.slane %v3495, 1
      %v3497 = vadd.f32 %v3495, %v3496
      %v3498 = vadd.f32 %v3470, %v3473
      %v3499 = vadd.f32 %v3498, %v3476
      %v3500 = vadd.f32 %v3499, %v3479
      %v3501 = vrot.slane %v3500, 4
      %v3502 = vadd.f32 %v3500, %v3501
      %v3503 = vrot.slane %v3502, 2
      %v3504 = vadd.f32 %v3502, %v3503
      %v3505 = vrot.slane %v3504, 1
      %v3506 = vadd.f32 %v3504, %v3505
      %v3507 = vmul.f32 %v3488, 0.03125
      %v3508 = vmul.f32 %v3497, 0.03125
      %v3509 = vmul.f32 %v3506, 0.03125
      %v3510 = vsub.f32 %v3468, %v3507
      %v3511 = vsub.f32 %v3469, %v3508
      %v3512 = vsub.f32 %v3470, %v3509
      %v3513 = vsub.f32 %v3471, %v3507
      %v3514 = vsub.f32 %v3472, %v3508
      %v3515 = vsub.f32 %v3473, %v3509
      %v3516 = vsub.f32 %v3474, %v3507
      %v3517 = vsub.f32 %v3475, %v3508
      %v3518 = vsub.f32 %v3476, %v3509
      %v3519 = vsub.f32 %v3477, %v3507
      %v3520 = vsub.f32 %v3478, %v3508
      %v3521 = vsub.f32 %v3479, %v3509
      %v3522 = vmul.f32 %v3510, %v3510
      %v3523 = vmul.f32 %v3511, %v3511
      %v3524 = vmul.f32 %v3512, %v3512
      %v3525 = vmul.f32 %v3513, %v3513
      %v3526 = vmul.f32 %v3514, %v3514
      %v3527 = vmul.f32 %v3515, %v3515
      %v3528 = vmul.f32 %v3516, %v3516
      %v3529 = vmul.f32 %v3517, %v3517
      %v3530 = vmul.f32 %v3518, %v3518
      %v3531 = vmul.f32 %v3519, %v3519
      %v3532 = vmul.f32 %v3520, %v3520
      %v3533 = vmul.f32 %v3521, %v3521
      %v3534 = vadd.f32 %v3522, %v3525
      %v3535 = vadd.f32 %v3534, %v3528
      %v3536 = vadd.f32 %v3535, %v3531
      %v3537 = vrot.slane %v3536, 4
      %v3538 = vadd.f32 %v3536, %v3537
      %v3539 = vrot.slane %v3538, 2
      %v3540 = vadd.f32 %v3538, %v3539
      %v3541 = vrot.slane %v3540, 1
      %v3542 = vadd.f32 %v3540, %v3541
      %v3543 = vadd.f32 %v3523, %v3526
      %v3544 = vadd.f32 %v3543, %v3529
      %v3545 = vadd.f32 %v3544, %v3532
      %v3546 = vrot.slane %v3545, 4
      %v3547 = vadd.f32 %v3545, %v3546
      %v3548 = vrot.slane %v3547, 2
      %v3549 = vadd.f32 %v3547, %v3548
      %v3550 = vrot.slane %v3549, 1
      %v3551 = vadd.f32 %v3549, %v3550
      %v3552 = vadd.f32 %v3524, %v3527
      %v3553 = vadd.f32 %v3552, %v3530
      %v3554 = vadd.f32 %v3553, %v3533
      %v3555 = vrot.slane %v3554, 4
      %v3556 = vadd.f32 %v3554, %v3555
      %v3557 = vrot.slane %v3556, 2
      %v3558 = vadd.f32 %v3556, %v3557
      %v3559 = vrot.slane %v3558, 1
      %v3560 = vadd.f32 %v3558, %v3559
      %v3561 = vmul.f32 %v3542, 0.03125
      %v3562 = vmul.f32 %v3551, 0.03125
      %v3563 = vmul.f32 %v3560, 0.03125
      %v3564 = vadd.f32 %v3561, 1e-05
      %v3565 = vadd.f32 %v3562, 1e-05
      %v3566 = vadd.f32 %v3563, 1e-05
      %v3567 = vrsqrt.pop %v3564
      %v3568 = vrsqrt.pop %v3565
      %v3569 = vrsqrt.pop %v3566
      %v3570 = vmul.f32 %v3510, %v3567
      %v3571 = vmul.f32 %v3511, %v3568
      %v3572 = vmul.f32 %v3512, %v3569
      %v3573 = vmul.f32 %v3513, %v3567
      %v3574 = vmul.f32 %v3514, %v3568
      %v3575 = vmul.f32 %v3515, %v3569
      %v3576 = vmul.f32 %v3516, %v3567
      %v3577 = vmul.f32 %v3517, %v3568
      %v3578 = vmul.f32 %v3518, %v3569
      %v3579 = vmul.f32 %v3519, %v3567
      %v3580 = vmul.f32 %v3520, %v3568
      %v3581 = vmul.f32 %v3521, %v3569
      %v3582 = vld [vmem:[%s39] sm:$0x3f]
      %v3584 = vlaneseq
      %v3585 = vshrl.u32 %v3584, 7
      %v3586 = vsub.s32 0, %v3585
      %v3587 = vrot.slane %v3582, %v3586
      %v3588 = vlaneseq
      %v3589 = vshrl.u32 %v3588, 7
      %v3590 = vsub.s32 2, %v3589
      %v3591 = vrot.slane %v3582, %v3590
      %v3592 = vlaneseq
      %v3593 = vshrl.u32 %v3592, 7
      %v3594 = vsub.s32 4, %v3593
      %v3595 = vrot.slane %v3582, %v3594
      %v3599 = vmul.f32 %v3570, %v3587
      %v3600 = vmul.f32 %v3571, %v3591
      %v3601 = vmul.f32 %v3572, %v3595
      %v3602 = vmul.f32 %v3573, %v3587
      %v3603 = vmul.f32 %v3574, %v3591
      %v3604 = vmul.f32 %v3575, %v3595
      %v3605 = vmul.f32 %v3576, %v3587
      %v3606 = vmul.f32 %v3577, %v3591
      %v3607 = vmul.f32 %v3578, %v3595
      %v3608 = vmul.f32 %v3579, %v3587
      %v3609 = vmul.f32 %v3580, %v3591
      %v3610 = vmul.f32 %v3581, %v3595
      %v3611 = vld [vmem:[%s41] sm:$0x3f]
      %v3613 = vlaneseq
      %v3614 = vshrl.u32 %v3613, 7
      %v3615 = vsub.s32 0, %v3614
      %v3616 = vrot.slane %v3611, %v3615
      %v3617 = vlaneseq
      %v3618 = vshrl.u32 %v3617, 7
      %v3619 = vsub.s32 2, %v3618
      %v3620 = vrot.slane %v3611, %v3619
      %v3621 = vlaneseq
      %v3622 = vshrl.u32 %v3621, 7
      %v3623 = vsub.s32 4, %v3622
      %v3624 = vrot.slane %v3611, %v3623
      %v3628 = vadd.f32 %v3599, %v3616
      %v3629 = vadd.f32 %v3600, %v3620
      %v3630 = vadd.f32 %v3601, %v3624
      %v3631 = vadd.f32 %v3602, %v3616
      %v3632 = vadd.f32 %v3603, %v3620
      %v3633 = vadd.f32 %v3604, %v3624
      %v3634 = vadd.f32 %v3605, %v3616
      %v3635 = vadd.f32 %v3606, %v3620
      %v3636 = vadd.f32 %v3607, %v3624
      %v3637 = vadd.f32 %v3608, %v3616
      %v3638 = vadd.f32 %v3609, %v3620
      %v3639 = vadd.f32 %v3610, %v3624
      %v3640 = vxor.u32 %v3628, 2147483648
      %v3641 = vxor.u32 %v3629, 2147483648
      %v3642 = vxor.u32 %v3630, 2147483648
      %v3643 = vxor.u32 %v3631, 2147483648
      %v3644 = vxor.u32 %v3632, 2147483648
      %v3645 = vxor.u32 %v3633, 2147483648
      %v3646 = vxor.u32 %v3634, 2147483648
      %v3647 = vxor.u32 %v3635, 2147483648
      %v3648 = vxor.u32 %v3636, 2147483648
      %v3649 = vxor.u32 %v3637, 2147483648
      %v3650 = vxor.u32 %v3638, 2147483648
      %v3651 = vxor.u32 %v3639, 2147483648
      %v3652 = vmul.f32 %v3640, 1.442695
      %v3653 = vpow.pop %v3652
      %v3654 = vmul.f32 %v3641, 1.442695
      %v3655 = vpow.pop %v3654
      %v3656 = vmul.f32 %v3642, 1.442695
      %v3657 = vpow.pop %v3656
      %v3658 = vmul.f32 %v3643, 1.442695
      %v3659 = vpow.pop %v3658
      %v3660 = vmul.f32 %v3644, 1.442695
      %v3661 = vpow.pop %v3660
      %v3662 = vmul.f32 %v3645, 1.442695
      %v3663 = vpow.pop %v3662
      %v3664 = vmul.f32 %v3646, 1.442695
      %v3665 = vpow.pop %v3664
      %v3666 = vmul.f32 %v3647, 1.442695
      %v3667 = vpow.pop %v3666
      %v3668 = vmul.f32 %v3648, 1.442695
      %v3669 = vpow.pop %v3668
      %v3670 = vmul.f32 %v3649, 1.442695
      %v3671 = vpow.pop %v3670
      %v3672 = vmul.f32 %v3650, 1.442695
      %v3673 = vpow.pop %v3672
      %v3674 = vmul.f32 %v3651, 1.442695
      %v3675 = vpow.pop %v3674
      %v3676 = vadd.f32 %v3653, 1.0
      %v3677 = vadd.f32 %v3655, 1.0
      %v3678 = vadd.f32 %v3657, 1.0
      %v3679 = vadd.f32 %v3659, 1.0
      %v3680 = vadd.f32 %v3661, 1.0
      %v3681 = vadd.f32 %v3663, 1.0
      %v3682 = vadd.f32 %v3665, 1.0
      %v3683 = vadd.f32 %v3667, 1.0
      %v3684 = vadd.f32 %v3669, 1.0
      %v3685 = vadd.f32 %v3671, 1.0
      %v3686 = vadd.f32 %v3673, 1.0
      %v3687 = vadd.f32 %v3675, 1.0
      %v3688 = vrcp.pop %v3676
      %v3689 = vmul.f32 1.0, %v3688
      %v3690 = vrcp.pop %v3677
      %v3691 = vmul.f32 1.0, %v3690
      %v3692 = vrcp.pop %v3678
      %v3693 = vmul.f32 1.0, %v3692
      %v3694 = vrcp.pop %v3679
      %v3695 = vmul.f32 1.0, %v3694
      %v3696 = vrcp.pop %v3680
      %v3697 = vmul.f32 1.0, %v3696
      %v3698 = vrcp.pop %v3681
      %v3699 = vmul.f32 1.0, %v3698
      %v3700 = vrcp.pop %v3682
      %v3701 = vmul.f32 1.0, %v3700
      %v3702 = vrcp.pop %v3683
      %v3703 = vmul.f32 1.0, %v3702
      %v3704 = vrcp.pop %v3684
      %v3705 = vmul.f32 1.0, %v3704
      %v3706 = vrcp.pop %v3685
      %v3707 = vmul.f32 1.0, %v3706
      %v3708 = vrcp.pop %v3686
      %v3709 = vmul.f32 1.0, %v3708
      %v3710 = vrcp.pop %v3687
      %v3711 = vmul.f32 1.0, %v3710
      %3714 = vrot.lane.b32.xlu0 %v3691, 3
      %v3715 = vpop.permute.xlu0 %3714
      %3716 = vrot.lane.b32.xlu0 %v3697, 3
      %v3717 = vpop.permute.xlu0 %3716
      %3722 = vrot.lane.b32.xlu0 %v3693, 6
      %v3723 = vpop.permute.xlu0 %3722
      %3724 = vrot.lane.b32.xlu0 %v3699, 6
      %v3725 = vpop.permute.xlu0 %3724
      %3730 = vrot.lane.b32.xlu0 %v3701, 9
      %v3731 = vpop.permute.xlu0 %3730
      %3732 = vrot.lane.b32.xlu0 %v3707, 9
      %v3733 = vpop.permute.xlu0 %3732
      %3738 = vrot.lane.b32.xlu0 %v3703, 12
      %v3739 = vpop.permute.xlu0 %3738
      %3740 = vrot.lane.b32.xlu0 %v3709, 12
      %v3741 = vpop.permute.xlu0 %3740
      %3746 = vrot.lane.b32.xlu0 %v3705, 15
      %v3747 = vpop.permute.xlu0 %3746
      %3748 = vrot.lane.b32.xlu0 %v3711, 15
      %v3749 = vpop.permute.xlu0 %3748
      %vm3752 = vcmask 23552
      %v3753 = vsel %vm3752, %v3689, %v3715
      %v3754 = vsel %vm3752, %v3695, %v3717
      %vm3755 = vcmask 48128
      %v3756 = vsel %vm3755, %v3753, %v3723
      %v3757 = vsel %vm3755, %v3754, %v3725
      %v3758 = vsel %vm1161, %v3756, %v3731
      %v3759 = vsel %vm1161, %v3757, %v3733
      %v3760 = vsel %vm1037, %v3758, %v3739
      %v3761 = vsel %vm1037, %v3759, %v3741
      %vm3762 = vcmask 121856
      %v3763 = vsel %vm3762, %v3760, %v3747
      %v3764 = vsel %vm3762, %v3761, %v3749
      %v3765 = vstv %s80
      %vm3766 = vcmp.lt.s32.totalorder %v1020, %v3765
      %v3767 = vsel %vm3766, 1, 0
      %v3768 = vcvt.s32.f32 %v3767
      %vm3769 = vcmp.le.s32.totalorder %v1020, %v3765
      %v3770 = vsel %vm3769, 1, 0
      %v3771 = vcvt.s32.f32 %v3770
      %v3772 = vlaneseq
      %v3773 = vshrl.u32 %v3772, 7
      %v3774 = vadd.s32 %v3773, 8
      %v3775 = vadd.s32 %v3773, 16
      %vm3776 = vcmp.eq.s32.totalorder %v3773, 0
      %vm3777 = vcmp.eq.s32.totalorder %v3774, 0
      %vm3778 = vcmp.eq.s32.totalorder %v3775, 0
      %v3779 = vsel %vm3776, 1, 0
      %v3780 = vsel %vm3777, 1, 0
      %v3781 = vsel %vm3778, 1, 0
      %v3782 = vcvt.s32.f32 %v3779
      %v3783 = vcvt.s32.f32 %v3780
      %v3784 = vcvt.s32.f32 %v3781
      %v3785 = vld [vmem:[%s11] sm:$0xff]
      %v3786 = vld [vmem:[%s11 + $0x8] sm:$0xff]
      %v3787 = vld [vmem:[%s11 + $0x10] sm:$0x1f]
      %v3789 = vlaneseq
      %v3790 = vshrl.u32 %v3789, 7
      %v3791 = vsub.s32 0, %v3790
      %v3792 = vrot.slane %v3768, %v3791
      %v3794 = vmul.f32 %v3792, %v3785
      %v3795 = vmul.f32 %v3792, %v3786
      %v3796 = vmul.f32 %v3792, %v3787
      %v3797 = vsub.f32 1.0, %v3768
      %v3799 = vlaneseq
      %v3800 = vshrl.u32 %v3799, 7
      %v3801 = vsub.s32 0, %v3800
      %v3802 = vrot.slane %v3797, %v3801
      %v3804 = vmul.f32 %v3802, %v3782
      %v3805 = vmul.f32 %v3802, %v3783
      %v3806 = vmul.f32 %v3802, %v3784
      %v3807 = vadd.f32 %v3794, %v3804
      %v3808 = vadd.f32 %v3795, %v3805
      %v3809 = vadd.f32 %v3796, %v3806
      %v3811 = vlaneseq
      %v3812 = vshrl.u32 %v3811, 7
      %v3813 = vsub.s32 0, %v3812
      %v3814 = vrot.slane %v3771, %v3813
      %v3816 = vmul.f32 %v3814, %v3785
      %v3817 = vmul.f32 %v3814, %v3786
      %v3818 = vmul.f32 %v3814, %v3787
      %v3819 = vsub.f32 1.0, %v3771
      %v3821 = vlaneseq
      %v3822 = vshrl.u32 %v3821, 7
      %v3823 = vsub.s32 0, %v3822
      %v3824 = vrot.slane %v3819, %v3823
      %v3826 = vmul.f32 %v3824, %v3782
      %v3827 = vmul.f32 %v3824, %v3783
      %v3828 = vmul.f32 %v3824, %v3784
      %v3829 = vadd.f32 %v3816, %v3826
      %v3830 = vadd.f32 %v3817, %v3827
      %v3831 = vadd.f32 %v3818, %v3828
      %v3832 = vld [vmem:[%s43] sm:$0xff]
      %v3833 = vld [vmem:[%s43 + $0x8] sm:$0xff]
      %v3834 = vld [vmem:[%s43 + $0x10] sm:$0xff]
      %v3835 = vld [vmem:[%s43 + $0x18] sm:$0xff]
      %v3836 = vld [vmem:[%s43 + $0x20] sm:$0xff]
      %v3837 = vld [vmem:[%s43 + $0x28] sm:$0xff]
      %v3838 = vld [vmem:[%s43 + $0x30] sm:$0xff]
      %v3839 = vld [vmem:[%s43 + $0x38] sm:$0xff]
      %vm3840 = vcmask 130048
      %v3842 = vsel %vm3840, %v3832, 0
      %v3845 = vsel %vm3840, %v3833, 0
      %v3848 = vsel %vm3840, %v3834, 0
      %v3851 = vsel %vm3840, %v3835, 0
      %v3854 = vsel %vm3840, %v3836, 0
      %v3857 = vsel %vm3840, %v3837, 0
      %v3860 = vsel %vm3840, %v3838, 0
      %v3863 = vsel %vm3840, %v3839, 0
      %3865 = vmatprep.subr.mxu0 0.0
      %3866 = vmatpush1.msra.mxu0 0.0
      %3867 = vmatprep.subr.mxu0 0.0
      %3868 = vmatpush1.msra.mxu0 0.0
      %3869 = vmatprep.subr.mxu0 0.0
      %3870 = vmatpush1.msra.mxu0 0.0
      %3871 = vmatprep.subr.mxu0 0.0
      %3872 = vmatpush1.msra.mxu0 0.0
      %3873 = vmatprep.subr.mxu0 0.0
      %3874 = vmatpush1.msra.mxu0 0.0
      %3875 = vmatprep.subr.mxu0 0.0
      %3876 = vmatpush1.msra.mxu0 0.0
      %3877 = vmatprep.subr.mxu0 0.0
      %3878 = vmatpush1.msra.mxu0 0.0
      %3879 = vmatprep.subr.mxu0 0.0
      %3880 = vmatpush1.msra.mxu0 0.0
      %3881 = vmatprep.subr.mxu0 0.0
      %3882 = vmatpush1.msra.mxu0 0.0
      %3883 = vmatprep.subr.mxu0 0.0
      %3884 = vmatpush1.msra.mxu0 0.0
      %3885 = vmatprep.subr.mxu0 0.0
      %3886 = vmatpush1.msra.mxu0 0.0
      %3887 = vmatprep.subr.mxu0 0.0
      %3888 = vmatpush1.msra.mxu0 0.0
      %3889 = vmatprep.subr.mxu0 0.0
      %3890 = vmatpush1.msra.mxu0 0.0
      %3891 = vmatprep.subr.mxu0 0.0
      %3892 = vmatpush1.msra.mxu0 0.0
      %3893 = vmatprep.subr.mxu0 0.0
      %3894 = vmatpush1.msra.mxu0 %v3764
      %3895 = vmatprep.subr.mxu0 0.0
      %3896 = vmatpush1.msra.mxu0 %v3763
      %3897 = vmatprep.subr.mxu0 0.0
      %3898 = vmatpush2.msra.mxu0 0.0
      %3899 = vmatprep.subr.mxu0 0.0
      %3900 = vmatpush2.msra.mxu0 0.0
      %3901 = vmatprep.subr.mxu0 0.0
      %3902 = vmatpush2.msra.mxu0 0.0
      %3903 = vmatprep.subr.mxu0 0.0
      %3904 = vmatpush2.msra.mxu0 0.0
      %3905 = vmatprep.subr.mxu0 0.0
      %3906 = vmatpush2.msra.mxu0 0.0
      %3907 = vmatprep.subr.mxu0 0.0
      %3908 = vmatpush2.msra.mxu0 0.0
      %3909 = vmatprep.subr.mxu0 0.0
      %3910 = vmatpush2.msra.mxu0 0.0
      %3911 = vmatprep.subr.mxu0 0.0
      %3912 = vmatpush2.msra.mxu0 0.0
      %3913 = vmatprep.subr.mxu0 0.0
      %3914 = vmatpush2.msra.mxu0 0.0
      %3915 = vmatprep.subr.mxu0 0.0
      %3916 = vmatpush2.msra.mxu0 0.0
      %3917 = vmatprep.subr.mxu0 0.0
      %3918 = vmatpush2.msra.mxu0 0.0
      %3919 = vmatprep.subr.mxu0 0.0
      %3920 = vmatpush2.msra.mxu0 0.0
      %3921 = vmatprep.subr.mxu0 0.0
      %3922 = vmatpush2.msra.mxu0 0.0
      %3923 = vmatprep.subr.mxu0 0.0
      %3924 = vmatpush2.msra.mxu0 0.0
      %3925 = vmatprep.subr.mxu0 0.0
      %3926 = vmatpush2.msra.mxu0 0.0
      %3927 = vmatprep.subr.mxu0 0.0
      %3928 = vmatpush2.msra.mxu0 0.0
      %3929 = vmatprep.mubr.f32.mxu0 0.0
      %3930 = vmatmul.mubr.f32.gmra.mxu0 %v3842
      %v3931 = vpop.f32.mrf.mxu0
      %v3932 = vadd.f32 0.0, %v3931
      %v3933 = vpop.f32.mrf.mxu0
      %3934 = vmatprep.mubr.f32.mxu0 0.0
      %3935 = vmatmul.mubr.f32.gmra.mxu0 %v3845
      %v3936 = vpop.f32.mrf.mxu0
      %v3937 = vadd.f32 0.0, %v3936
      %v3938 = vpop.f32.mrf.mxu0
      %3939 = vmatprep.mubr.f32.mxu0 0.0
      %3940 = vmatmul.mubr.f32.gmra.mxu0 %v3848
      %v3941 = vpop.f32.mrf.mxu0
      %v3942 = vadd.f32 0.0, %v3941
      %v3943 = vpop.f32.mrf.mxu0
      %3944 = vmatprep.mubr.f32.mxu0 0.0
      %3945 = vmatmul.mubr.f32.gmra.mxu0 %v3851
      %v3946 = vpop.f32.mrf.mxu0
      %v3947 = vadd.f32 0.0, %v3946
      %v3948 = vpop.f32.mrf.mxu0
      %3949 = vmatprep.mubr.f32.mxu0 0.0
      %3950 = vmatmul.mubr.f32.gmra.mxu0 %v3854
      %v3951 = vpop.f32.mrf.mxu0
      %v3952 = vadd.f32 0.0, %v3951
      %v3953 = vpop.f32.mrf.mxu0
      %3954 = vmatprep.mubr.f32.mxu0 0.0
      %3955 = vmatmul.mubr.f32.gmra.mxu0 %v3857
      %v3956 = vpop.f32.mrf.mxu0
      %v3957 = vadd.f32 0.0, %v3956
      %v3958 = vpop.f32.mrf.mxu0
      %3959 = vmatprep.mubr.f32.mxu0 0.0
      %3960 = vmatmul.mubr.f32.gmra.mxu0 %v3860
      %v3961 = vpop.f32.mrf.mxu0
      %v3962 = vadd.f32 0.0, %v3961
      %v3963 = vpop.f32.mrf.mxu0
      %3964 = vmatprep.mubr.f32.mxu0 0.0
      %3965 = vmatmul.mubr.f32.gmra.mxu0 %v3863
      %v3966 = vpop.f32.mrf.mxu0
      %v3967 = vadd.f32 0.0, %v3966
      %v3968 = vpop.f32.mrf.mxu0
      %3969 = vdwg.mxu0
      %v3970 = vld [vmem:[%s45] sm:$0xff]
      %v3971 = vld [vmem:[%s45 + $0x8] sm:$0xff]
      %v3972 = vld [vmem:[%s45 + $0x10] sm:$0xff]
      %v3973 = vld [vmem:[%s45 + $0x18] sm:$0xff]
      %3975 = vset.pattern.permute.xlu0 0
      %3976 = vperm.xlu0 %3975, %v3970
      %v3977 = vpop.permute.xlu0 %3976
      %3980 = vset.pattern.permute.xlu0 0
      %3981 = vperm.xlu0 %3980, %v3971
      %v3982 = vpop.permute.xlu0 %3981
      %3985 = vset.pattern.permute.xlu0 0
      %3986 = vperm.xlu0 %3985, %v3972
      %v3987 = vpop.permute.xlu0 %3986
      %3990 = vset.pattern.permute.xlu0 0
      %3991 = vperm.xlu0 %3990, %v3973
      %v3992 = vpop.permute.xlu0 %3991
      %v3994 = vadd.f32 %v3932, %v3977
      %v3995 = vadd.f32 %v3937, %v3982
      %v3996 = vadd.f32 %v3942, %v3987
      %v3997 = vadd.f32 %v3947, %v3992
      %v3998 = vld [vmem:[%s49] sm:$0xff]
      %v3999 = vld [vmem:[%s49 + $0x8] sm:$0xff]
      %v4000 = vld [vmem:[%s49 + $0x10] sm:$0xff]
      %v4001 = vld [vmem:[%s49 + $0x18] sm:$0xff]
      %vm4002 = vcmask 171008
      %v4004 = vsel %vm4002, %v3998, 0
      %v4007 = vsel %vm4002, %v3999, 0
      %v4010 = vsel %vm4002, %v4000, 0
      %v4013 = vsel %vm4002, %v4001, 0
      %vm4015 = vcmask 1044480
      %v4017 = vsel %vm4015, %v3809, 0
      %4019 = vmatprep.subr.mxu0 0.0
      %4020 = vmatpush1.msra.mxu0 0.0
      %4021 = vmatprep.subr.mxu0 0.0
      %4022 = vmatpush1.msra.mxu0 0.0
      %4023 = vmatprep.subr.mxu0 0.0
      %4024 = vmatpush1.msra.mxu0 0.0
      %4025 = vmatprep.subr.mxu0 0.0
      %4026 = vmatpush1.msra.mxu0 0.0
      %4027 = vmatprep.subr.mxu0 0.0
      %4028 = vmatpush1.msra.mxu0 0.0
      %4029 = vmatprep.subr.mxu0 0.0
      %4030 = vmatpush1.msra.mxu0 0.0
      %4031 = vmatprep.subr.mxu0 0.0
      %4032 = vmatpush1.msra.mxu0 0.0
      %4033 = vmatprep.subr.mxu0 0.0
      %4034 = vmatpush1.msra.mxu0 0.0
      %4035 = vmatprep.subr.mxu0 0.0
      %4036 = vmatpush1.msra.mxu0 0.0
      %4037 = vmatprep.subr.mxu0 0.0
      %4038 = vmatpush1.msra.mxu0 0.0
      %4039 = vmatprep.subr.mxu0 0.0
      %4040 = vmatpush1.msra.mxu0 0.0
      %4041 = vmatprep.subr.mxu0 0.0
      %4042 = vmatpush1.msra.mxu0 0.0
      %4043 = vmatprep.subr.mxu0 0.0
      %4044 = vmatpush1.msra.mxu0 0.0
      %4045 = vmatprep.subr.mxu0 0.0
      %4046 = vmatpush1.msra.mxu0 %v4017
      %4047 = vmatprep.subr.mxu0 0.0
      %4048 = vmatpush1.msra.mxu0 %v3808
      %4049 = vmatprep.subr.mxu0 0.0
      %4050 = vmatpush1.msra.mxu0 %v3807
      %4051 = vmatprep.subr.mxu0 0.0
      %4052 = vmatpush2.msra.mxu0 0.0
      %4053 = vmatprep.subr.mxu0 0.0
      %4054 = vmatpush2.msra.mxu0 0.0
      %4055 = vmatprep.subr.mxu0 0.0
      %4056 = vmatpush2.msra.mxu0 0.0
      %4057 = vmatprep.subr.mxu0 0.0
      %4058 = vmatpush2.msra.mxu0 0.0
      %4059 = vmatprep.subr.mxu0 0.0
      %4060 = vmatpush2.msra.mxu0 0.0
      %4061 = vmatprep.subr.mxu0 0.0
      %4062 = vmatpush2.msra.mxu0 0.0
      %4063 = vmatprep.subr.mxu0 0.0
      %4064 = vmatpush2.msra.mxu0 0.0
      %4065 = vmatprep.subr.mxu0 0.0
      %4066 = vmatpush2.msra.mxu0 0.0
      %4067 = vmatprep.subr.mxu0 0.0
      %4068 = vmatpush2.msra.mxu0 0.0
      %4069 = vmatprep.subr.mxu0 0.0
      %4070 = vmatpush2.msra.mxu0 0.0
      %4071 = vmatprep.subr.mxu0 0.0
      %4072 = vmatpush2.msra.mxu0 0.0
      %4073 = vmatprep.subr.mxu0 0.0
      %4074 = vmatpush2.msra.mxu0 0.0
      %4075 = vmatprep.subr.mxu0 0.0
      %4076 = vmatpush2.msra.mxu0 0.0
      %4077 = vmatprep.subr.mxu0 0.0
      %4078 = vmatpush2.msra.mxu0 0.0
      %4079 = vmatprep.subr.mxu0 0.0
      %4080 = vmatpush2.msra.mxu0 0.0
      %4081 = vmatprep.subr.mxu0 0.0
      %4082 = vmatpush2.msra.mxu0 0.0
      %4083 = vmatprep.mubr.f32.mxu0 0.0
      %4084 = vmatmul.mubr.f32.gmra.mxu0 %v4004
      %v4085 = vpop.f32.mrf.mxu0
      %v4086 = vadd.f32 0.0, %v4085
      %v4087 = vpop.f32.mrf.mxu0
      %4088 = vmatprep.mubr.f32.mxu0 0.0
      %4089 = vmatmul.mubr.f32.gmra.mxu0 %v4007
      %v4090 = vpop.f32.mrf.mxu0
      %v4091 = vadd.f32 0.0, %v4090
      %v4092 = vpop.f32.mrf.mxu0
      %4093 = vmatprep.mubr.f32.mxu0 0.0
      %4094 = vmatmul.mubr.f32.gmra.mxu0 %v4010
      %v4095 = vpop.f32.mrf.mxu0
      %v4096 = vadd.f32 0.0, %v4095
      %v4097 = vpop.f32.mrf.mxu0
      %4098 = vmatprep.mubr.f32.mxu0 0.0
      %4099 = vmatmul.mubr.f32.gmra.mxu0 %v4013
      %v4100 = vpop.f32.mrf.mxu0
      %v4101 = vadd.f32 0.0, %v4100
      %v4102 = vpop.f32.mrf.mxu0
      %4103 = vdwg.mxu0
      %v4104 = vadd.f32 %v3994, %v4086
      %v4105 = vadd.f32 %v3995, %v4091
      %v4106 = vadd.f32 %v3996, %v4096
      %v4107 = vadd.f32 %v3997, %v4101
      %v4108 = vmax.f32 %v4104, 0.0
      %v4109 = vmax.f32 %v4105, 0.0
      %v4110 = vmax.f32 %v4106, 0.0
      %v4111 = vmax.f32 %v4107, 0.0
      %v4112 = vmul.f32 %v4108, %v1129
      %v4113 = vmul.f32 %v4109, %v1129
      %v4114 = vmul.f32 %v4110, %v1129
      %v4115 = vmul.f32 %v4111, %v1129
      %v4116 = vld [vmem:[%s53] sm:$0xff]
      %v4117 = vld [vmem:[%s53 + $0x8] sm:$0xff]
      %v4118 = vld [vmem:[%s53 + $0x10] sm:$0x1f]
      %v4119 = vld [vmem:[%s55] sm:$0xff]
      %v4120 = vld [vmem:[%s55 + $0x8] sm:$0xff]
      %v4121 = vld [vmem:[%s55 + $0x10] sm:$0x1f]
      %4123 = vset.pattern.permute.xlu0 0
      %4124 = vperm.xlu0 %4123, %v4119
      %v4125 = vpop.permute.xlu0 %4124
      %4128 = vset.pattern.permute.xlu0 0
      %4129 = vperm.xlu0 %4128, %v4120
      %v4130 = vpop.permute.xlu0 %4129
      %4133 = vset.pattern.permute.xlu0 0
      %4134 = vperm.xlu0 %4133, %v4121
      %v4135 = vpop.permute.xlu0 %4134
      %vm4137 = vcmask 261120
      %v4139 = vsel %vm4137, %v4116, 0
      %v4142 = vsel %vm4137, %v4117, 0
      %v4145 = vsel %vm4137, %v4118, 0
      %4147 = vmatprep.subr.mxu0 0.0
      %4148 = vmatpush1.msra.mxu0 0.0
      %4149 = vmatprep.subr.mxu0 0.0
      %4150 = vmatpush1.msra.mxu0 0.0
      %4151 = vmatprep.subr.mxu0 0.0
      %4152 = vmatpush1.msra.mxu0 0.0
      %4153 = vmatprep.subr.mxu0 0.0
      %4154 = vmatpush1.msra.mxu0 0.0
      %4155 = vmatprep.subr.mxu0 0.0
      %4156 = vmatpush1.msra.mxu0 0.0
      %4157 = vmatprep.subr.mxu0 0.0
      %4158 = vmatpush1.msra.mxu0 0.0
      %4159 = vmatprep.subr.mxu0 0.0
      %4160 = vmatpush1.msra.mxu0 0.0
      %4161 = vmatprep.subr.mxu0 0.0
      %4162 = vmatpush1.msra.mxu0 0.0
      %4163 = vmatprep.subr.mxu0 0.0
      %4164 = vmatpush1.msra.mxu0 0.0
      %4165 = vmatprep.subr.mxu0 0.0
      %4166 = vmatpush1.msra.mxu0 0.0
      %4167 = vmatprep.subr.mxu0 0.0
      %4168 = vmatpush1.msra.mxu0 0.0
      %4169 = vmatprep.subr.mxu0 0.0
      %4170 = vmatpush1.msra.mxu0 0.0
      %4171 = vmatprep.subr.mxu0 0.0
      %4172 = vmatpush1.msra.mxu0 %v4115
      %4173 = vmatprep.subr.mxu0 0.0
      %4174 = vmatpush1.msra.mxu0 %v4114
      %4175 = vmatprep.subr.mxu0 0.0
      %4176 = vmatpush1.msra.mxu0 %v4113
      %4177 = vmatprep.subr.mxu0 0.0
      %4178 = vmatpush1.msra.mxu0 %v4112
      %4179 = vmatprep.subr.mxu0 0.0
      %4180 = vmatpush2.msra.mxu0 0.0
      %4181 = vmatprep.subr.mxu0 0.0
      %4182 = vmatpush2.msra.mxu0 0.0
      %4183 = vmatprep.subr.mxu0 0.0
      %4184 = vmatpush2.msra.mxu0 0.0
      %4185 = vmatprep.subr.mxu0 0.0
      %4186 = vmatpush2.msra.mxu0 0.0
      %4187 = vmatprep.subr.mxu0 0.0
      %4188 = vmatpush2.msra.mxu0 0.0
      %4189 = vmatprep.subr.mxu0 0.0
      %4190 = vmatpush2.msra.mxu0 0.0
      %4191 = vmatprep.subr.mxu0 0.0
      %4192 = vmatpush2.msra.mxu0 0.0
      %4193 = vmatprep.subr.mxu0 0.0
      %4194 = vmatpush2.msra.mxu0 0.0
      %4195 = vmatprep.subr.mxu0 0.0
      %4196 = vmatpush2.msra.mxu0 0.0
      %4197 = vmatprep.subr.mxu0 0.0
      %4198 = vmatpush2.msra.mxu0 0.0
      %4199 = vmatprep.subr.mxu0 0.0
      %4200 = vmatpush2.msra.mxu0 0.0
      %4201 = vmatprep.subr.mxu0 0.0
      %4202 = vmatpush2.msra.mxu0 0.0
      %4203 = vmatprep.subr.mxu0 0.0
      %4204 = vmatpush2.msra.mxu0 0.0
      %4205 = vmatprep.subr.mxu0 0.0
      %4206 = vmatpush2.msra.mxu0 0.0
      %4207 = vmatprep.subr.mxu0 0.0
      %4208 = vmatpush2.msra.mxu0 0.0
      %4209 = vmatprep.subr.mxu0 0.0
      %4210 = vmatpush2.msra.mxu0 0.0
      %4211 = vmatprep.mubr.f32.mxu0 0.0
      %4212 = vmatmul.mubr.f32.gmra.mxu0 %v4139
      %v4213 = vpop.f32.mrf.mxu0
      %v4214 = vadd.f32 %v4125, %v4213
      %v4215 = vpop.f32.mrf.mxu0
      %4216 = vmatprep.mubr.f32.mxu0 0.0
      %4217 = vmatmul.mubr.f32.gmra.mxu0 %v4142
      %v4218 = vpop.f32.mrf.mxu0
      %v4219 = vadd.f32 %v4130, %v4218
      %v4220 = vpop.f32.mrf.mxu0
      %4221 = vmatprep.mubr.f32.mxu0 0.0
      %4222 = vmatmul.mubr.f32.gmra.mxu0 %v4145
      %v4223 = vpop.f32.mrf.mxu0
      %v4224 = vadd.f32 %v4135, %v4223
      %v4225 = vpop.f32.mrf.mxu0
      %4226 = vdwg.mxu0
      %vm4227 = vcmask 146432
      %v4228 = vsel %vm4227, %v4214, -inf
      %v4229 = vsel %vm4227, %v4219, -inf
      %vm4230 = vcmask 143360
      %v4231 = vsel %vm4230, %v4224, -inf
      %v4232 = vmax.f32 %v4228, %v4229
      %v4233 = vmax.f32 %v4232, %v4231
      %v4234 = vrot.slane %v4233, 4
      %v4235 = vmax.f32 %v4233, %v4234
      %v4236 = vrot.slane %v4235, 2
      %v4237 = vmax.f32 %v4235, %v4236
      %v4238 = vrot.slane %v4237, 1
      %v4239 = vmax.f32 %v4237, %v4238
      %v4240 = vsub.f32 %v4214, %v4239
      %v4241 = vsub.f32 %v4219, %v4239
      %v4242 = vsub.f32 %v4224, %v4239
      %v4243 = vmul.f32 %v4240, 1.442695
      %v4244 = vpow.pop %v4243
      %v4245 = vmul.f32 %v4241, 1.442695
      %v4246 = vpow.pop %v4245
      %v4247 = vmul.f32 %v4242, 1.442695
      %v4248 = vpow.pop %v4247
      %v4249 = vsel %vm4227, %v4244, 0.0
      %v4250 = vsel %vm4227, %v4246, 0.0
      %v4251 = vadd.f32 %v4249, %v4250
      %v4252 = vsel %vm4230, %v4248, 0.0
      %v4253 = vadd.f32 %v4251, %v4252
      %v4254 = vrot.slane %v4253, 4
      %v4255 = vadd.f32 %v4253, %v4254
      %v4256 = vrot.slane %v4255, 2
      %v4257 = vadd.f32 %v4255, %v4256
      %v4258 = vrot.slane %v4257, 1
      %v4259 = vadd.f32 %v4257, %v4258
      %v4260 = vlog2.pop %v4259
      %v4261 = vmul.f32 %v4260, 0.6931472
      %v4262 = vadd.f32 %v4261, %v4239
      %v4263 = vmul.f32 %v3785, %v4214
      %v4264 = vmul.f32 %v3786, %v4219
      %v4265 = vmul.f32 %v3787, %v4224
      %v4266 = vsel %vm4227, %v4263, 0.0
      %v4267 = vsel %vm4227, %v4264, 0.0
      %v4268 = vadd.f32 %v4266, %v4267
      %v4269 = vsel %vm4230, %v4265, 0.0
      %v4270 = vadd.f32 %v4268, %v4269
      %v4271 = vrot.slane %v4270, 4
      %v4272 = vadd.f32 %v4270, %v4271
      %v4273 = vrot.slane %v4272, 2
      %v4274 = vadd.f32 %v4272, %v4273
      %v4275 = vrot.slane %v4274, 1
      %v4276 = vadd.f32 %v4274, %v4275
      %v4277 = vsub.f32 %v4262, %v4276
      %vm4278 = vcmp.eq.s32.totalorder %v1020, %v3765
      %v4279 = vsel %vm4278, 1, 0
      %v4280 = vcvt.s32.f32 %v4279
      %v4281 = vmul.f32 %v4277, %v4280
      %v4282 = vmul.f32 %v4281, %v1019
      %vm4283 = vcmask 139264
      %v4284 = vsel %vm4283, %v4282, 0.0
      %4285 = vadd.xlane.f32.xlu0 %v4284
      %v4286 = vpop.xlane.xlu0 %4285
      %v4287 = vrot.slane %v4286, 4
      %v4288 = vadd.f32 %v4286, %v4287
      %v4289 = vrot.slane %v4288, 2
      %v4290 = vadd.f32 %v4288, %v4289
      %v4291 = vrot.slane %v4290, 1
      %v4292 = vadd.f32 %v4290, %v4291
      %s4293 = vtos %v4292
      %v4294 = vld [vmem:[%s47] sm:$0xff]
      %v4295 = vld [vmem:[%s47 + $0x8] sm:$0xff]
      %v4296 = vld [vmem:[%s47 + $0x10] sm:$0xff]
      %v4297 = vld [vmem:[%s47 + $0x18] sm:$0xff]
      %4299 = vset.pattern.permute.xlu0 0
      %4300 = vperm.xlu0 %4299, %v4294
      %v4301 = vpop.permute.xlu0 %4300
      %4304 = vset.pattern.permute.xlu0 0
      %4305 = vperm.xlu0 %4304, %v4295
      %v4306 = vpop.permute.xlu0 %4305
      %4309 = vset.pattern.permute.xlu0 0
      %4310 = vperm.xlu0 %4309, %v4296
      %v4311 = vpop.permute.xlu0 %4310
      %4314 = vset.pattern.permute.xlu0 0
      %4315 = vperm.xlu0 %4314, %v4297
      %v4316 = vpop.permute.xlu0 %4315
      %v4318 = vadd.f32 %v3952, %v4301
      %v4319 = vadd.f32 %v3957, %v4306
      %v4320 = vadd.f32 %v3962, %v4311
      %v4321 = vadd.f32 %v3967, %v4316
      %v4322 = vld [vmem:[%s51] sm:$0xff]
      %v4323 = vld [vmem:[%s51 + $0x8] sm:$0xff]
      %v4324 = vld [vmem:[%s51 + $0x10] sm:$0xff]
      %v4325 = vld [vmem:[%s51 + $0x18] sm:$0xff]
      %v4327 = vsel %vm4002, %v4322, 0
      %v4330 = vsel %vm4002, %v4323, 0
      %v4333 = vsel %vm4002, %v4324, 0
      %v4336 = vsel %vm4002, %v4325, 0
      %v4339 = vsel %vm4015, %v3831, 0
      %4341 = vmatprep.subr.mxu0 0.0
      %4342 = vmatpush1.msra.mxu0 0.0
      %4343 = vmatprep.subr.mxu0 0.0
      %4344 = vmatpush1.msra.mxu0 0.0
      %4345 = vmatprep.subr.mxu0 0.0
      %4346 = vmatpush1.msra.mxu0 0.0
      %4347 = vmatprep.subr.mxu0 0.0
      %4348 = vmatpush1.msra.mxu0 0.0
      %4349 = vmatprep.subr.mxu0 0.0
      %4350 = vmatpush1.msra.mxu0 0.0
      %4351 = vmatprep.subr.mxu0 0.0
      %4352 = vmatpush1.msra.mxu0 0.0
      %4353 = vmatprep.subr.mxu0 0.0
      %4354 = vmatpush1.msra.mxu0 0.0
      %4355 = vmatprep.subr.mxu0 0.0
      %4356 = vmatpush1.msra.mxu0 0.0
      %4357 = vmatprep.subr.mxu0 0.0
      %4358 = vmatpush1.msra.mxu0 0.0
      %4359 = vmatprep.subr.mxu0 0.0
      %4360 = vmatpush1.msra.mxu0 0.0
      %4361 = vmatprep.subr.mxu0 0.0
      %4362 = vmatpush1.msra.mxu0 0.0
      %4363 = vmatprep.subr.mxu0 0.0
      %4364 = vmatpush1.msra.mxu0 0.0
      %4365 = vmatprep.subr.mxu0 0.0
      %4366 = vmatpush1.msra.mxu0 0.0
      %4367 = vmatprep.subr.mxu0 0.0
      %4368 = vmatpush1.msra.mxu0 %v4339
      %4369 = vmatprep.subr.mxu0 0.0
      %4370 = vmatpush1.msra.mxu0 %v3830
      %4371 = vmatprep.subr.mxu0 0.0
      %4372 = vmatpush1.msra.mxu0 %v3829
      %4373 = vmatprep.subr.mxu0 0.0
      %4374 = vmatpush2.msra.mxu0 0.0
      %4375 = vmatprep.subr.mxu0 0.0
      %4376 = vmatpush2.msra.mxu0 0.0
      %4377 = vmatprep.subr.mxu0 0.0
      %4378 = vmatpush2.msra.mxu0 0.0
      %4379 = vmatprep.subr.mxu0 0.0
      %4380 = vmatpush2.msra.mxu0 0.0
      %4381 = vmatprep.subr.mxu0 0.0
      %4382 = vmatpush2.msra.mxu0 0.0
      %4383 = vmatprep.subr.mxu0 0.0
      %4384 = vmatpush2.msra.mxu0 0.0
      %4385 = vmatprep.subr.mxu0 0.0
      %4386 = vmatpush2.msra.mxu0 0.0
      %4387 = vmatprep.subr.mxu0 0.0
      %4388 = vmatpush2.msra.mxu0 0.0
      %4389 = vmatprep.subr.mxu0 0.0
      %4390 = vmatpush2.msra.mxu0 0.0
      %4391 = vmatprep.subr.mxu0 0.0
      %4392 = vmatpush2.msra.mxu0 0.0
      %4393 = vmatprep.subr.mxu0 0.0
      %4394 = vmatpush2.msra.mxu0 0.0
      %4395 = vmatprep.subr.mxu0 0.0
      %4396 = vmatpush2.msra.mxu0 0.0
      %4397 = vmatprep.subr.mxu0 0.0
      %4398 = vmatpush2.msra.mxu0 0.0
      %4399 = vmatprep.subr.mxu0 0.0
      %4400 = vmatpush2.msra.mxu0 0.0
      %4401 = vmatprep.subr.mxu0 0.0
      %4402 = vmatpush2.msra.mxu0 0.0
      %4403 = vmatprep.subr.mxu0 0.0
      %4404 = vmatpush2.msra.mxu0 0.0
      %4405 = vmatprep.mubr.f32.mxu0 0.0
      %4406 = vmatmul.mubr.f32.gmra.mxu0 %v4327
      %v4407 = vpop.f32.mrf.mxu0
      %v4408 = vadd.f32 0.0, %v4407
      %v4409 = vpop.f32.mrf.mxu0
      %4410 = vmatprep.mubr.f32.mxu0 0.0
      %4411 = vmatmul.mubr.f32.gmra.mxu0 %v4330
      %v4412 = vpop.f32.mrf.mxu0
      %v4413 = vadd.f32 0.0, %v4412
      %v4414 = vpop.f32.mrf.mxu0
      %4415 = vmatprep.mubr.f32.mxu0 0.0
      %4416 = vmatmul.mubr.f32.gmra.mxu0 %v4333
      %v4417 = vpop.f32.mrf.mxu0
      %v4418 = vadd.f32 0.0, %v4417
      %v4419 = vpop.f32.mrf.mxu0
      %4420 = vmatprep.mubr.f32.mxu0 0.0
      %4421 = vmatmul.mubr.f32.gmra.mxu0 %v4336
      %v4422 = vpop.f32.mrf.mxu0
      %v4423 = vadd.f32 0.0, %v4422
      %v4424 = vpop.f32.mrf.mxu0
      %4425 = vdwg.mxu0
      %v4426 = vadd.f32 %v4318, %v4408
      %v4427 = vadd.f32 %v4319, %v4413
      %v4428 = vadd.f32 %v4320, %v4418
      %v4429 = vadd.f32 %v4321, %v4423
      %v4430 = vmax.f32 %v4426, 0.0
      %v4431 = vmax.f32 %v4427, 0.0
      %v4432 = vmax.f32 %v4428, 0.0
      %v4433 = vmax.f32 %v4429, 0.0
      %v4434 = vmul.f32 %v4430, %v1129
      %v4435 = vmul.f32 %v4431, %v1129
      %v4436 = vmul.f32 %v4432, %v1129
      %v4437 = vmul.f32 %v4433, %v1129
      %v4438 = vld [vmem:[%s57] sm:$0xff]
      %v4439 = vld [vmem:[%s57 + $0x8] sm:$0xf]
      %v4440 = vld [vmem:[%s59] sm:$0xff]
      %v4441 = vld [vmem:[%s59 + $0x8] sm:$0xf]
      %4443 = vset.pattern.permute.xlu0 0
      %4444 = vperm.xlu0 %4443, %v4440
      %v4445 = vpop.permute.xlu0 %4444
      %4448 = vset.pattern.permute.xlu0 0
      %4449 = vperm.xlu0 %4448, %v4441
      %v4450 = vpop.permute.xlu0 %4449
      %v4453 = vsel %vm4137, %v4438, 0
      %v4456 = vsel %vm4137, %v4439, 0
      %4458 = vmatprep.subr.mxu0 0.0
      %4459 = vmatpush1.msra.mxu0 0.0
      %4460 = vmatprep.subr.mxu0 0.0
      %4461 = vmatpush1.msra.mxu0 0.0
      %4462 = vmatprep.subr.mxu0 0.0
      %4463 = vmatpush1.msra.mxu0 0.0
      %4464 = vmatprep.subr.mxu0 0.0
      %4465 = vmatpush1.msra.mxu0 0.0
      %4466 = vmatprep.subr.mxu0 0.0
      %4467 = vmatpush1.msra.mxu0 0.0
      %4468 = vmatprep.subr.mxu0 0.0
      %4469 = vmatpush1.msra.mxu0 0.0
      %4470 = vmatprep.subr.mxu0 0.0
      %4471 = vmatpush1.msra.mxu0 0.0
      %4472 = vmatprep.subr.mxu0 0.0
      %4473 = vmatpush1.msra.mxu0 0.0
      %4474 = vmatprep.subr.mxu0 0.0
      %4475 = vmatpush1.msra.mxu0 0.0
      %4476 = vmatprep.subr.mxu0 0.0
      %4477 = vmatpush1.msra.mxu0 0.0
      %4478 = vmatprep.subr.mxu0 0.0
      %4479 = vmatpush1.msra.mxu0 0.0
      %4480 = vmatprep.subr.mxu0 0.0
      %4481 = vmatpush1.msra.mxu0 0.0
      %4482 = vmatprep.subr.mxu0 0.0
      %4483 = vmatpush1.msra.mxu0 %v4437
      %4484 = vmatprep.subr.mxu0 0.0
      %4485 = vmatpush1.msra.mxu0 %v4436
      %4486 = vmatprep.subr.mxu0 0.0
      %4487 = vmatpush1.msra.mxu0 %v4435
      %4488 = vmatprep.subr.mxu0 0.0
      %4489 = vmatpush1.msra.mxu0 %v4434
      %4490 = vmatprep.subr.mxu0 0.0
      %4491 = vmatpush2.msra.mxu0 0.0
      %4492 = vmatprep.subr.mxu0 0.0
      %4493 = vmatpush2.msra.mxu0 0.0
      %4494 = vmatprep.subr.mxu0 0.0
      %4495 = vmatpush2.msra.mxu0 0.0
      %4496 = vmatprep.subr.mxu0 0.0
      %4497 = vmatpush2.msra.mxu0 0.0
      %4498 = vmatprep.subr.mxu0 0.0
      %4499 = vmatpush2.msra.mxu0 0.0
      %4500 = vmatprep.subr.mxu0 0.0
      %4501 = vmatpush2.msra.mxu0 0.0
      %4502 = vmatprep.subr.mxu0 0.0
      %4503 = vmatpush2.msra.mxu0 0.0
      %4504 = vmatprep.subr.mxu0 0.0
      %4505 = vmatpush2.msra.mxu0 0.0
      %4506 = vmatprep.subr.mxu0 0.0
      %4507 = vmatpush2.msra.mxu0 0.0
      %4508 = vmatprep.subr.mxu0 0.0
      %4509 = vmatpush2.msra.mxu0 0.0
      %4510 = vmatprep.subr.mxu0 0.0
      %4511 = vmatpush2.msra.mxu0 0.0
      %4512 = vmatprep.subr.mxu0 0.0
      %4513 = vmatpush2.msra.mxu0 0.0
      %4514 = vmatprep.subr.mxu0 0.0
      %4515 = vmatpush2.msra.mxu0 0.0
      %4516 = vmatprep.subr.mxu0 0.0
      %4517 = vmatpush2.msra.mxu0 0.0
      %4518 = vmatprep.subr.mxu0 0.0
      %4519 = vmatpush2.msra.mxu0 0.0
      %4520 = vmatprep.subr.mxu0 0.0
      %4521 = vmatpush2.msra.mxu0 0.0
      %4522 = vmatprep.mubr.f32.mxu0 0.0
      %4523 = vmatmul.mubr.f32.gmra.mxu0 %v4453
      %v4524 = vpop.f32.mrf.mxu0
      %v4525 = vadd.f32 %v4445, %v4524
      %v4526 = vpop.f32.mrf.mxu0
      %4527 = vmatprep.mubr.f32.mxu0 0.0
      %4528 = vmatmul.mubr.f32.gmra.mxu0 %v4456
      %v4529 = vpop.f32.mrf.mxu0
      %v4530 = vadd.f32 %v4450, %v4529
      %v4531 = vpop.f32.mrf.mxu0
      %4532 = vdwg.mxu0
      %4533 = vst.msk [vmem:[#allocation2] sm:$0xff] %vm4227, %v4525
      %vm4534 = vcmask 142336
      %4535 = vst.msk [vmem:[#allocation2 + $0x8] sm:$0xf] %vm4534, %v4530
      %v4536 = vld [vmem:[%s61] sm:$0x7]
      %v4537 = vld [vmem:[%s63] sm:$0x7]
      %4539 = vset.pattern.permute.xlu0 0
      %4540 = vperm.xlu0 %4539, %v4537
      %v4541 = vpop.permute.xlu0 %4540
      %v4544 = vsel %vm1037, %v4536, 0
      %v4547 = vsel %vm1044, %v4530, 0
      %4549 = vmatprep.subr.mxu0 0.0
      %4550 = vmatpush1.msra.mxu0 0.0
      %4551 = vmatprep.subr.mxu0 0.0
      %4552 = vmatpush1.msra.mxu0 0.0
      %4553 = vmatprep.subr.mxu0 0.0
      %4554 = vmatpush1.msra.mxu0 0.0
      %4555 = vmatprep.subr.mxu0 0.0
      %4556 = vmatpush1.msra.mxu0 0.0
      %4557 = vmatprep.subr.mxu0 0.0
      %4558 = vmatpush1.msra.mxu0 0.0
      %4559 = vmatprep.subr.mxu0 0.0
      %4560 = vmatpush1.msra.mxu0 0.0
      %4561 = vmatprep.subr.mxu0 0.0
      %4562 = vmatpush1.msra.mxu0 0.0
      %4563 = vmatprep.subr.mxu0 0.0
      %4564 = vmatpush1.msra.mxu0 0.0
      %4565 = vmatprep.subr.mxu0 0.0
      %4566 = vmatpush1.msra.mxu0 0.0
      %4567 = vmatprep.subr.mxu0 0.0
      %4568 = vmatpush1.msra.mxu0 0.0
      %4569 = vmatprep.subr.mxu0 0.0
      %4570 = vmatpush1.msra.mxu0 0.0
      %4571 = vmatprep.subr.mxu0 0.0
      %4572 = vmatpush1.msra.mxu0 0.0
      %4573 = vmatprep.subr.mxu0 0.0
      %4574 = vmatpush1.msra.mxu0 0.0
      %4575 = vmatprep.subr.mxu0 0.0
      %4576 = vmatpush1.msra.mxu0 0.0
      %4577 = vmatprep.subr.mxu0 0.0
      %4578 = vmatpush1.msra.mxu0 %v4547
      %4579 = vmatprep.subr.mxu0 0.0
      %4580 = vmatpush1.msra.mxu0 %v4525
      %4581 = vmatprep.subr.mxu0 0.0
      %4582 = vmatpush2.msra.mxu0 0.0
      %4583 = vmatprep.subr.mxu0 0.0
      %4584 = vmatpush2.msra.mxu0 0.0
      %4585 = vmatprep.subr.mxu0 0.0
      %4586 = vmatpush2.msra.mxu0 0.0
      %4587 = vmatprep.subr.mxu0 0.0
      %4588 = vmatpush2.msra.mxu0 0.0
      %4589 = vmatprep.subr.mxu0 0.0
      %4590 = vmatpush2.msra.mxu0 0.0
      %4591 = vmatprep.subr.mxu0 0.0
      %4592 = vmatpush2.msra.mxu0 0.0
      %4593 = vmatprep.subr.mxu0 0.0
      %4594 = vmatpush2.msra.mxu0 0.0
      %4595 = vmatprep.subr.mxu0 0.0
      %4596 = vmatpush2.msra.mxu0 0.0
      %4597 = vmatprep.subr.mxu0 0.0
      %4598 = vmatpush2.msra.mxu0 0.0
      %4599 = vmatprep.subr.mxu0 0.0
      %4600 = vmatpush2.msra.mxu0 0.0
      %4601 = vmatprep.subr.mxu0 0.0
      %4602 = vmatpush2.msra.mxu0 0.0
      %4603 = vmatprep.subr.mxu0 0.0
      %4604 = vmatpush2.msra.mxu0 0.0
      %4605 = vmatprep.subr.mxu0 0.0
      %4606 = vmatpush2.msra.mxu0 0.0
      %4607 = vmatprep.subr.mxu0 0.0
      %4608 = vmatpush2.msra.mxu0 0.0
      %4609 = vmatprep.subr.mxu0 0.0
      %4610 = vmatpush2.msra.mxu0 0.0
      %4611 = vmatprep.subr.mxu0 0.0
      %4612 = vmatpush2.msra.mxu0 0.0
      %4613 = vmatprep.mubr.f32.mxu0 0.0
      %4614 = vmatmul.mubr.f32.gmra.mxu0 %v4544
      %v4615 = vpop.f32.mrf.mxu0
      %v4616 = vadd.f32 %v4541, %v4615
      %v4617 = vpop.f32.mrf.mxu0
      %4618 = vdwg.mxu0
      %v4619 = vtanh.pop %v4616
      %v4620 = vxor.u32 %v4616, 2147483648
      %v4621 = vmul.f32 %v4620, 1.442695
      %v4622 = vpow.pop %v4621
      %v4623 = vadd.f32 %v4622, 1.0
      %v4624 = vrcp.pop %v4623
      %v4625 = vmul.f32 1.0, %v4624
      %v4627 = vrot.slane %v4625, 5
      %vm4629 = vcmask 1042432
      %v4630 = vsel %vm4629, %v4619, %v4627
      %v4631 = vld [vmem:[%s7] sm:$0x3f]
      %v4632 = vsub.f32 %v4630, %v4631
      %v4633 = vmul.f32 %v4632, %v4632
      %v4634 = vmul.f32 %v4633, %v1129
      %vm4635 = vcmask 144384
      %v4636 = vsel %vm4635, %v4634, 0.0
      %4637 = vadd.xlane.f32.xlu0 %v4636
      %v4638 = vpop.xlane.xlu0 %4637
      %v4639 = vrot.slane %v4638, 4
      %v4640 = vadd.f32 %v4638, %v4639
      %v4641 = vrot.slane %v4640, 2
      %v4642 = vadd.f32 %v4640, %v4641
      %v4643 = vrot.slane %v4642, 1
      %v4644 = vadd.f32 %v4642, %v4643
      %s4645 = vtos %v4644
      %v4646 = vld [vmem:[%s65] sm:$0x7]
      %v4647 = vld [vmem:[%s67] sm:$0x7]
      %4649 = vset.pattern.permute.xlu0 0
      %4650 = vperm.xlu0 %4649, %v4647
      %v4651 = vpop.permute.xlu0 %4650
      %v4654 = vrot.slane %v4525, 3
      %v4656 = vsel %vm3752, %v4646, 0
      %v4658 = vsel %vm4629, %v4654, 0
      %4660 = vmatprep.subr.mxu0 0.0
      %4661 = vmatpush1.msra.mxu0 0.0
      %4662 = vmatprep.subr.mxu0 0.0
      %4663 = vmatpush1.msra.mxu0 0.0
      %4664 = vmatprep.subr.mxu0 0.0
      %4665 = vmatpush1.msra.mxu0 0.0
      %4666 = vmatprep.subr.mxu0 0.0
      %4667 = vmatpush1.msra.mxu0 0.0
      %4668 = vmatprep.subr.mxu0 0.0
      %4669 = vmatpush1.msra.mxu0 0.0
      %4670 = vmatprep.subr.mxu0 0.0
      %4671 = vmatpush1.msra.mxu0 0.0
      %4672 = vmatprep.subr.mxu0 0.0
      %4673 = vmatpush1.msra.mxu0 0.0
      %4674 = vmatprep.subr.mxu0 0.0
      %4675 = vmatpush1.msra.mxu0 0.0
      %4676 = vmatprep.subr.mxu0 0.0
      %4677 = vmatpush1.msra.mxu0 0.0
      %4678 = vmatprep.subr.mxu0 0.0
      %4679 = vmatpush1.msra.mxu0 0.0
      %4680 = vmatprep.subr.mxu0 0.0
      %4681 = vmatpush1.msra.mxu0 0.0
      %4682 = vmatprep.subr.mxu0 0.0
      %4683 = vmatpush1.msra.mxu0 0.0
      %4684 = vmatprep.subr.mxu0 0.0
      %4685 = vmatpush1.msra.mxu0 0.0
      %4686 = vmatprep.subr.mxu0 0.0
      %4687 = vmatpush1.msra.mxu0 0.0
      %4688 = vmatprep.subr.mxu0 0.0
      %4689 = vmatpush1.msra.mxu0 0.0
      %4690 = vmatprep.subr.mxu0 0.0
      %4691 = vmatpush1.msra.mxu0 %v4658
      %4692 = vmatprep.subr.mxu0 0.0
      %4693 = vmatpush2.msra.mxu0 0.0
      %4694 = vmatprep.subr.mxu0 0.0
      %4695 = vmatpush2.msra.mxu0 0.0
      %4696 = vmatprep.subr.mxu0 0.0
      %4697 = vmatpush2.msra.mxu0 0.0
      %4698 = vmatprep.subr.mxu0 0.0
      %4699 = vmatpush2.msra.mxu0 0.0
      %4700 = vmatprep.subr.mxu0 0.0
      %4701 = vmatpush2.msra.mxu0 0.0
      %4702 = vmatprep.subr.mxu0 0.0
      %4703 = vmatpush2.msra.mxu0 0.0
      %4704 = vmatprep.subr.mxu0 0.0
      %4705 = vmatpush2.msra.mxu0 0.0
      %4706 = vmatprep.subr.mxu0 0.0
      %4707 = vmatpush2.msra.mxu0 0.0
      %4708 = vmatprep.subr.mxu0 0.0
      %4709 = vmatpush2.msra.mxu0 0.0
      %4710 = vmatprep.subr.mxu0 0.0
      %4711 = vmatpush2.msra.mxu0 0.0
      %4712 = vmatprep.subr.mxu0 0.0
      %4713 = vmatpush2.msra.mxu0 0.0
      %4714 = vmatprep.subr.mxu0 0.0
      %4715 = vmatpush2.msra.mxu0 0.0
      %4716 = vmatprep.subr.mxu0 0.0
      %4717 = vmatpush2.msra.mxu0 0.0
      %4718 = vmatprep.subr.mxu0 0.0
      %4719 = vmatpush2.msra.mxu0 0.0
      %4720 = vmatprep.subr.mxu0 0.0
      %4721 = vmatpush2.msra.mxu0 0.0
      %4722 = vmatprep.subr.mxu0 0.0
      %4723 = vmatpush2.msra.mxu0 0.0
      %4724 = vmatprep.mubr.f32.mxu0 0.0
      %4725 = vmatmul.mubr.f32.gmra.mxu0 %v4656
      %v4726 = vpop.f32.mrf.mxu0
      %v4727 = vadd.f32 %v4651, %v4726
      %v4728 = vpop.f32.mrf.mxu0
      %4729 = vdwg.mxu0
      %v4730 = vtanh.pop %v4727
      %v4731 = vld [vmem:[%s9] sm:$0x7]
      %v4732 = vsub.f32 %v4730, %v4731
      %v4733 = vmul.f32 %v4732, %v4732
      %v4734 = vmul.f32 %v4733, %v1129
      %vm4735 = vcmask 141312
      %v4736 = vsel %vm4735, %v4734, 0.0
      %4737 = vadd.xlane.f32.xlu0 %v4736
      %v4738 = vpop.xlane.xlu0 %4737
      %v4739 = vrot.slane %v4738, 4
      %v4740 = vadd.f32 %v4738, %v4739
      %v4741 = vrot.slane %v4740, 2
      %v4742 = vadd.f32 %v4740, %v4741
      %v4743 = vrot.slane %v4742, 1
      %v4744 = vadd.f32 %v4742, %v4743
      %s4745 = vtos %v4744
      %v4746 = vlaneseq
      %v4747 = vshrl.u32 %v4746, 7
      %v4748 = vsub.s32 3, %v4747
      %v4749 = vrot.slane %v4525, %v4748
      %4751 = vbcast.lane.b32.xlu0 %v4749, 256
      %v4752 = vpop.permute.xlu0 %4751
      %s4754 = sor.u32 256, 8
      %4755 = vbcast.lane.b32.xlu0 %v4749, %s4754
      %v4756 = vpop.permute.xlu0 %4755
      %v4757 = vlaneseq
      %v4758 = vshrl.u32 %v4757, 7
      %v4759 = vsub.s32 4, %v4758
      %v4760 = vrot.slane %v4525, %v4759
      %4762 = vbcast.lane.b32.xlu0 %v4760, 256
      %v4763 = vpop.permute.xlu0 %4762
      %s4765 = sor.u32 256, 8
      %4766 = vbcast.lane.b32.xlu0 %v4760, %s4765
      %v4767 = vpop.permute.xlu0 %4766
      %v4768 = vlaneseq
      %v4769 = vshrl.u32 %v4768, 7
      %v4770 = vsub.s32 5, %v4769
      %v4771 = vrot.slane %v4525, %v4770
      %4773 = vbcast.lane.b32.xlu0 %v4771, 256
      %v4774 = vpop.permute.xlu0 %4773
      %s4776 = sor.u32 256, 8
      %4777 = vbcast.lane.b32.xlu0 %v4771, %s4776
      %v4778 = vpop.permute.xlu0 %4777
      %v4779 = vcombine.high %v4525, %v4525
      %v4781 = vunpack.c.l.s4 1966171168
      %v4782 = vunpack.c.0.s8 %v4781
      %v4783 = vlaneseq
      %v4784 = vshrl.u32 %v4783, 7
      %v4785 = vsub.s32 %v4782, %v4784
      %v4786 = vrot.slane %v4525, %v4785
      %v4788 = vunpack.c.l.s4 1966171168
      %v4789 = vunpack.c.0.s8 %v4788
      %v4790 = vlaneseq
      %v4791 = vshrl.u32 %v4790, 7
      %v4792 = vsub.s32 %v4789, %v4791
      %v4793 = vrot.slane %v4779, %v4792
      %v4794 = vcombine.high %v4786, %v4786
      %v4795 = vcombine.high %v4793, %v4793
      %v4797 = vunpack.c.l.s4 1966171168
      %v4798 = vunpack.c.0.s8 %v4797
      %v4799 = vlaneseq
      %v4800 = vshrl.u32 %v4799, 7
      %v4801 = vsub.s32 %v4798, %v4800
      %v4802 = vrot.slane %v4793, %v4801
      %v4804 = vunpack.c.l.s4 1966171168
      %v4805 = vunpack.c.0.s8 %v4804
      %v4806 = vlaneseq
      %v4807 = vshrl.u32 %v4806, 7
      %v4808 = vsub.s32 %v4805, %v4807
      %v4809 = vrot.slane %v4794, %v4808
      %v4811 = vunpack.c.l.s4 1966171168
      %v4812 = vunpack.c.0.s8 %v4811
      %v4813 = vlaneseq
      %v4814 = vshrl.u32 %v4813, 7
      %v4815 = vsub.s32 %v4812, %v4814
      %v4816 = vrot.slane %v4795, %v4815
      %v4817 = vcombine.high %v4809, %v4809
      %v4818 = vlaneseq
      %v4819 = vshrl.u32 %v4818, 7
      %v4820 = vsub.s32 0, %v4819
      %v4821 = vrot.slane %v4817, %v4820
      %v4822 = vlaneseq
      %v4823 = vshrl.u32 %v4822, 7
      %v4824 = vsub.s32 0, %v4823
      %v4825 = vrot.slane %v4802, %v4824
      %v4826 = vlaneseq
      %v4827 = vshrl.u32 %v4826, 7
      %v4828 = vsub.s32 0, %v4827
      %v4829 = vrot.slane %v4816, %v4828
      %v4833 = vsub.f32 %v4752, %v4821
      %v4834 = vsub.f32 %v4756, %v4821
      %v4835 = vsub.f32 %v4763, %v4825
      %v4836 = vsub.f32 %v4767, %v4825
      %v4837 = vsub.f32 %v4774, %v4829
      %v4838 = vsub.f32 %v4778, %v4829
      %v4839 = vmul.f32 %v4833, %v4833
      %v4840 = vmul.f32 %v4834, %v4834
      %v4841 = vmul.f32 %v4835, %v4835
      %v4842 = vmul.f32 %v4836, %v4836
      %v4843 = vmul.f32 %v4837, %v4837
      %v4844 = vmul.f32 %v4838, %v4838
      %v4845 = vsel %vm1161, %v4839, 0.0
      %v4846 = vsel %vm1161, %v4841, 0.0
      %v4847 = vadd.f32 %v4845, %v4846
      %v4848 = vsel %vm1161, %v4843, 0.0
      %v4849 = vadd.f32 %v4847, %v4848
      %vm4850 = vcmask 65536
      %v4851 = vsel %vm4850, %v4840, 0.0
      %v4852 = vsel %vm4850, %v4842, 0.0
      %v4853 = vadd.f32 %v4851, %v4852
      %v4854 = vsel %vm4850, %v4844, 0.0
      %v4855 = vadd.f32 %v4853, %v4854
      %v4856 = vld [vmem:[%s3] sm:$0xff]
      %v4857 = vld [vmem:[%s3 + $0x8] sm:$0x1]
      %v4858 = vsub.f32 %v4849, %v4856
      %v4859 = vsub.f32 %v4855, %v4857
      %v4860 = vand.u32 2147483647, %v4858
      %v4861 = vand.u32 2147483647, %v4859
      %vm4862 = vcmp.lt.f32.partialorder %v4860, 1.0
      %vm4863 = vcmp.lt.f32.partialorder %v4861, 1.0
      %v4864 = vmul.f32 %v4858, 0.5
      %v4865 = vmul.f32 %v4859, 0.5
      %v4866 = vmul.f32 %v4864, %v4858
      %v4867 = vmul.f32 %v4865, %v4859
      %v4868 = vsub.f32 %v4860, 0.5
      %v4869 = vsub.f32 %v4861, 0.5
      %v4870 = vsel %vm4862, %v4866, %v4868
      %v4871 = vsel %vm4863, %v4867, %v4869
      %v4872 = vld [vmem:[%s5] sm:$0xff]
      %v4873 = vld [vmem:[%s5 + $0x8] sm:$0x1]
      %v4874 = vmul.f32 %v4870, %v4872
      %v4875 = vmul.f32 %v4871, %v4873
      %v4876 = vsel %vm1161, %v4874, 0.0
      %v4877 = vsel %vm4850, %v4875, 0.0
      %v4878 = vadd.f32 %v4876, %v4877
      %4879 = vadd.xlane.f32.xlu0 %v4878
      %v4880 = vpop.xlane.xlu0 %4879
      %v4881 = vrot.slane %v4880, 4
      %v4882 = vadd.f32 %v4880, %v4881
      %v4883 = vrot.slane %v4882, 2
      %v4884 = vadd.f32 %v4882, %v4883
      %v4885 = vrot.slane %v4884, 1
      %v4886 = vadd.f32 %v4884, %v4885
      %s4887 = vtos %v4886
      %s4888 = sadd.f32 %s4887, 0.0
      %s4890 = sor.u32 256, 9
      %4891 = vbcast.lane.b32.xlu0 %v4749, %s4890
      %v4892 = vpop.permute.xlu0 %4891
      %s4894 = sor.u32 256, 17
      %4895 = vbcast.lane.b32.xlu0 %v4749, %s4894
      %v4896 = vpop.permute.xlu0 %4895
      %s4898 = sor.u32 256, 9
      %4899 = vbcast.lane.b32.xlu0 %v4760, %s4898
      %v4900 = vpop.permute.xlu0 %4899
      %s4902 = sor.u32 256, 17
      %4903 = vbcast.lane.b32.xlu0 %v4760, %s4902
      %v4904 = vpop.permute.xlu0 %4903
      %s4906 = sor.u32 256, 9
      %4907 = vbcast.lane.b32.xlu0 %v4771, %s4906
      %v4908 = vpop.permute.xlu0 %4907
      %s4910 = sor.u32 256, 17
      %4911 = vbcast.lane.b32.xlu0 %v4771, %s4910
      %v4912 = vpop.permute.xlu0 %4911
      %v4913 = vsub.f32 %v4892, %v4821
      %v4914 = vsub.f32 %v4896, %v4821
      %v4915 = vsub.f32 %v4900, %v4825
      %v4916 = vsub.f32 %v4904, %v4825
      %v4917 = vsub.f32 %v4908, %v4829
      %v4918 = vsub.f32 %v4912, %v4829
      %v4919 = vmul.f32 %v4913, %v4913
      %v4920 = vmul.f32 %v4914, %v4914
      %v4921 = vmul.f32 %v4915, %v4915
      %v4922 = vmul.f32 %v4916, %v4916
      %v4923 = vmul.f32 %v4917, %v4917
      %v4924 = vmul.f32 %v4918, %v4918
      %vm4925 = vcmask 146504
      %v4926 = vsel %vm4925, %v4919, 0.0
      %v4927 = vsel %vm4925, %v4921, 0.0
      %v4928 = vadd.f32 %v4926, %v4927
      %v4929 = vsel %vm4925, %v4923, 0.0
      %v4930 = vadd.f32 %v4928, %v4929
      %vm4931 = vcmask 139336
      %v4932 = vsel %vm4931, %v4920, 0.0
      %v4933 = vsel %vm4931, %v4922, 0.0
      %v4934 = vadd.f32 %v4932, %v4933
      %v4935 = vsel %vm4931, %v4924, 0.0
      %v4936 = vadd.f32 %v4934, %v4935
      %s4937 = scalar_lea.vmem %s3, 16
      %v4938 = vld [vmem:[%s4937] sm:$0xff]
      %v4939 = vld [vmem:[%s4937 + $0x8] sm:$0x1]
      %4942 = vrot.lane.b32.xlu0 %v4938, 9
      %v4943 = vpop.permute.xlu0 %4942
      %4944 = vrot.lane.b32.xlu0 %v4939, 9
      %v4945 = vpop.permute.xlu0 %4944
      %v4948 = vsub.f32 %v4930, %v4943
      %v4949 = vsub.f32 %v4936, %v4945
      %v4950 = vand.u32 2147483647, %v4948
      %v4951 = vand.u32 2147483647, %v4949
      %vm4952 = vcmp.lt.f32.partialorder %v4950, 1.0
      %vm4953 = vcmp.lt.f32.partialorder %v4951, 1.0
      %v4954 = vmul.f32 %v4948, 0.5
      %v4955 = vmul.f32 %v4949, 0.5
      %v4956 = vmul.f32 %v4954, %v4948
      %v4957 = vmul.f32 %v4955, %v4949
      %v4958 = vsub.f32 %v4950, 0.5
      %v4959 = vsub.f32 %v4951, 0.5
      %v4960 = vsel %vm4952, %v4956, %v4958
      %v4961 = vsel %vm4953, %v4957, %v4959
      %s4962 = scalar_lea.vmem %s5, 16
      %v4963 = vld [vmem:[%s4962] sm:$0xff]
      %v4964 = vld [vmem:[%s4962 + $0x8] sm:$0x1]
      %4967 = vrot.lane.b32.xlu0 %v4963, 9
      %v4968 = vpop.permute.xlu0 %4967
      %4969 = vrot.lane.b32.xlu0 %v4964, 9
      %v4970 = vpop.permute.xlu0 %4969
      %v4973 = vmul.f32 %v4960, %v4968
      %v4974 = vmul.f32 %v4961, %v4970
      %4977 = vrot.lane.b32.xlu0 %v4973, 119
      %v4978 = vpop.permute.xlu0 %4977
      %4979 = vrot.lane.b32.xlu0 %v4974, 119
      %v4980 = vpop.permute.xlu0 %4979
      %v4983 = vsel %vm1161, %v4978, 0.0
      %v4984 = vsel %vm4850, %v4980, 0.0
      %v4985 = vadd.f32 %v4983, %v4984
      %4986 = vadd.xlane.f32.xlu0 %v4985
      %v4987 = vpop.xlane.xlu0 %4986
      %v4988 = vrot.slane %v4987, 4
      %v4989 = vadd.f32 %v4987, %v4988
      %v4990 = vrot.slane %v4989, 2
      %v4991 = vadd.f32 %v4989, %v4990
      %v4992 = vrot.slane %v4991, 1
      %v4993 = vadd.f32 %v4991, %v4992
      %s4994 = vtos %v4993
      %s4995 = sadd.f32 %s4888, %s4994
      %v4996 = vlaneseq
      %v4997 = vand.u32 %v4996, 127
      %vm4998 = vcmp.eq.s32.totalorder %v4997, 0
      %v4999 = vsel %vm4998, 1, 0
      %v5000 = vcvt.s32.f32 %v4999
      %v5001 = vstv %s4995
      %v5002 = vmul.f32 %v5000, %v5001
      %vm5003 = vcmp.eq.s32.totalorder %v4997, 1
      %v5004 = vsel %vm5003, 1, 0
      %v5005 = vcvt.s32.f32 %v5004
      %v5006 = vstv %s4645
      %v5007 = vmul.f32 %v5005, %v5006
      %v5008 = vadd.f32 %v5002, %v5007
      %vm5009 = vcmp.eq.s32.totalorder %v4997, 2
      %v5010 = vsel %vm5009, 1, 0
      %v5011 = vcvt.s32.f32 %v5010
      %v5012 = vstv %s4745
      %v5013 = vmul.f32 %v5011, %v5012
      %v5014 = vadd.f32 %v5008, %v5013
      %vm5015 = vcmp.eq.s32.totalorder %v4997, 3
      %v5016 = vsel %vm5015, 1, 0
      %v5017 = vcvt.s32.f32 %v5016
      %v5018 = vstv %s4293
      %v5019 = vmul.f32 %v5017, %v5018
      %v5020 = vadd.f32 %v5014, %v5019
      %v5021 = vld [vmem:[%s69] sm:$0x1]
      %v5022 = vadd.f32 %v5021, %v5020
      %5023 = vst [vmem:[%s69] sm:$0x1] %v5022
      // Predicated region
      $region161: #{forward.1} parent=155 // pred_check
        %p5024 = pneg %p807
      $region162: #{forward.1} parent=155 // pred_check_branch
        %5026 = sbr.rel (%p5024) target = $region164
      $region163: #{forward.1} parent=155 // pred_region
        _
      $region164: #{forward.1} parent=155 // pred_fallthru
        _
      // Predicated region
      $region165: #{forward.1} parent=155 // pred_check
        %p5027 = pneg %p807
      $region166: #{forward.1} parent=155 // pred_check_branch
        %5029 = sbr.rel (%p5027) target = $region168
      $region167: #{forward.1} parent=155 // pred_region
        _
      $region168: #{forward.1} parent=155 // pred_fallthru
        _
    $region156: #{forward.1} parent=5 // pred_fallthru
      _
    %p5030 = scmp.le.s32.totalorder 2, %s75
    // Predicated region
    $region169: #{forward.1} parent=5 // pred_check
      %p5031 = pneg %p5030
    $region170: #{forward.1} parent=5 // pred_check_branch
      %5033 = sbr.rel (%p5031) target = $region172
    $region171: #{forward.1} parent=5 // pred_region
      %s5034 = ssub.s32 %s75, 2
    $region172: #{forward.1} parent=5 // pred_fallthru
      _
  $region6: #{forward.1} parent=0 // loop_footer
    %s79 = sadd.s32 1, %s75
  $region7: #{forward.1} parent=0 // loop_footer_branch
    %74 = sbr.rel target = $region3
  $region8: #{forward.1} parent=0 // loop_exit
    _

</llo_original>
